<compile_context>
chip_gen: v7x
topology: tpu7x:2x2x1
jax: 0.10.0
libtpu: 0.0.40
codegen_flags: <defaults>
</compile_context>

<pallas_src>
import math

import jax
import jax.numpy as jnp
from jax import lax
from jax.experimental import pallas as pl
from jax.experimental.pallas import tpu as pltpu

# ---- config (matches the PyTorch config fields used by the module) ----------
B = 2          # batch
S = 16         # sequence length (number of patch tokens)
D = 32         # config.d_size
H = 4          # config.n_head
HD = D // H    # head dim
N_LAYER = 2    # config.n_layer
LN_EPS = 1e-5  # nn.LayerNorm default eps
BS = B * S     # tokens folded into the sublane axis


def _layernorm(v, gamma, beta):
    mu = jnp.mean(v, axis=-1, keepdims=True)
    c = v - mu
    var = jnp.mean(c * c, axis=-1, keepdims=True)
    return c * lax.rsqrt(var + LN_EPS) * gamma + beta


def vit_encoder_kernel(x_ref,
                       ln1_g, ln1_b, wqkv, bqkv, wo, bo,
                       ln2_g, ln2_b, wi, bi, wo2, bo2,
                       out_ref):
    """One grid step == one ViTLayer applied to the resident (BS, D) activation.

    out_ref has a constant block index across the grid, so it stays resident in
    VMEM and acts as the activation carry between layer steps; it is written
    back to HBM only once, after the last layer.
    """
    l = pl.program_id(0)

    @pl.when(l == 0)
    def _():
        out_ref[...] = x_ref[...]

    x = out_ref[...].astype(jnp.float32)                       # (BS, D)

    # --- attention block: ln_before -> fused QKV -> per-(batch,head) attn ----
    h = _layernorm(x, ln1_g[0], ln1_b[0])
    # wqkv already has the 1/sqrt(HD) scale folded into its Q columns.
    qkv = jnp.dot(h, wqkv[0], preferred_element_type=jnp.float32) + bqkv[0]  # (BS, 3D)

    ctx_rows = []
    for b in range(B):                       # static loops: B*H = 8 tiny tiles
        r0 = b * S
        head_parts = []
        for hh in range(H):
            c0 = hh * HD
            qh = qkv[r0:r0 + S, c0:c0 + HD]                 # (S, HD)
            kh = qkv[r0:r0 + S, D + c0:D + c0 + HD]         # (S, HD)
            vh = qkv[r0:r0 + S, 2 * D + c0:2 * D + c0 + HD]  # (S, HD)
            # scores = q . k  (contract on head dim; no explicit transpose)
            s = lax.dot_general(qh, kh, (((1,), (1,)), ((), ())),
                                preferred_element_type=jnp.float32)  # (S, S)
            s = s - jnp.max(s, axis=-1, keepdims=True)
            p = jnp.exp(s)
            p = p * pl.reciprocal(jnp.sum(p, axis=-1, keepdims=True), approx=True)
            head_parts.append(jnp.dot(p, vh, preferred_element_type=jnp.float32))
        ctx_rows.append(jnp.concatenate(head_parts, axis=-1))   # (S, D)
    ctx = jnp.concatenate(ctx_rows, axis=0)                     # (BS, D)

    attn_out = jnp.dot(ctx, wo[0], preferred_element_type=jnp.float32) + bo[0]
    x = x + attn_out                                            # residual 1

    # --- MLP block: ln_after -> dense(4D) -> exact GELU -> dense(D) ----------
    h2 = _layernorm(x, ln2_g[0], ln2_b[0])
    inter = jnp.dot(h2, wi[0], preferred_element_type=jnp.float32) + bi[0]  # (BS, 4D)
    inter = 0.5 * inter * (1.0 + lax.erf(inter * (1.0 / math.sqrt(2.0))))
    mlp_out = jnp.dot(inter, wo2[0], preferred_element_type=jnp.float32) + bo2[0]
    x = x + mlp_out                                             # residual 2

    out_ref[...] = x.astype(out_ref.dtype)


# --------------------------- host-side param prep ----------------------------
def stack_layer_params(layer_params):
    """Stack per-layer params along a leading layer axis; fuse QKV; fold the
    1/sqrt(head_dim) attention scale into the Q weights/bias."""
    scale = 1.0 / math.sqrt(HD)

    def cat(name):
        return jnp.stack([p[name] for p in layer_params], axis=0)

    wqkv = jnp.stack(
        [jnp.concatenate([p["wq"] * scale, p["wk"], p["wv"]], axis=1)
         for p in layer_params], axis=0)                        # (L, D, 3D)
    bqkv = jnp.stack(
        [jnp.concatenate([p["bq"] * scale, p["bk"], p["bv"]], axis=1)
         for p in layer_params], axis=0)                        # (L, 1, 3D)

    return {
        "ln1_g": cat("ln1_g"), "ln1_b": cat("ln1_b"),
        "wqkv": wqkv, "bqkv": bqkv,
        "wo": cat("wo"), "bo": cat("bo"),
        "ln2_g": cat("ln2_g"), "ln2_b": cat("ln2_b"),
        "wi": cat("wi"), "bi": cat("bi"),
        "wo2": cat("wo2"), "bo2": cat("bo2"),
    }


@jax.jit
def vit_encoder(x, sp):
    """x: (B, S, D) float32; sp: stacked params (leading layer axis)."""
    x2 = x.reshape(BS, D)
    weights = [sp["ln1_g"], sp["ln1_b"], sp["wqkv"], sp["bqkv"],
               sp["wo"], sp["bo"], sp["ln2_g"], sp["ln2_b"],
               sp["wi"], sp["bi"], sp["wo2"], sp["bo2"]]

    def per_layer_spec(a):
        return pl.BlockSpec((1,) + a.shape[1:], lambda l: (l, 0, 0))

    out = pl.pallas_call(
        vit_encoder_kernel,
        out_shape=jax.ShapeDtypeStruct((BS, D), x.dtype),
        grid=(N_LAYER,),
        in_specs=[pl.BlockSpec((BS, D), lambda l: (0, 0))]
                 + [per_layer_spec(w) for w in weights],
        out_specs=pl.BlockSpec((BS, D), lambda l: (0, 0)),
        compiler_params=pltpu.CompilerParams(
            dimension_semantics=("arbitrary",)),
    )(x2, *weights)
    return out.reshape(B, S, D)


# ---------------------- pure-JAX reference for sanity ------------------------
def vit_layer_ref(x, p):
    def ln(v, g, b):
        mu = jnp.mean(v, axis=-1, keepdims=True)
        var = jnp.mean((v - mu) ** 2, axis=-1, keepdims=True)
        return (v - mu) / jnp.sqrt(var + LN_EPS) * g[0] + b[0]

    h = ln(x, p["ln1_g"], p["ln1_b"])
    q = h @ p["wq"] + p["bq"][0]
    k = h @ p["wk"] + p["bk"][0]
    v = h @ p["wv"] + p["bv"][0]

    def split(t):  # (B,S,D) -> (B,H,S,HD)
        return t.reshape(B, S, H, HD).transpose(0, 2, 1, 3)

    qh, kh, vh = split(q), split(k), split(v)
    s = jnp.einsum("bhqd,bhkd->bhqk", qh, kh) / math.sqrt(HD)
    a = jax.nn.softmax(s, axis=-1)
    ctx = jnp.einsum("bhqk,bhkd->bhqd", a, vh).transpose(0, 2, 1, 3).reshape(B, S, D)
    x = ctx @ p["wo"] + p["bo"][0] + x

    h2 = ln(x, p["ln2_g"], p["ln2_b"])
    inter = h2 @ p["wi"] + p["bi"][0]
    inter = 0.5 * inter * (1.0 + lax.erf(inter / math.sqrt(2.0)))
    x = inter @ p["wo2"] + p["bo2"][0] + x
    return x


def vit_encoder_ref(x, layer_params):
    for p in layer_params:
        x = vit_layer_ref(x, p)
    return x


# ------------------------------ parameter init -------------------------------
def init_layer_params(key):
    ks = jax.random.split(key, 16)
    n = lambda k, shape, s=0.02: (s * jax.random.normal(k, shape)).astype(jnp.float32)
    return {
        "ln1_g": jnp.ones((1, D), jnp.float32) + n(ks[0], (1, D), 0.01),
        "ln1_b": n(ks[1], (1, D)),
        "wq": n(ks[2], (D, D)), "bq": n(ks[3], (1, D)),
        "wk": n(ks[4], (D, D)), "bk": n(ks[5], (1, D)),
        "wv": n(ks[6], (D, D)), "bv": n(ks[7], (1, D)),
        "wo": n(ks[8], (D, D)), "bo": n(ks[9], (1, D)),
        "ln2_g": jnp.ones((1, D), jnp.float32) + n(ks[10], (1, D), 0.01),
        "ln2_b": n(ks[11], (1, D)),
        "wi": n(ks[12], (D, 4 * D)), "bi": n(ks[13], (1, 4 * D)),
        "wo2": n(ks[14], (4 * D, D)), "bo2": n(ks[15], (1, D)),
    }


if __name__ == "__main__":
    key = jax.random.PRNGKey(0)
    kx, kp = jax.random.split(key)
    x = jax.random.normal(kx, (B, S, D), dtype=jnp.float32)
    layer_keys = jax.random.split(kp, N_LAYER)
    layer_params = tuple(init_layer_params(k) for k in layer_keys)
    stacked = stack_layer_params(layer_params)

    out = vit_encoder(x, stacked)
    out = jax.block_until_ready(out)

    ref = vit_encoder_ref(x, layer_params)
    assert out.shape == (B, S, D)
    assert jnp.allclose(out, ref, atol=2e-3, rtol=2e-3), (
        f"max abs diff {jnp.max(jnp.abs(out - ref))}")

    print("KERNEL_OK")
</pallas_src>

<mosaic_0001>
module attributes {stable_mosaic.version = 11 : i64} {
  func.func @vit_encoder_kernel(%arg0: i32, %arg1: memref<32x32xf32, #tpu.memory_space<vmem>>, %arg2: memref<1x1x32xf32, #tpu.memory_space<vmem>>, %arg3: memref<1x1x32xf32, #tpu.memory_space<vmem>>, %arg4: memref<1x32x96xf32, #tpu.memory_space<vmem>>, %arg5: memref<1x1x96xf32, #tpu.memory_space<vmem>>, %arg6: memref<1x32x32xf32, #tpu.memory_space<vmem>>, %arg7: memref<1x1x32xf32, #tpu.memory_space<vmem>>, %arg8: memref<1x1x32xf32, #tpu.memory_space<vmem>>, %arg9: memref<1x1x32xf32, #tpu.memory_space<vmem>>, %arg10: memref<1x32x128xf32, #tpu.memory_space<vmem>>, %arg11: memref<1x1x128xf32, #tpu.memory_space<vmem>>, %arg12: memref<1x128x32xf32, #tpu.memory_space<vmem>>, %arg13: memref<1x1x32xf32, #tpu.memory_space<vmem>>, %arg14: memref<32x32xf32, #tpu.memory_space<vmem>>) attributes {dimension_semantics = [#tpu.dimension_semantics<arbitrary>], iteration_bounds = array<i64: 2>, scalar_prefetch = 0 : i64, scratch_operands = 0 : i64, tpu.core_type = #tpu.core_type<tc>, window_params = [{pipeline_mode = #tpu.pipeline_mode<synchronous>, transform_indices = @transform_0, window_bounds = array<i64: 32, 32>}, {transform_indices = @transform_1, window_bounds = array<i64: 1, 1, 32>}, {transform_indices = @transform_2, window_bounds = array<i64: 1, 1, 32>}, {transform_indices = @transform_3, window_bounds = array<i64: 1, 32, 96>}, {transform_indices = @transform_4, window_bounds = array<i64: 1, 1, 96>}, {transform_indices = @transform_5, window_bounds = array<i64: 1, 32, 32>}, {transform_indices = @transform_6, window_bounds = array<i64: 1, 1, 32>}, {transform_indices = @transform_7, window_bounds = array<i64: 1, 1, 32>}, {transform_indices = @transform_8, window_bounds = array<i64: 1, 1, 32>}, {transform_indices = @transform_9, window_bounds = array<i64: 1, 32, 128>}, {transform_indices = @transform_10, window_bounds = array<i64: 1, 1, 128>}, {transform_indices = @transform_11, window_bounds = array<i64: 1, 128, 32>}, {transform_indices = @transform_12, window_bounds = array<i64: 1, 1, 32>}, {pipeline_mode = #tpu.pipeline_mode<synchronous>, transform_indices = @transform_13, window_bounds = array<i64: 32, 32>}]} {
    %c0_i32 = arith.constant 0 : i32
    %0 = arith.cmpi eq, %arg0, %c0_i32 : i32
    %1 = arith.extui %0 : i1 to i32
    %c0_i32_0 = arith.constant 0 : i32
    %2 = arith.cmpi ne, %1, %c0_i32_0 : i32
    scf.if %2 {
      %c0_88 = arith.constant 0 : index
      %c0_89 = arith.constant 0 : index
      %214 = vector.load %arg1[%c0_88, %c0_89] : memref<32x32xf32, #tpu.memory_space<vmem>>, vector<32x32xf32>
      %c0_90 = arith.constant 0 : index
      %c0_91 = arith.constant 0 : index
      %215 = vector.load %arg14[%c0_90, %c0_91] : memref<32x32xf32, #tpu.memory_space<vmem>>, vector<32x32xf32>
      tpu.vector_store %arg14[%c0_90, %c0_91], %214 {strides = array<i32>} : memref<32x32xf32, #tpu.memory_space<vmem>>, vector<32x32xf32>,
    } else {
    }
    %c0 = arith.constant 0 : index
    %c0_1 = arith.constant 0 : index
    %3 = vector.load %arg14[%c0, %c0_1] : memref<32x32xf32, #tpu.memory_space<vmem>>, vector<32x32xf32>
    %c0_2 = arith.constant 0 : index
    %c0_3 = arith.constant 0 : index
    %c0_4 = arith.constant 0 : index
    %4 = vector.load %arg2[%c0_2, %c0_3, %c0_4] : memref<1x1x32xf32, #tpu.memory_space<vmem>>, vector<1x1x32xf32>
    %5 = vector.shape_cast %4 : vector<1x1x32xf32> to vector<1x32xf32>
    %c0_5 = arith.constant 0 : index
    %c0_6 = arith.constant 0 : index
    %c0_7 = arith.constant 0 : index
    %6 = vector.load %arg3[%c0_5, %c0_6, %c0_7] : memref<1x1x32xf32, #tpu.memory_space<vmem>>, vector<1x1x32xf32>
    %7 = vector.shape_cast %6 : vector<1x1x32xf32> to vector<1x32xf32>
    %cst = arith.constant dense<0.000000e+00> : vector<32xf32>
    %8 = vector.multi_reduction <add>, %3, %cst [1] : vector<32x32xf32> to vector<32xf32>
    %9 = vector.shape_cast %8 : vector<32xf32> to vector<32x1xf32>
    %cst_8 = arith.constant 3.200000e+01 : f32
    %10 = vector.broadcast %cst_8 : f32 to vector<32x1xf32>
    %11 = arith.divf %9, %10 : vector<32x1xf32>
    %12 = vector.broadcast %11 : vector<32x1xf32> to vector<32x32xf32>
    %13 = arith.subf %3, %12 : vector<32x32xf32>
    %14 = arith.mulf %13, %13 : vector<32x32xf32>
    %cst_9 = arith.constant dense<0.000000e+00> : vector<32xf32>
    %15 = vector.multi_reduction <add>, %14, %cst_9 [1] : vector<32x32xf32> to vector<32xf32>
    %16 = vector.shape_cast %15 : vector<32xf32> to vector<32x1xf32>
    %cst_10 = arith.constant 3.200000e+01 : f32
    %17 = vector.broadcast %cst_10 : f32 to vector<32x1xf32>
    %18 = arith.divf %16, %17 : vector<32x1xf32>
    %cst_11 = arith.constant 9.99999974E-6 : f32
    %19 = vector.broadcast %cst_11 : f32 to vector<32x1xf32>
    %20 = arith.addf %18, %19 : vector<32x1xf32>
    %21 = math.rsqrt %20 : vector<32x1xf32>
    %22 = vector.broadcast %21 : vector<32x1xf32> to vector<32x32xf32>
    %23 = arith.mulf %13, %22 : vector<32x32xf32>
    %24 = vector.broadcast %5 : vector<1x32xf32> to vector<32x32xf32>
    %25 = arith.mulf %23, %24 : vector<32x32xf32>
    %26 = vector.broadcast %7 : vector<1x32xf32> to vector<32x32xf32>
    %27 = arith.addf %25, %26 : vector<32x32xf32>
    %c0_12 = arith.constant 0 : index
    %c0_13 = arith.constant 0 : index
    %c0_14 = arith.constant 0 : index
    %28 = vector.load %arg4[%c0_12, %c0_13, %c0_14] : memref<1x32x96xf32, #tpu.memory_space<vmem>>, vector<1x32x96xf32>
    %29 = vector.shape_cast %28 : vector<1x32x96xf32> to vector<32x96xf32>
    %cst_15 = arith.constant dense<0.000000e+00> : vector<32x96xf32>
    %30 = tpu.matmul %27, %29, %cst_15 {dimension_numbers = #tpu.dot_dimension_numbers<[1], [0], [0], [1], [0, 0, 1, 1], [], []>} : vector<32x32xf32>, vector<32x96xf32>, vector<32x96xf32> -> vector<32x96xf32>
    %c0_16 = arith.constant 0 : index
    %c0_17 = arith.constant 0 : index
    %c0_18 = arith.constant 0 : index
    %31 = vector.load %arg5[%c0_16, %c0_17, %c0_18] : memref<1x1x96xf32, #tpu.memory_space<vmem>>, vector<1x1x96xf32>
    %32 = vector.shape_cast %31 : vector<1x1x96xf32> to vector<1x96xf32>
    %33 = vector.broadcast %32 : vector<1x96xf32> to vector<32x96xf32>
    %34 = arith.addf %30, %33 : vector<32x96xf32>
    %35 = vector.extract_strided_slice %34 {offsets = [0, 0], sizes = [16, 8], strides = [1, 1]} : vector<32x96xf32> to vector<16x8xf32>
    %36 = vector.extract_strided_slice %34 {offsets = [0, 32], sizes = [16, 8], strides = [1, 1]} : vector<32x96xf32> to vector<16x8xf32>
    %37 = vector.extract_strided_slice %34 {offsets = [0, 64], sizes = [16, 8], strides = [1, 1]} : vector<32x96xf32> to vector<16x8xf32>
    %cst_19 = arith.constant dense<0.000000e+00> : vector<16x16xf32>
    %38 = tpu.matmul %35, %36, %cst_19 {dimension_numbers = #tpu.dot_dimension_numbers<[1], [1], [0], [0], [0, 0, 1, 0], [], []>} : vector<16x8xf32>, vector<16x8xf32>, vector<16x16xf32> -> vector<16x16xf32>
    %cst_20 = arith.constant dense<0xFF800000> : vector<16xf32>
    %39 = vector.multi_reduction <maximumf>, %38, %cst_20 [1] : vector<16x16xf32> to vector<16xf32>
    %40 = vector.shape_cast %39 : vector<16xf32> to vector<16x1xf32>
    %41 = vector.broadcast %40 : vector<16x1xf32> to vector<16x16xf32>
    %42 = arith.subf %38, %41 : vector<16x16xf32>
    %43 = math.exp %42 : vector<16x16xf32>
    %cst_21 = arith.constant dense<0.000000e+00> : vector<16xf32>
    %44 = vector.multi_reduction <add>, %43, %cst_21 [1] : vector<16x16xf32> to vector<16xf32>
    %45 = vector.shape_cast %44 : vector<16xf32> to vector<16x1xf32>
    %46 = tpu.reciprocal %45 {approx = true} : vector<16x1xf32> -> vector<16x1xf32>
    %47 = vector.broadcast %46 : vector<16x1xf32> to vector<16x16xf32>
    %48 = arith.mulf %43, %47 : vector<16x16xf32>
    %cst_22 = arith.constant dense<0.000000e+00> : vector<16x8xf32>
    %49 = tpu.matmul %48, %37, %cst_22 {dimension_numbers = #tpu.dot_dimension_numbers<[1], [0], [0], [1], [0, 0, 1, 1], [], []>} : vector<16x16xf32>, vector<16x8xf32>, vector<16x8xf32> -> vector<16x8xf32>
    %50 = vector.extract_strided_slice %34 {offsets = [0, 8], sizes = [16, 8], strides = [1, 1]} : vector<32x96xf32> to vector<16x8xf32>
    %51 = vector.extract_strided_slice %34 {offsets = [0, 40], sizes = [16, 8], strides = [1, 1]} : vector<32x96xf32> to vector<16x8xf32>
    %52 = vector.extract_strided_slice %34 {offsets = [0, 72], sizes = [16, 8], strides = [1, 1]} : vector<32x96xf32> to vector<16x8xf32>
    %cst_23 = arith.constant dense<0.000000e+00> : vector<16x16xf32>
    %53 = tpu.matmul %50, %51, %cst_23 {dimension_numbers = #tpu.dot_dimension_numbers<[1], [1], [0], [0], [0, 0, 1, 0], [], []>} : vector<16x8xf32>, vector<16x8xf32>, vector<16x16xf32> -> vector<16x16xf32>
    %cst_24 = arith.constant dense<0xFF800000> : vector<16xf32>
    %54 = vector.multi_reduction <maximumf>, %53, %cst_24 [1] : vector<16x16xf32> to vector<16xf32>
    %55 = vector.shape_cast %54 : vector<16xf32> to vector<16x1xf32>
    %56 = vector.broadcast %55 : vector<16x1xf32> to vector<16x16xf32>
    %57 = arith.subf %53, %56 : vector<16x16xf32>
    %58 = math.exp %57 : vector<16x16xf32>
    %cst_25 = arith.constant dense<0.000000e+00> : vector<16xf32>
    %59 = vector.multi_reduction <add>, %58, %cst_25 [1] : vector<16x16xf32> to vector<16xf32>
    %60 = vector.shape_cast %59 : vector<16xf32> to vector<16x1xf32>
    %61 = tpu.reciprocal %60 {approx = true} : vector<16x1xf32> -> vector<16x1xf32>
    %62 = vector.broadcast %61 : vector<16x1xf32> to vector<16x16xf32>
    %63 = arith.mulf %58, %62 : vector<16x16xf32>
    %cst_26 = arith.constant dense<0.000000e+00> : vector<16x8xf32>
    %64 = tpu.matmul %63, %52, %cst_26 {dimension_numbers = #tpu.dot_dimension_numbers<[1], [0], [0], [1], [0, 0, 1, 1], [], []>} : vector<16x16xf32>, vector<16x8xf32>, vector<16x8xf32> -> vector<16x8xf32>
    %65 = vector.extract_strided_slice %34 {offsets = [0, 16], sizes = [16, 8], strides = [1, 1]} : vector<32x96xf32> to vector<16x8xf32>
    %66 = vector.extract_strided_slice %34 {offsets = [0, 48], sizes = [16, 8], strides = [1, 1]} : vector<32x96xf32> to vector<16x8xf32>
    %67 = vector.extract_strided_slice %34 {offsets = [0, 80], sizes = [16, 8], strides = [1, 1]} : vector<32x96xf32> to vector<16x8xf32>
    %cst_27 = arith.constant dense<0.000000e+00> : vector<16x16xf32>
    %68 = tpu.matmul %65, %66, %cst_27 {dimension_numbers = #tpu.dot_dimension_numbers<[1], [1], [0], [0], [0, 0, 1, 0], [], []>} : vector<16x8xf32>, vector<16x8xf32>, vector<16x16xf32> -> vector<16x16xf32>
    %cst_28 = arith.constant dense<0xFF800000> : vector<16xf32>
    %69 = vector.multi_reduction <maximumf>, %68, %cst_28 [1] : vector<16x16xf32> to vector<16xf32>
    %70 = vector.shape_cast %69 : vector<16xf32> to vector<16x1xf32>
    %71 = vector.broadcast %70 : vector<16x1xf32> to vector<16x16xf32>
    %72 = arith.subf %68, %71 : vector<16x16xf32>
    %73 = math.exp %72 : vector<16x16xf32>
    %cst_29 = arith.constant dense<0.000000e+00> : vector<16xf32>
    %74 = vector.multi_reduction <add>, %73, %cst_29 [1] : vector<16x16xf32> to vector<16xf32>
    %75 = vector.shape_cast %74 : vector<16xf32> to vector<16x1xf32>
    %76 = tpu.reciprocal %75 {approx = true} : vector<16x1xf32> -> vector<16x1xf32>
    %77 = vector.broadcast %76 : vector<16x1xf32> to vector<16x16xf32>
    %78 = arith.mulf %73, %77 : vector<16x16xf32>
    %cst_30 = arith.constant dense<0.000000e+00> : vector<16x8xf32>
    %79 = tpu.matmul %78, %67, %cst_30 {dimension_numbers = #tpu.dot_dimension_numbers<[1], [0], [0], [1], [0, 0, 1, 1], [], []>} : vector<16x16xf32>, vector<16x8xf32>, vector<16x8xf32> -> vector<16x8xf32>
    %80 = vector.extract_strided_slice %34 {offsets = [0, 24], sizes = [16, 8], strides = [1, 1]} : vector<32x96xf32> to vector<16x8xf32>
    %81 = vector.extract_strided_slice %34 {offsets = [0, 56], sizes = [16, 8], strides = [1, 1]} : vector<32x96xf32> to vector<16x8xf32>
    %82 = vector.extract_strided_slice %34 {offsets = [0, 88], sizes = [16, 8], strides = [1, 1]} : vector<32x96xf32> to vector<16x8xf32>
    %cst_31 = arith.constant dense<0.000000e+00> : vector<16x16xf32>
    %83 = tpu.matmul %80, %81, %cst_31 {dimension_numbers = #tpu.dot_dimension_numbers<[1], [1], [0], [0], [0, 0, 1, 0], [], []>} : vector<16x8xf32>, vector<16x8xf32>, vector<16x16xf32> -> vector<16x16xf32>
    %cst_32 = arith.constant dense<0xFF800000> : vector<16xf32>
    %84 = vector.multi_reduction <maximumf>, %83, %cst_32 [1] : vector<16x16xf32> to vector<16xf32>
    %85 = vector.shape_cast %84 : vector<16xf32> to vector<16x1xf32>
    %86 = vector.broadcast %85 : vector<16x1xf32> to vector<16x16xf32>
    %87 = arith.subf %83, %86 : vector<16x16xf32>
    %88 = math.exp %87 : vector<16x16xf32>
    %cst_33 = arith.constant dense<0.000000e+00> : vector<16xf32>
    %89 = vector.multi_reduction <add>, %88, %cst_33 [1] : vector<16x16xf32> to vector<16xf32>
    %90 = vector.shape_cast %89 : vector<16xf32> to vector<16x1xf32>
    %91 = tpu.reciprocal %90 {approx = true} : vector<16x1xf32> -> vector<16x1xf32>
    %92 = vector.broadcast %91 : vector<16x1xf32> to vector<16x16xf32>
    %93 = arith.mulf %88, %92 : vector<16x16xf32>
    %cst_34 = arith.constant dense<0.000000e+00> : vector<16x8xf32>
    %94 = tpu.matmul %93, %82, %cst_34 {dimension_numbers = #tpu.dot_dimension_numbers<[1], [0], [0], [1], [0, 0, 1, 1], [], []>} : vector<16x16xf32>, vector<16x8xf32>, vector<16x8xf32> -> vector<16x8xf32>
    %95 = tpu.concatenate %49, %64, %79, %94 in 1 : vector<16x8xf32>, vector<16x8xf32>, vector<16x8xf32>, vector<16x8xf32> -> vector<16x32xf32>
    %96 = vector.extract_strided_slice %34 {offsets = [16, 0], sizes = [16, 8], strides = [1, 1]} : vector<32x96xf32> to vector<16x8xf32>
    %97 = vector.extract_strided_slice %34 {offsets = [16, 32], sizes = [16, 8], strides = [1, 1]} : vector<32x96xf32> to vector<16x8xf32>
    %98 = vector.extract_strided_slice %34 {offsets = [16, 64], sizes = [16, 8], strides = [1, 1]} : vector<32x96xf32> to vector<16x8xf32>
    %cst_35 = arith.constant dense<0.000000e+00> : vector<16x16xf32>
    %99 = tpu.matmul %96, %97, %cst_35 {dimension_numbers = #tpu.dot_dimension_numbers<[1], [1], [0], [0], [0, 0, 1, 0], [], []>} : vector<16x8xf32>, vector<16x8xf32>, vector<16x16xf32> -> vector<16x16xf32>
    %cst_36 = arith.constant dense<0xFF800000> : vector<16xf32>
    %100 = vector.multi_reduction <maximumf>, %99, %cst_36 [1] : vector<16x16xf32> to vector<16xf32>
    %101 = vector.shape_cast %100 : vector<16xf32> to vector<16x1xf32>
    %102 = vector.broadcast %101 : vector<16x1xf32> to vector<16x16xf32>
    %103 = arith.subf %99, %102 : vector<16x16xf32>
    %104 = math.exp %103 : vector<16x16xf32>
    %cst_37 = arith.constant dense<0.000000e+00> : vector<16xf32>
    %105 = vector.multi_reduction <add>, %104, %cst_37 [1] : vector<16x16xf32> to vector<16xf32>
    %106 = vector.shape_cast %105 : vector<16xf32> to vector<16x1xf32>
    %107 = tpu.reciprocal %106 {approx = true} : vector<16x1xf32> -> vector<16x1xf32>
    %108 = vector.broadcast %107 : vector<16x1xf32> to vector<16x16xf32>
    %109 = arith.mulf %104, %108 : vector<16x16xf32>
    %cst_38 = arith.constant dense<0.000000e+00> : vector<16x8xf32>
    %110 = tpu.matmul %109, %98, %cst_38 {dimension_numbers = #tpu.dot_dimension_numbers<[1], [0], [0], [1], [0, 0, 1, 1], [], []>} : vector<16x16xf32>, vector<16x8xf32>, vector<16x8xf32> -> vector<16x8xf32>
    %111 = vector.extract_strided_slice %34 {offsets = [16, 8], sizes = [16, 8], strides = [1, 1]} : vector<32x96xf32> to vector<16x8xf32>
    %112 = vector.extract_strided_slice %34 {offsets = [16, 40], sizes = [16, 8], strides = [1, 1]} : vector<32x96xf32> to vector<16x8xf32>
    %113 = vector.extract_strided_slice %34 {offsets = [16, 72], sizes = [16, 8], strides = [1, 1]} : vector<32x96xf32> to vector<16x8xf32>
    %cst_39 = arith.constant dense<0.000000e+00> : vector<16x16xf32>
    %114 = tpu.matmul %111, %112, %cst_39 {dimension_numbers = #tpu.dot_dimension_numbers<[1], [1], [0], [0], [0, 0, 1, 0], [], []>} : vector<16x8xf32>, vector<16x8xf32>, vector<16x16xf32> -> vector<16x16xf32>
    %cst_40 = arith.constant dense<0xFF800000> : vector<16xf32>
    %115 = vector.multi_reduction <maximumf>, %114, %cst_40 [1] : vector<16x16xf32> to vector<16xf32>
    %116 = vector.shape_cast %115 : vector<16xf32> to vector<16x1xf32>
    %117 = vector.broadcast %116 : vector<16x1xf32> to vector<16x16xf32>
    %118 = arith.subf %114, %117 : vector<16x16xf32>
    %119 = math.exp %118 : vector<16x16xf32>
    %cst_41 = arith.constant dense<0.000000e+00> : vector<16xf32>
    %120 = vector.multi_reduction <add>, %119, %cst_41 [1] : vector<16x16xf32> to vector<16xf32>
    %121 = vector.shape_cast %120 : vector<16xf32> to vector<16x1xf32>
    %122 = tpu.reciprocal %121 {approx = true} : vector<16x1xf32> -> vector<16x1xf32>
    %123 = vector.broadcast %122 : vector<16x1xf32> to vector<16x16xf32>
    %124 = arith.mulf %119, %123 : vector<16x16xf32>
    %cst_42 = arith.constant dense<0.000000e+00> : vector<16x8xf32>
    %125 = tpu.matmul %124, %113, %cst_42 {dimension_numbers = #tpu.dot_dimension_numbers<[1], [0], [0], [1], [0, 0, 1, 1], [], []>} : vector<16x16xf32>, vector<16x8xf32>, vector<16x8xf32> -> vector<16x8xf32>
    %126 = vector.extract_strided_slice %34 {offsets = [16, 16], sizes = [16, 8], strides = [1, 1]} : vector<32x96xf32> to vector<16x8xf32>
    %127 = vector.extract_strided_slice %34 {offsets = [16, 48], sizes = [16, 8], strides = [1, 1]} : vector<32x96xf32> to vector<16x8xf32>
    %128 = vector.extract_strided_slice %34 {offsets = [16, 80], sizes = [16, 8], strides = [1, 1]} : vector<32x96xf32> to vector<16x8xf32>
    %cst_43 = arith.constant dense<0.000000e+00> : vector<16x16xf32>
    %129 = tpu.matmul %126, %127, %cst_43 {dimension_numbers = #tpu.dot_dimension_numbers<[1], [1], [0], [0], [0, 0, 1, 0], [], []>} : vector<16x8xf32>, vector<16x8xf32>, vector<16x16xf32> -> vector<16x16xf32>
    %cst_44 = arith.constant dense<0xFF800000> : vector<16xf32>
    %130 = vector.multi_reduction <maximumf>, %129, %cst_44 [1] : vector<16x16xf32> to vector<16xf32>
    %131 = vector.shape_cast %130 : vector<16xf32> to vector<16x1xf32>
    %132 = vector.broadcast %131 : vector<16x1xf32> to vector<16x16xf32>
    %133 = arith.subf %129, %132 : vector<16x16xf32>
    %134 = math.exp %133 : vector<16x16xf32>
    %cst_45 = arith.constant dense<0.000000e+00> : vector<16xf32>
    %135 = vector.multi_reduction <add>, %134, %cst_45 [1] : vector<16x16xf32> to vector<16xf32>
    %136 = vector.shape_cast %135 : vector<16xf32> to vector<16x1xf32>
    %137 = tpu.reciprocal %136 {approx = true} : vector<16x1xf32> -> vector<16x1xf32>
    %138 = vector.broadcast %137 : vector<16x1xf32> to vector<16x16xf32>
    %139 = arith.mulf %134, %138 : vector<16x16xf32>
    %cst_46 = arith.constant dense<0.000000e+00> : vector<16x8xf32>
    %140 = tpu.matmul %139, %128, %cst_46 {dimension_numbers = #tpu.dot_dimension_numbers<[1], [0], [0], [1], [0, 0, 1, 1], [], []>} : vector<16x16xf32>, vector<16x8xf32>, vector<16x8xf32> -> vector<16x8xf32>
    %141 = vector.extract_strided_slice %34 {offsets = [16, 24], sizes = [16, 8], strides = [1, 1]} : vector<32x96xf32> to vector<16x8xf32>
    %142 = vector.extract_strided_slice %34 {offsets = [16, 56], sizes = [16, 8], strides = [1, 1]} : vector<32x96xf32> to vector<16x8xf32>
    %143 = vector.extract_strided_slice %34 {offsets = [16, 88], sizes = [16, 8], strides = [1, 1]} : vector<32x96xf32> to vector<16x8xf32>
    %cst_47 = arith.constant dense<0.000000e+00> : vector<16x16xf32>
    %144 = tpu.matmul %141, %142, %cst_47 {dimension_numbers = #tpu.dot_dimension_numbers<[1], [1], [0], [0], [0, 0, 1, 0], [], []>} : vector<16x8xf32>, vector<16x8xf32>, vector<16x16xf32> -> vector<16x16xf32>
    %cst_48 = arith.constant dense<0xFF800000> : vector<16xf32>
    %145 = vector.multi_reduction <maximumf>, %144, %cst_48 [1] : vector<16x16xf32> to vector<16xf32>
    %146 = vector.shape_cast %145 : vector<16xf32> to vector<16x1xf32>
    %147 = vector.broadcast %146 : vector<16x1xf32> to vector<16x16xf32>
    %148 = arith.subf %144, %147 : vector<16x16xf32>
    %149 = math.exp %148 : vector<16x16xf32>
    %cst_49 = arith.constant dense<0.000000e+00> : vector<16xf32>
    %150 = vector.multi_reduction <add>, %149, %cst_49 [1] : vector<16x16xf32> to vector<16xf32>
    %151 = vector.shape_cast %150 : vector<16xf32> to vector<16x1xf32>
    %152 = tpu.reciprocal %151 {approx = true} : vector<16x1xf32> -> vector<16x1xf32>
    %153 = vector.broadcast %152 : vector<16x1xf32> to vector<16x16xf32>
    %154 = arith.mulf %149, %153 : vector<16x16xf32>
    %cst_50 = arith.constant dense<0.000000e+00> : vector<16x8xf32>
    %155 = tpu.matmul %154, %143, %cst_50 {dimension_numbers = #tpu.dot_dimension_numbers<[1], [0], [0], [1], [0, 0, 1, 1], [], []>} : vector<16x16xf32>, vector<16x8xf32>, vector<16x8xf32> -> vector<16x8xf32>
    %156 = tpu.concatenate %110, %125, %140, %155 in 1 : vector<16x8xf32>, vector<16x8xf32>, vector<16x8xf32>, vector<16x8xf32> -> vector<16x32xf32>
    %157 = tpu.concatenate %95, %156 in 0 : vector<16x32xf32>, vector<16x32xf32> -> vector<32x32xf32>
    %c0_51 = arith.constant 0 : index
    %c0_52 = arith.constant 0 : index
    %c0_53 = arith.constant 0 : index
    %158 = vector.load %arg6[%c0_51, %c0_52, %c0_53] : memref<1x32x32xf32, #tpu.memory_space<vmem>>, vector<1x32x32xf32>
    %159 = vector.shape_cast %158 : vector<1x32x32xf32> to vector<32x32xf32>
    %cst_54 = arith.constant dense<0.000000e+00> : vector<32x32xf32>
    %160 = tpu.matmul %157, %159, %cst_54 {dimension_numbers = #tpu.dot_dimension_numbers<[1], [0], [0], [1], [0, 0, 1, 1], [], []>} : vector<32x32xf32>, vector<32x32xf32>, vector<32x32xf32> -> vector<32x32xf32>
    %c0_55 = arith.constant 0 : index
    %c0_56 = arith.constant 0 : index
    %c0_57 = arith.constant 0 : index
    %161 = vector.load %arg7[%c0_55, %c0_56, %c0_57] : memref<1x1x32xf32, #tpu.memory_space<vmem>>, vector<1x1x32xf32>
    %162 = vector.shape_cast %161 : vector<1x1x32xf32> to vector<1x32xf32>
    %163 = vector.broadcast %162 : vector<1x32xf32> to vector<32x32xf32>
    %164 = arith.addf %160, %163 : vector<32x32xf32>
    %165 = arith.addf %3, %164 : vector<32x32xf32>
    %c0_58 = arith.constant 0 : index
    %c0_59 = arith.constant 0 : index
    %c0_60 = arith.constant 0 : index
    %166 = vector.load %arg8[%c0_58, %c0_59, %c0_60] : memref<1x1x32xf32, #tpu.memory_space<vmem>>, vector<1x1x32xf32>
    %167 = vector.shape_cast %166 : vector<1x1x32xf32> to vector<1x32xf32>
    %c0_61 = arith.constant 0 : index
    %c0_62 = arith.constant 0 : index
    %c0_63 = arith.constant 0 : index
    %168 = vector.load %arg9[%c0_61, %c0_62, %c0_63] : memref<1x1x32xf32, #tpu.memory_space<vmem>>, vector<1x1x32xf32>
    %169 = vector.shape_cast %168 : vector<1x1x32xf32> to vector<1x32xf32>
    %cst_64 = arith.constant dense<0.000000e+00> : vector<32xf32>
    %170 = vector.multi_reduction <add>, %165, %cst_64 [1] : vector<32x32xf32> to vector<32xf32>
    %171 = vector.shape_cast %170 : vector<32xf32> to vector<32x1xf32>
    %cst_65 = arith.constant 3.200000e+01 : f32
    %172 = vector.broadcast %cst_65 : f32 to vector<32x1xf32>
    %173 = arith.divf %171, %172 : vector<32x1xf32>
    %174 = vector.broadcast %173 : vector<32x1xf32> to vector<32x32xf32>
    %175 = arith.subf %165, %174 : vector<32x32xf32>
    %176 = arith.mulf %175, %175 : vector<32x32xf32>
    %cst_66 = arith.constant dense<0.000000e+00> : vector<32xf32>
    %177 = vector.multi_reduction <add>, %176, %cst_66 [1] : vector<32x32xf32> to vector<32xf32>
    %178 = vector.shape_cast %177 : vector<32xf32> to vector<32x1xf32>
    %cst_67 = arith.constant 3.200000e+01 : f32
    %179 = vector.broadcast %cst_67 : f32 to vector<32x1xf32>
    %180 = arith.divf %178, %179 : vector<32x1xf32>
    %cst_68 = arith.constant 9.99999974E-6 : f32
    %181 = vector.broadcast %cst_68 : f32 to vector<32x1xf32>
    %182 = arith.addf %180, %181 : vector<32x1xf32>
    %183 = math.rsqrt %182 : vector<32x1xf32>
    %184 = vector.broadcast %183 : vector<32x1xf32> to vector<32x32xf32>
    %185 = arith.mulf %175, %184 : vector<32x32xf32>
    %186 = vector.broadcast %167 : vector<1x32xf32> to vector<32x32xf32>
    %187 = arith.mulf %185, %186 : vector<32x32xf32>
    %188 = vector.broadcast %169 : vector<1x32xf32> to vector<32x32xf32>
    %189 = arith.addf %187, %188 : vector<32x32xf32>
    %c0_69 = arith.constant 0 : index
    %c0_70 = arith.constant 0 : index
    %c0_71 = arith.constant 0 : index
    %190 = vector.load %arg10[%c0_69, %c0_70, %c0_71] : memref<1x32x128xf32, #tpu.memory_space<vmem>>, vector<1x32x128xf32>
    %191 = vector.shape_cast %190 : vector<1x32x128xf32> to vector<32x128xf32>
    %cst_72 = arith.constant dense<0.000000e+00> : vector<32x128xf32>
    %192 = tpu.matmul %189, %191, %cst_72 {dimension_numbers = #tpu.dot_dimension_numbers<[1], [0], [0], [1], [0, 0, 1, 1], [], []>} : vector<32x32xf32>, vector<32x128xf32>, vector<32x128xf32> -> vector<32x128xf32>
    %c0_73 = arith.constant 0 : index
    %c0_74 = arith.constant 0 : index
    %c0_75 = arith.constant 0 : index
    %193 = vector.load %arg11[%c0_73, %c0_74, %c0_75] : memref<1x1x128xf32, #tpu.memory_space<vmem>>, vector<1x1x128xf32>
    %194 = vector.shape_cast %193 : vector<1x1x128xf32> to vector<1x128xf32>
    %195 = vector.broadcast %194 : vector<1x128xf32> to vector<32x128xf32>
    %196 = arith.addf %192, %195 : vector<32x128xf32>
    %cst_76 = arith.constant 5.000000e-01 : f32
    %197 = vector.broadcast %cst_76 : f32 to vector<32x128xf32>
    %198 = arith.mulf %197, %196 : vector<32x128xf32>
    %cst_77 = arith.constant 0.707106769 : f32
    %199 = vector.broadcast %cst_77 : f32 to vector<32x128xf32>
    %200 = arith.mulf %196, %199 : vector<32x128xf32>
    %201 = math.erf %200 : vector<32x128xf32>
    %cst_78 = arith.constant 1.000000e+00 : f32
    %202 = vector.broadcast %cst_78 : f32 to vector<32x128xf32>
    %203 = arith.addf %202, %201 : vector<32x128xf32>
    %204 = arith.mulf %198, %203 : vector<32x128xf32>
    %c0_79 = arith.constant 0 : index
    %c0_80 = arith.constant 0 : index
    %c0_81 = arith.constant 0 : index
    %205 = vector.load %arg12[%c0_79, %c0_80, %c0_81] : memref<1x128x32xf32, #tpu.memory_space<vmem>>, vector<1x128x32xf32>
    %206 = vector.shape_cast %205 : vector<1x128x32xf32> to vector<128x32xf32>
    %cst_82 = arith.constant dense<0.000000e+00> : vector<32x32xf32>
    %207 = tpu.matmul %204, %206, %cst_82 {dimension_numbers = #tpu.dot_dimension_numbers<[1], [0], [0], [1], [0, 0, 1, 1], [], []>} : vector<32x128xf32>, vector<128x32xf32>, vector<32x32xf32> -> vector<32x32xf32>
    %c0_83 = arith.constant 0 : index
    %c0_84 = arith.constant 0 : index
    %c0_85 = arith.constant 0 : index
    %208 = vector.load %arg13[%c0_83, %c0_84, %c0_85] : memref<1x1x32xf32, #tpu.memory_space<vmem>>, vector<1x1x32xf32>
    %209 = vector.shape_cast %208 : vector<1x1x32xf32> to vector<1x32xf32>
    %210 = vector.broadcast %209 : vector<1x32xf32> to vector<32x32xf32>
    %211 = arith.addf %207, %210 : vector<32x32xf32>
    %212 = arith.addf %165, %211 : vector<32x32xf32>
    %c0_86 = arith.constant 0 : index
    %c0_87 = arith.constant 0 : index
    %213 = vector.load %arg14[%c0_86, %c0_87] : memref<32x32xf32, #tpu.memory_space<vmem>>, vector<32x32xf32>
    tpu.vector_store %arg14[%c0_86, %c0_87], %212 {strides = array<i32>} : memref<32x32xf32, #tpu.memory_space<vmem>>, vector<32x32xf32>,
    return
  }
  func.func @transform_0(%arg0: i32) -> (i32, i32) {
    %c0_i32 = arith.constant 0 : i32
    %c0_i32_0 = arith.constant 0 : i32
    %c0_i32_1 = arith.constant 0 : i32
    return %c0_i32, %c0_i32_0 : i32, i32
  }
  func.func @transform_1(%arg0: i32) -> (i32, i32, i32) {
    %c0_i32 = arith.constant 0 : i32
    %c0_i32_0 = arith.constant 0 : i32
    %c0_i32_1 = arith.constant 0 : i32
    return %arg0, %c0_i32, %c0_i32_0 : i32, i32, i32
  }
  func.func @transform_2(%arg0: i32) -> (i32, i32, i32) {
    %c0_i32 = arith.constant 0 : i32
    %c0_i32_0 = arith.constant 0 : i32
    %c0_i32_1 = arith.constant 0 : i32
    return %arg0, %c0_i32, %c0_i32_0 : i32, i32, i32
  }
  func.func @transform_3(%arg0: i32) -> (i32, i32, i32) {
    %c0_i32 = arith.constant 0 : i32
    %c0_i32_0 = arith.constant 0 : i32
    %c0_i32_1 = arith.constant 0 : i32
    return %arg0, %c0_i32, %c0_i32_0 : i32, i32, i32
  }
  func.func @transform_4(%arg0: i32) -> (i32, i32, i32) {
    %c0_i32 = arith.constant 0 : i32
    %c0_i32_0 = arith.constant 0 : i32
    %c0_i32_1 = arith.constant 0 : i32
    return %arg0, %c0_i32, %c0_i32_0 : i32, i32, i32
  }
  func.func @transform_5(%arg0: i32) -> (i32, i32, i32) {
    %c0_i32 = arith.constant 0 : i32
    %c0_i32_0 = arith.constant 0 : i32
    %c0_i32_1 = arith.constant 0 : i32
    return %arg0, %c0_i32, %c0_i32_0 : i32, i32, i32
  }
  func.func @transform_6(%arg0: i32) -> (i32, i32, i32) {
    %c0_i32 = arith.constant 0 : i32
    %c0_i32_0 = arith.constant 0 : i32
    %c0_i32_1 = arith.constant 0 : i32
    return %arg0, %c0_i32, %c0_i32_0 : i32, i32, i32
  }
  func.func @transform_7(%arg0: i32) -> (i32, i32, i32) {
    %c0_i32 = arith.constant 0 : i32
    %c0_i32_0 = arith.constant 0 : i32
    %c0_i32_1 = arith.constant 0 : i32
    return %arg0, %c0_i32, %c0_i32_0 : i32, i32, i32
  }
  func.func @transform_8(%arg0: i32) -> (i32, i32, i32) {
    %c0_i32 = arith.constant 0 : i32
    %c0_i32_0 = arith.constant 0 : i32
    %c0_i32_1 = arith.constant 0 : i32
    return %arg0, %c0_i32, %c0_i32_0 : i32, i32, i32
  }
  func.func @transform_9(%arg0: i32) -> (i32, i32, i32) {
    %c0_i32 = arith.constant 0 : i32
    %c0_i32_0 = arith.constant 0 : i32
    %c0_i32_1 = arith.constant 0 : i32
    return %arg0, %c0_i32, %c0_i32_0 : i32, i32, i32
  }
  func.func @transform_10(%arg0: i32) -> (i32, i32, i32) {
    %c0_i32 = arith.constant 0 : i32
    %c0_i32_0 = arith.constant 0 : i32
    %c0_i32_1 = arith.constant 0 : i32
    return %arg0, %c0_i32, %c0_i32_0 : i32, i32, i32
  }
  func.func @transform_11(%arg0: i32) -> (i32, i32, i32) {
    %c0_i32 = arith.constant 0 : i32
    %c0_i32_0 = arith.constant 0 : i32
    %c0_i32_1 = arith.constant 0 : i32
    return %arg0, %c0_i32, %c0_i32_0 : i32, i32, i32
  }
  func.func @transform_12(%arg0: i32) -> (i32, i32, i32) {
    %c0_i32 = arith.constant 0 : i32
    %c0_i32_0 = arith.constant 0 : i32
    %c0_i32_1 = arith.constant 0 : i32
    return %arg0, %c0_i32, %c0_i32_0 : i32, i32, i32
  }
  func.func @transform_13(%arg0: i32) -> (i32, i32) {
    %c0_i32 = arith.constant 0 : i32
    %c0_i32_0 = arith.constant 0 : i32
    %c0_i32_1 = arith.constant 0 : i32
    return %c0_i32, %c0_i32_0 : i32, i32
  }
}

</mosaic_0001>

<llo_original>
// kernel: vit_encoder.1
$region0: #{vit_encoder.1}
  #allocation0 [shape = 'u32[]', space=smem, size = 0x4, offset = 0x4, fixed_abs, tag = 'smem constant byte address 0x4 - core index']
  #allocation1 [shape = 'u32[144,128]{1,0:T(1,128)}', space=vmem, size = 0x12000, scoped, tag = 'internal scratch']
  %s0 = inlined_call_operand.vmem [shape: f32[32,32], index: 0, kind: input, shape index: {}]
  %s1 = inlined_call_operand.vmem [shape: f32[2,1,32], index: 1, kind: input, shape index: {}]
  %s2 = inlined_call_operand.vmem [shape: f32[2,1,32], index: 2, kind: input, shape index: {}]
  %s3 = inlined_call_operand.vmem [shape: f32[2,32,96], index: 3, kind: input, shape index: {}]
  %s4 = inlined_call_operand.vmem [shape: f32[2,1,96], index: 4, kind: input, shape index: {}]
  %s5 = inlined_call_operand.vmem [shape: f32[2,32,32], index: 5, kind: input, shape index: {}]
  %s6 = inlined_call_operand.vmem [shape: f32[2,1,32], index: 6, kind: input, shape index: {}]
  %s7 = inlined_call_operand.vmem [shape: f32[2,1,32], index: 7, kind: input, shape index: {}]
  %s8 = inlined_call_operand.vmem [shape: f32[2,1,32], index: 8, kind: input, shape index: {}]
  %s9 = inlined_call_operand.vmem [shape: f32[2,32,128], index: 9, kind: input, shape index: {}]
  %s10 = inlined_call_operand.vmem [shape: f32[2,1,128], index: 10, kind: input, shape index: {}]
  %s11 = inlined_call_operand.vmem [shape: f32[2,128,32], index: 11, kind: input, shape index: {}]
  %s12 = inlined_call_operand.vmem [shape: f32[2,1,32], index: 12, kind: input, shape index: {}]
  %s13 = inlined_call_operand.hbm [shape: f32[32,32], index: 13, kind: output, shape index: {}]
  %s14 = sld [smem:[#allocation0]]
  $region89: #{vit_encoder.1} parent=0
    _
  %s16 = ssub.s32 1, %s14
  %s17 = scalar_select 0, %s16, %s14
  $region1: #{vit_encoder.1} parent=0
    #allocation2 [shape = 'u8[16384]{0}', space=vmem, size = 0x4000, scoped, tag = 'output window, operand 0, single buffered']
    #allocation3 [shape = 's32[2]{0}', space=sflag, size = 0x8, scoped, tag = 'scoped memory for vit_encoder.1']
    %18 = vsyncpa [#allocation3], 0
    loop: start=0, step=1, limit=4
    $region2: #{vit_encoder.1} parent=1 // loop_pre_header
      _
    $region3: #{vit_encoder.1} parent=1 // loop_header
      %s20 = sphi 0, %s24
      %p21 = scmp.ge.s32.totalorder %s20, 4
      %s28 = sphi 0, %s28
      %s30 = sphi 0, %s28
      %s31 = sphi 0, %s30
      %s45 = sphi 0, %s31
      %s51 = sphi 0, %s53
      %s54 = sphi 0, %s51
      %s55 = sphi 0, %s54
      %s71 = sphi 0, %s55
      %s77 = sphi 0, %s79
      %s80 = sphi 0, %s77
      %s81 = sphi 0, %s80
      %s97 = sphi 0, %s81
      %s103 = sphi 0, %s105
      %s106 = sphi 0, %s103
      %s107 = sphi 0, %s106
      %s123 = sphi 0, %s107
      %s129 = sphi 0, %s131
      %s132 = sphi 0, %s129
      %s133 = sphi 0, %s132
      %s149 = sphi 0, %s133
      %s155 = sphi 0, %s157
      %s158 = sphi 0, %s155
      %s159 = sphi 0, %s158
      %s175 = sphi 0, %s159
      %s181 = sphi 0, %s183
      %s184 = sphi 0, %s181
      %s185 = sphi 0, %s184
      %s201 = sphi 0, %s185
      %s207 = sphi 0, %s209
      %s210 = sphi 0, %s207
      %s211 = sphi 0, %s210
      %s227 = sphi 0, %s211
      %s233 = sphi 0, %s235
      %s236 = sphi 0, %s233
      %s237 = sphi 0, %s236
      %s253 = sphi 0, %s237
      %s259 = sphi 0, %s261
      %s262 = sphi 0, %s259
      %s263 = sphi 0, %s262
      %s279 = sphi 0, %s263
      %s285 = sphi 0, %s287
      %s288 = sphi 0, %s285
      %s289 = sphi 0, %s288
      %s305 = sphi 0, %s289
      %s311 = sphi 0, %s313
      %s314 = sphi 0, %s311
      %s315 = sphi 0, %s314
      %s331 = sphi 0, %s315
      %s337 = sphi 0, %s339
      %s340 = sphi 0, %s337
      %s341 = sphi 0, %s340
      %s357 = sphi 0, %s341
      %s361 = sphi 0, %s361
      %s363 = sphi 0, %s361
      %s364 = sphi 0, %s363
      %s378 = sphi 0, %s364
    $region4: #{vit_encoder.1} parent=1 // loop_header_branch
      %23 = sbr.rel (%p21) target = $region8
    $region5: #{vit_encoder.1} parent=1 // loop_body
      %s25 = ssub.s32 %s20, 1
      %s26 = ssub.s32 %s20, 2
      %s27 = sadd.s32 %s20, 1
      %s29 = sadd.s32 %s28, 1
      %p32 = scmp.eq.s32.totalorder %s20, 1
      %p33 = scmp.ne.s32.totalorder %s28, %s30
      %p34 = scmp.eq.s32.totalorder %s20, 0
      %p35 = por %p33, %p34
      %p36 = scmp.ne.s32.totalorder %s28, %s30
      %p37 = scmp.eq.s32.totalorder %s25, 1
      %p38 = por %p36, %p37
      %p39 = scmp.ne.s32.totalorder %s30, %s31
      %p40 = scmp.eq.s32.totalorder %s25, 0
      %p41 = por %p39, %p40
      %p42 = scmp.ne.s32.totalorder %s30, %s31
      %p43 = scmp.eq.s32.totalorder %s26, 1
      %p44 = por %p42, %p43
      %p46 = scmp.ne.s32.totalorder %s31, %s45
      %p47 = scmp.eq.s32.totalorder %s26, 0
      %p48 = por %p46, %p47
      %s49 = ssub.s32 %s20, %s27
      %p50 = scmp.eq.s32.totalorder %s49, 0
      %s52 = sadd.s32 %s51, 1
      %s53 = scalar_select %p50, %s51, %s52
      %p56 = pneg %p50
      %p57 = scmp.eq.s32.totalorder %s20, 1
      %p58 = por %p56, %p57
      %p59 = scmp.ne.s32.totalorder %s51, %s54
      %p60 = scmp.eq.s32.totalorder %s20, 0
      %p61 = por %p59, %p60
      %p62 = scmp.ne.s32.totalorder %s51, %s54
      %p63 = scmp.eq.s32.totalorder %s25, 1
      %p64 = por %p62, %p63
      %p65 = scmp.ne.s32.totalorder %s54, %s55
      %p66 = scmp.eq.s32.totalorder %s25, 0
      %p67 = por %p65, %p66
      %p68 = scmp.ne.s32.totalorder %s54, %s55
      %p69 = scmp.eq.s32.totalorder %s26, 1
      %p70 = por %p68, %p69
      %p72 = scmp.ne.s32.totalorder %s55, %s71
      %p73 = scmp.eq.s32.totalorder %s26, 0
      %p74 = por %p72, %p73
      %s75 = ssub.s32 %s20, %s27
      %p76 = scmp.eq.s32.totalorder %s75, 0
      %s78 = sadd.s32 %s77, 1
      %s79 = scalar_select %p76, %s77, %s78
      %p82 = pneg %p76
      %p83 = scmp.eq.s32.totalorder %s20, 1
      %p84 = por %p82, %p83
      %p85 = scmp.ne.s32.totalorder %s77, %s80
      %p86 = scmp.eq.s32.totalorder %s20, 0
      %p87 = por %p85, %p86
      %p88 = scmp.ne.s32.totalorder %s77, %s80
      %p89 = scmp.eq.s32.totalorder %s25, 1
      %p90 = por %p88, %p89
      %p91 = scmp.ne.s32.totalorder %s80, %s81
      %p92 = scmp.eq.s32.totalorder %s25, 0
      %p93 = por %p91, %p92
      %p94 = scmp.ne.s32.totalorder %s80, %s81
      %p95 = scmp.eq.s32.totalorder %s26, 1
      %p96 = por %p94, %p95
      %p98 = scmp.ne.s32.totalorder %s81, %s97
      %p99 = scmp.eq.s32.totalorder %s26, 0
      %p100 = por %p98, %p99
      %s101 = ssub.s32 %s20, %s27
      %p102 = scmp.eq.s32.totalorder %s101, 0
      %s104 = sadd.s32 %s103, 1
      %s105 = scalar_select %p102, %s103, %s104
      %p108 = pneg %p102
      %p109 = scmp.eq.s32.totalorder %s20, 1
      %p110 = por %p108, %p109
      %p111 = scmp.ne.s32.totalorder %s103, %s106
      %p112 = scmp.eq.s32.totalorder %s20, 0
      %p113 = por %p111, %p112
      %p114 = scmp.ne.s32.totalorder %s103, %s106
      %p115 = scmp.eq.s32.totalorder %s25, 1
      %p116 = por %p114, %p115
      %p117 = scmp.ne.s32.totalorder %s106, %s107
      %p118 = scmp.eq.s32.totalorder %s25, 0
      %p119 = por %p117, %p118
      %p120 = scmp.ne.s32.totalorder %s106, %s107
      %p121 = scmp.eq.s32.totalorder %s26, 1
      %p122 = por %p120, %p121
      %p124 = scmp.ne.s32.totalorder %s107, %s123
      %p125 = scmp.eq.s32.totalorder %s26, 0
      %p126 = por %p124, %p125
      %s127 = ssub.s32 %s20, %s27
      %p128 = scmp.eq.s32.totalorder %s127, 0
      %s130 = sadd.s32 %s129, 1
      %s131 = scalar_select %p128, %s129, %s130
      %p134 = pneg %p128
      %p135 = scmp.eq.s32.totalorder %s20, 1
      %p136 = por %p134, %p135
      %p137 = scmp.ne.s32.totalorder %s129, %s132
      %p138 = scmp.eq.s32.totalorder %s20, 0
      %p139 = por %p137, %p138
      %p140 = scmp.ne.s32.totalorder %s129, %s132
      %p141 = scmp.eq.s32.totalorder %s25, 1
      %p142 = por %p140, %p141
      %p143 = scmp.ne.s32.totalorder %s132, %s133
      %p144 = scmp.eq.s32.totalorder %s25, 0
      %p145 = por %p143, %p144
      %p146 = scmp.ne.s32.totalorder %s132, %s133
      %p147 = scmp.eq.s32.totalorder %s26, 1
      %p148 = por %p146, %p147
      %p150 = scmp.ne.s32.totalorder %s133, %s149
      %p151 = scmp.eq.s32.totalorder %s26, 0
      %p152 = por %p150, %p151
      %s153 = ssub.s32 %s20, %s27
      %p154 = scmp.eq.s32.totalorder %s153, 0
      %s156 = sadd.s32 %s155, 1
      %s157 = scalar_select %p154, %s155, %s156
      %p160 = pneg %p154
      %p161 = scmp.eq.s32.totalorder %s20, 1
      %p162 = por %p160, %p161
      %p163 = scmp.ne.s32.totalorder %s155, %s158
      %p164 = scmp.eq.s32.totalorder %s20, 0
      %p165 = por %p163, %p164
      %p166 = scmp.ne.s32.totalorder %s155, %s158
      %p167 = scmp.eq.s32.totalorder %s25, 1
      %p168 = por %p166, %p167
      %p169 = scmp.ne.s32.totalorder %s158, %s159
      %p170 = scmp.eq.s32.totalorder %s25, 0
      %p171 = por %p169, %p170
      %p172 = scmp.ne.s32.totalorder %s158, %s159
      %p173 = scmp.eq.s32.totalorder %s26, 1
      %p174 = por %p172, %p173
      %p176 = scmp.ne.s32.totalorder %s159, %s175
      %p177 = scmp.eq.s32.totalorder %s26, 0
      %p178 = por %p176, %p177
      %s179 = ssub.s32 %s20, %s27
      %p180 = scmp.eq.s32.totalorder %s179, 0
      %s182 = sadd.s32 %s181, 1
      %s183 = scalar_select %p180, %s181, %s182
      %p186 = pneg %p180
      %p187 = scmp.eq.s32.totalorder %s20, 1
      %p188 = por %p186, %p187
      %p189 = scmp.ne.s32.totalorder %s181, %s184
      %p190 = scmp.eq.s32.totalorder %s20, 0
      %p191 = por %p189, %p190
      %p192 = scmp.ne.s32.totalorder %s181, %s184
      %p193 = scmp.eq.s32.totalorder %s25, 1
      %p194 = por %p192, %p193
      %p195 = scmp.ne.s32.totalorder %s184, %s185
      %p196 = scmp.eq.s32.totalorder %s25, 0
      %p197 = por %p195, %p196
      %p198 = scmp.ne.s32.totalorder %s184, %s185
      %p199 = scmp.eq.s32.totalorder %s26, 1
      %p200 = por %p198, %p199
      %p202 = scmp.ne.s32.totalorder %s185, %s201
      %p203 = scmp.eq.s32.totalorder %s26, 0
      %p204 = por %p202, %p203
      %s205 = ssub.s32 %s20, %s27
      %p206 = scmp.eq.s32.totalorder %s205, 0
      %s208 = sadd.s32 %s207, 1
      %s209 = scalar_select %p206, %s207, %s208
      %p212 = pneg %p206
      %p213 = scmp.eq.s32.totalorder %s20, 1
      %p214 = por %p212, %p213
      %p215 = scmp.ne.s32.totalorder %s207, %s210
      %p216 = scmp.eq.s32.totalorder %s20, 0
      %p217 = por %p215, %p216
      %p218 = scmp.ne.s32.totalorder %s207, %s210
      %p219 = scmp.eq.s32.totalorder %s25, 1
      %p220 = por %p218, %p219
      %p221 = scmp.ne.s32.totalorder %s210, %s211
      %p222 = scmp.eq.s32.totalorder %s25, 0
      %p223 = por %p221, %p222
      %p224 = scmp.ne.s32.totalorder %s210, %s211
      %p225 = scmp.eq.s32.totalorder %s26, 1
      %p226 = por %p224, %p225
      %p228 = scmp.ne.s32.totalorder %s211, %s227
      %p229 = scmp.eq.s32.totalorder %s26, 0
      %p230 = por %p228, %p229
      %s231 = ssub.s32 %s20, %s27
      %p232 = scmp.eq.s32.totalorder %s231, 0
      %s234 = sadd.s32 %s233, 1
      %s235 = scalar_select %p232, %s233, %s234
      %p238 = pneg %p232
      %p239 = scmp.eq.s32.totalorder %s20, 1
      %p240 = por %p238, %p239
      %p241 = scmp.ne.s32.totalorder %s233, %s236
      %p242 = scmp.eq.s32.totalorder %s20, 0
      %p243 = por %p241, %p242
      %p244 = scmp.ne.s32.totalorder %s233, %s236
      %p245 = scmp.eq.s32.totalorder %s25, 1
      %p246 = por %p244, %p245
      %p247 = scmp.ne.s32.totalorder %s236, %s237
      %p248 = scmp.eq.s32.totalorder %s25, 0
      %p249 = por %p247, %p248
      %p250 = scmp.ne.s32.totalorder %s236, %s237
      %p251 = scmp.eq.s32.totalorder %s26, 1
      %p252 = por %p250, %p251
      %p254 = scmp.ne.s32.totalorder %s237, %s253
      %p255 = scmp.eq.s32.totalorder %s26, 0
      %p256 = por %p254, %p255
      %s257 = ssub.s32 %s20, %s27
      %p258 = scmp.eq.s32.totalorder %s257, 0
      %s260 = sadd.s32 %s259, 1
      %s261 = scalar_select %p258, %s259, %s260
      %p264 = pneg %p258
      %p265 = scmp.eq.s32.totalorder %s20, 1
      %p266 = por %p264, %p265
      %p267 = scmp.ne.s32.totalorder %s259, %s262
      %p268 = scmp.eq.s32.totalorder %s20, 0
      %p269 = por %p267, %p268
      %p270 = scmp.ne.s32.totalorder %s259, %s262
      %p271 = scmp.eq.s32.totalorder %s25, 1
      %p272 = por %p270, %p271
      %p273 = scmp.ne.s32.totalorder %s262, %s263
      %p274 = scmp.eq.s32.totalorder %s25, 0
      %p275 = por %p273, %p274
      %p276 = scmp.ne.s32.totalorder %s262, %s263
      %p277 = scmp.eq.s32.totalorder %s26, 1
      %p278 = por %p276, %p277
      %p280 = scmp.ne.s32.totalorder %s263, %s279
      %p281 = scmp.eq.s32.totalorder %s26, 0
      %p282 = por %p280, %p281
      %s283 = ssub.s32 %s20, %s27
      %p284 = scmp.eq.s32.totalorder %s283, 0
      %s286 = sadd.s32 %s285, 1
      %s287 = scalar_select %p284, %s285, %s286
      %p290 = pneg %p284
      %p291 = scmp.eq.s32.totalorder %s20, 1
      %p292 = por %p290, %p291
      %p293 = scmp.ne.s32.totalorder %s285, %s288
      %p294 = scmp.eq.s32.totalorder %s20, 0
      %p295 = por %p293, %p294
      %p296 = scmp.ne.s32.totalorder %s285, %s288
      %p297 = scmp.eq.s32.totalorder %s25, 1
      %p298 = por %p296, %p297
      %p299 = scmp.ne.s32.totalorder %s288, %s289
      %p300 = scmp.eq.s32.totalorder %s25, 0
      %p301 = por %p299, %p300
      %p302 = scmp.ne.s32.totalorder %s288, %s289
      %p303 = scmp.eq.s32.totalorder %s26, 1
      %p304 = por %p302, %p303
      %p306 = scmp.ne.s32.totalorder %s289, %s305
      %p307 = scmp.eq.s32.totalorder %s26, 0
      %p308 = por %p306, %p307
      %s309 = ssub.s32 %s20, %s27
      %p310 = scmp.eq.s32.totalorder %s309, 0
      %s312 = sadd.s32 %s311, 1
      %s313 = scalar_select %p310, %s311, %s312
      %p316 = pneg %p310
      %p317 = scmp.eq.s32.totalorder %s20, 1
      %p318 = por %p316, %p317
      %p319 = scmp.ne.s32.totalorder %s311, %s314
      %p320 = scmp.eq.s32.totalorder %s20, 0
      %p321 = por %p319, %p320
      %p322 = scmp.ne.s32.totalorder %s311, %s314
      %p323 = scmp.eq.s32.totalorder %s25, 1
      %p324 = por %p322, %p323
      %p325 = scmp.ne.s32.totalorder %s314, %s315
      %p326 = scmp.eq.s32.totalorder %s25, 0
      %p327 = por %p325, %p326
      %p328 = scmp.ne.s32.totalorder %s314, %s315
      %p329 = scmp.eq.s32.totalorder %s26, 1
      %p330 = por %p328, %p329
      %p332 = scmp.ne.s32.totalorder %s315, %s331
      %p333 = scmp.eq.s32.totalorder %s26, 0
      %p334 = por %p332, %p333
      %s335 = ssub.s32 %s20, %s27
      %p336 = scmp.eq.s32.totalorder %s335, 0
      %s338 = sadd.s32 %s337, 1
      %s339 = scalar_select %p336, %s337, %s338
      %p342 = pneg %p336
      %p343 = scmp.eq.s32.totalorder %s20, 1
      %p344 = por %p342, %p343
      %p345 = scmp.ne.s32.totalorder %s337, %s340
      %p346 = scmp.eq.s32.totalorder %s20, 0
      %p347 = por %p345, %p346
      %p348 = scmp.ne.s32.totalorder %s337, %s340
      %p349 = scmp.eq.s32.totalorder %s25, 1
      %p350 = por %p348, %p349
      %p351 = scmp.ne.s32.totalorder %s340, %s341
      %p352 = scmp.eq.s32.totalorder %s25, 0
      %p353 = por %p351, %p352
      %p354 = scmp.ne.s32.totalorder %s340, %s341
      %p355 = scmp.eq.s32.totalorder %s26, 1
      %p356 = por %p354, %p355
      %p358 = scmp.ne.s32.totalorder %s341, %s357
      %p359 = scmp.eq.s32.totalorder %s26, 0
      %p360 = por %p358, %p359
      %s362 = sadd.s32 %s361, 1
      %p365 = scmp.eq.s32.totalorder %s20, 1
      %p366 = scmp.ne.s32.totalorder %s361, %s363
      %p367 = scmp.eq.s32.totalorder %s20, 0
      %p368 = por %p366, %p367
      %p369 = scmp.ne.s32.totalorder %s361, %s363
      %p370 = scmp.eq.s32.totalorder %s25, 1
      %p371 = por %p369, %p370
      %p372 = scmp.ne.s32.totalorder %s363, %s364
      %p373 = scmp.eq.s32.totalorder %s25, 0
      %p374 = por %p372, %p373
      %p375 = scmp.ne.s32.totalorder %s363, %s364
      %p376 = scmp.eq.s32.totalorder %s26, 1
      %p377 = por %p375, %p376
      %p379 = scmp.ne.s32.totalorder %s364, %s378
      %p380 = scmp.eq.s32.totalorder %s26, 0
      %p381 = por %p379, %p380
      %p382 = scmp.le.s32.totalorder 1, %s20
      %p383 = scmp.lt.s32.totalorder %s20, 3
      %p384 = pnand %p382, %p383
      %p385 = pneg %p384
      // Predicated region
      $region9: #{vit_encoder.1} parent=5 // pred_check
        _
      $region10: #{vit_encoder.1} parent=5 // pred_check_branch
        %387 = sbr.rel (%p384) target = $region12
      $region11: #{vit_encoder.1} parent=5 // pred_region
        %s388 = ssub.s32 %s20, 1
        // Predicated region
        $region13: #{vit_encoder.1} parent=11 // pred_check
          %p389 = pneg %p41
        $region14: #{vit_encoder.1} parent=11 // pred_check_branch
          %391 = sbr.rel (%p389) target = $region16
        $region15: #{vit_encoder.1} parent=11 // pred_region
          _
        $region16: #{vit_encoder.1} parent=11 // pred_fallthru
          _
      $region12: #{vit_encoder.1} parent=5 // pred_fallthru
        _
      %p392 = scmp.lt.s32.totalorder %s20, 2
      // Predicated region
      $region17: #{vit_encoder.1} parent=5 // pred_check
        %p393 = pneg %p392
      $region18: #{vit_encoder.1} parent=5 // pred_check_branch
        %395 = sbr.rel (%p393) target = $region20
      $region19: #{vit_encoder.1} parent=5 // pred_region
        // Predicated region
        $region21: #{vit_encoder.1} parent=19 // pred_check
          %p396 = pneg %p61
        $region22: #{vit_encoder.1} parent=19 // pred_check_branch
          %398 = sbr.rel (%p396) target = $region24
        $region23: #{vit_encoder.1} parent=19 // pred_region
          %p399 = scmp.lt.s32.totalorder %s20, 1
          %s400 = scalar_select %p399, %s20, 1
          %s401 = scalar_lea.vmem %s1, %s400
        $region24: #{vit_encoder.1} parent=19 // pred_fallthru
          _
        // Predicated region
        $region25: #{vit_encoder.1} parent=19 // pred_check
          %p402 = pneg %p87
        $region26: #{vit_encoder.1} parent=19 // pred_check_branch
          %404 = sbr.rel (%p402) target = $region28
        $region27: #{vit_encoder.1} parent=19 // pred_region
          %p405 = scmp.lt.s32.totalorder %s20, 1
          %s406 = scalar_select %p405, %s20, 1
          %s407 = scalar_lea.vmem %s2, %s406
        $region28: #{vit_encoder.1} parent=19 // pred_fallthru
          _
        // Predicated region
        $region29: #{vit_encoder.1} parent=19 // pred_check
          %p408 = pneg %p113
        $region30: #{vit_encoder.1} parent=19 // pred_check_branch
          %410 = sbr.rel (%p408) target = $region32
        $region31: #{vit_encoder.1} parent=19 // pred_region
          %p411 = scmp.lt.s32.totalorder %s20, 1
          %s412 = scalar_select %p411, %s20, 1
          %s413 = smul.addr %s412, 4
          %s414 = smul.addr %s413, 8
          %s415 = scalar_lea.vmem %s3, %s414
        $region32: #{vit_encoder.1} parent=19 // pred_fallthru
          _
        // Predicated region
        $region33: #{vit_encoder.1} parent=19 // pred_check
          %p416 = pneg %p139
        $region34: #{vit_encoder.1} parent=19 // pred_check_branch
          %418 = sbr.rel (%p416) target = $region36
        $region35: #{vit_encoder.1} parent=19 // pred_region
          %p419 = scmp.lt.s32.totalorder %s20, 1
          %s420 = scalar_select %p419, %s20, 1
          %s421 = scalar_lea.vmem %s4, %s420
        $region36: #{vit_encoder.1} parent=19 // pred_fallthru
          _
        // Predicated region
        $region37: #{vit_encoder.1} parent=19 // pred_check
          %p422 = pneg %p165
        $region38: #{vit_encoder.1} parent=19 // pred_check_branch
          %424 = sbr.rel (%p422) target = $region40
        $region39: #{vit_encoder.1} parent=19 // pred_region
          %p425 = scmp.lt.s32.totalorder %s20, 1
          %s426 = scalar_select %p425, %s20, 1
          %s427 = smul.addr %s426, 4
          %s428 = smul.addr %s427, 8
          %s429 = scalar_lea.vmem %s5, %s428
        $region40: #{vit_encoder.1} parent=19 // pred_fallthru
          _
        // Predicated region
        $region41: #{vit_encoder.1} parent=19 // pred_check
          %p430 = pneg %p191
        $region42: #{vit_encoder.1} parent=19 // pred_check_branch
          %432 = sbr.rel (%p430) target = $region44
        $region43: #{vit_encoder.1} parent=19 // pred_region
          %p433 = scmp.lt.s32.totalorder %s20, 1
          %s434 = scalar_select %p433, %s20, 1
          %s435 = scalar_lea.vmem %s6, %s434
        $region44: #{vit_encoder.1} parent=19 // pred_fallthru
          _
        // Predicated region
        $region45: #{vit_encoder.1} parent=19 // pred_check
          %p436 = pneg %p217
        $region46: #{vit_encoder.1} parent=19 // pred_check_branch
          %438 = sbr.rel (%p436) target = $region48
        $region47: #{vit_encoder.1} parent=19 // pred_region
          %p439 = scmp.lt.s32.totalorder %s20, 1
          %s440 = scalar_select %p439, %s20, 1
          %s441 = scalar_lea.vmem %s7, %s440
        $region48: #{vit_encoder.1} parent=19 // pred_fallthru
          _
        // Predicated region
        $region49: #{vit_encoder.1} parent=19 // pred_check
          %p442 = pneg %p243
        $region50: #{vit_encoder.1} parent=19 // pred_check_branch
          %444 = sbr.rel (%p442) target = $region52
        $region51: #{vit_encoder.1} parent=19 // pred_region
          %p445 = scmp.lt.s32.totalorder %s20, 1
          %s446 = scalar_select %p445, %s20, 1
          %s447 = scalar_lea.vmem %s8, %s446
        $region52: #{vit_encoder.1} parent=19 // pred_fallthru
          _
        // Predicated region
        $region53: #{vit_encoder.1} parent=19 // pred_check
          %p448 = pneg %p269
        $region54: #{vit_encoder.1} parent=19 // pred_check_branch
          %450 = sbr.rel (%p448) target = $region56
        $region55: #{vit_encoder.1} parent=19 // pred_region
          %p451 = scmp.lt.s32.totalorder %s20, 1
          %s452 = scalar_select %p451, %s20, 1
          %s453 = smul.addr %s452, 4
          %s454 = smul.addr %s453, 8
          %s455 = scalar_lea.vmem %s9, %s454
        $region56: #{vit_encoder.1} parent=19 // pred_fallthru
          _
        // Predicated region
        $region57: #{vit_encoder.1} parent=19 // pred_check
          %p456 = pneg %p295
        $region58: #{vit_encoder.1} parent=19 // pred_check_branch
          %458 = sbr.rel (%p456) target = $region60
        $region59: #{vit_encoder.1} parent=19 // pred_region
          %p459 = scmp.lt.s32.totalorder %s20, 1
          %s460 = scalar_select %p459, %s20, 1
          %s461 = scalar_lea.vmem %s10, %s460
        $region60: #{vit_encoder.1} parent=19 // pred_fallthru
          _
        // Predicated region
        $region61: #{vit_encoder.1} parent=19 // pred_check
          %p462 = pneg %p321
        $region62: #{vit_encoder.1} parent=19 // pred_check_branch
          %464 = sbr.rel (%p462) target = $region64
        $region63: #{vit_encoder.1} parent=19 // pred_region
          %p465 = scmp.lt.s32.totalorder %s20, 1
          %s466 = scalar_select %p465, %s20, 1
          %s467 = smul.addr %s466, 16
          %s468 = smul.addr %s467, 8
          %s469 = scalar_lea.vmem %s11, %s468
        $region64: #{vit_encoder.1} parent=19 // pred_fallthru
          _
        // Predicated region
        $region65: #{vit_encoder.1} parent=19 // pred_check
          %p470 = pneg %p347
        $region66: #{vit_encoder.1} parent=19 // pred_check_branch
          %472 = sbr.rel (%p470) target = $region68
        $region67: #{vit_encoder.1} parent=19 // pred_region
          %p473 = scmp.lt.s32.totalorder %s20, 1
          %s474 = scalar_select %p473, %s20, 1
          %s475 = scalar_lea.vmem %s12, %s474
        $region68: #{vit_encoder.1} parent=19 // pred_fallthru
          _
      $region20: #{vit_encoder.1} parent=5 // pred_fallthru
        _
      %p476 = scmp.le.s32.totalorder 1, %s20
      %p477 = scmp.lt.s32.totalorder %s20, 3
      %p478 = pnand %p476, %p477
      %p479 = pneg %p478
      // Predicated region
      $region69: #{vit_encoder.1} parent=5 // pred_check
        _
      $region70: #{vit_encoder.1} parent=5 // pred_check_branch
        %481 = sbr.rel (%p478) target = $region72
      $region71: #{vit_encoder.1} parent=5 // pred_region
        %s482 = ssub.s32 %s20, 1
        %p483 = pneg %p41
        %p484 = pneg %p38
        %p485 = scmp.lt.s32.totalorder %s25, 1
        %s486 = scalar_select %p485, %s25, 1
        %s487 = scalar_lea.vmem %s1, %s486
        %p488 = pneg %p67
        %p489 = pneg %p64
        %p490 = scmp.lt.s32.totalorder %s25, 1
        %s491 = scalar_select %p490, %s25, 1
        %s492 = scalar_lea.vmem %s2, %s491
        %p493 = pneg %p93
        %p494 = pneg %p90
        %p495 = scmp.lt.s32.totalorder %s25, 1
        %s496 = scalar_select %p495, %s25, 1
        %s497 = smul.addr %s496, 4
        %s498 = smul.addr %s497, 8
        %s499 = scalar_lea.vmem %s3, %s498
        %p500 = pneg %p119
        %p501 = pneg %p116
        %p502 = scmp.lt.s32.totalorder %s25, 1
        %s503 = scalar_select %p502, %s25, 1
        %s504 = scalar_lea.vmem %s4, %s503
        %p505 = pneg %p145
        %p506 = pneg %p142
        %p507 = scmp.lt.s32.totalorder %s25, 1
        %s508 = scalar_select %p507, %s25, 1
        %s509 = smul.addr %s508, 4
        %s510 = smul.addr %s509, 8
        %s511 = scalar_lea.vmem %s5, %s510
        %p512 = pneg %p171
        %p513 = pneg %p168
        %p514 = scmp.lt.s32.totalorder %s25, 1
        %s515 = scalar_select %p514, %s25, 1
        %s516 = scalar_lea.vmem %s6, %s515
        %p517 = pneg %p197
        %p518 = pneg %p194
        %p519 = scmp.lt.s32.totalorder %s25, 1
        %s520 = scalar_select %p519, %s25, 1
        %s521 = scalar_lea.vmem %s7, %s520
        %p522 = pneg %p223
        %p523 = pneg %p220
        %p524 = scmp.lt.s32.totalorder %s25, 1
        %s525 = scalar_select %p524, %s25, 1
        %s526 = scalar_lea.vmem %s8, %s525
        %p527 = pneg %p249
        %p528 = pneg %p246
        %p529 = scmp.lt.s32.totalorder %s25, 1
        %s530 = scalar_select %p529, %s25, 1
        %s531 = smul.addr %s530, 4
        %s532 = smul.addr %s531, 8
        %s533 = scalar_lea.vmem %s9, %s532
        %p534 = pneg %p275
        %p535 = pneg %p272
        %p536 = scmp.lt.s32.totalorder %s25, 1
        %s537 = scalar_select %p536, %s25, 1
        %s538 = scalar_lea.vmem %s10, %s537
        %p539 = pneg %p301
        %p540 = pneg %p298
        %p541 = scmp.lt.s32.totalorder %s25, 1
        %s542 = scalar_select %p541, %s25, 1
        %s543 = smul.addr %s542, 16
        %s544 = smul.addr %s543, 8
        %s545 = scalar_lea.vmem %s11, %s544
        %p546 = pneg %p327
        %p547 = pneg %p324
        %p548 = scmp.lt.s32.totalorder %s25, 1
        %s549 = scalar_select %p548, %s25, 1
        %s550 = scalar_lea.vmem %s12, %s549
        %p551 = pneg %p353
        %p552 = pneg %p350
        %p553 = pneg %p374
        %p554 = pneg %p371
        %p555 = scmp.lt.s32.totalorder %s25, 1
        %s556 = scalar_select %p555, %s25, 1
        %s557 = scalar_lea.vmem %s1, %s556
        %p558 = scmp.lt.s32.totalorder %s25, 1
        %s559 = scalar_select %p558, %s25, 1
        %s560 = scalar_lea.vmem %s2, %s559
        %p561 = scmp.lt.s32.totalorder %s25, 1
        %s562 = scalar_select %p561, %s25, 1
        %s563 = smul.addr %s562, 4
        %s564 = smul.addr %s563, 8
        %s565 = scalar_lea.vmem %s3, %s564
        %p566 = scmp.lt.s32.totalorder %s25, 1
        %s567 = scalar_select %p566, %s25, 1
        %s568 = scalar_lea.vmem %s4, %s567
        %p569 = scmp.lt.s32.totalorder %s25, 1
        %s570 = scalar_select %p569, %s25, 1
        %s571 = smul.addr %s570, 4
        %s572 = smul.addr %s571, 8
        %s573 = scalar_lea.vmem %s5, %s572
        %p574 = scmp.lt.s32.totalorder %s25, 1
        %s575 = scalar_select %p574, %s25, 1
        %s576 = scalar_lea.vmem %s6, %s575
        %p577 = scmp.lt.s32.totalorder %s25, 1
        %s578 = scalar_select %p577, %s25, 1
        %s579 = scalar_lea.vmem %s7, %s578
        %p580 = scmp.lt.s32.totalorder %s25, 1
        %s581 = scalar_select %p580, %s25, 1
        %s582 = scalar_lea.vmem %s8, %s581
        %p583 = scmp.lt.s32.totalorder %s25, 1
        %s584 = scalar_select %p583, %s25, 1
        %s585 = smul.addr %s584, 4
        %s586 = smul.addr %s585, 8
        %s587 = scalar_lea.vmem %s9, %s586
        %p588 = scmp.lt.s32.totalorder %s25, 1
        %s589 = scalar_select %p588, %s25, 1
        %s590 = scalar_lea.vmem %s10, %s589
        %p591 = scmp.lt.s32.totalorder %s25, 1
        %s592 = scalar_select %p591, %s25, 1
        %s593 = smul.addr %s592, 16
        %s594 = smul.addr %s593, 8
        %s595 = scalar_lea.vmem %s11, %s594
        %p596 = scmp.lt.s32.totalorder %s25, 1
        %s597 = scalar_select %p596, %s25, 1
        %s598 = scalar_lea.vmem %s12, %s597
        %p599 = scmp.eq.s32.totalorder %s25, 0
        // Predicated region
        $region73: #{vit_encoder.1} parent=71 // pred_check
          %p600 = pneg %p599
        $region74: #{vit_encoder.1} parent=71 // pred_check_branch
          %602 = sbr.rel (%p600) target = $region76
        $region75: #{vit_encoder.1} parent=71 // pred_region
          %v603 = vld [vmem:[%s0] sm:$0xff]
          %v604 = vld [vmem:[%s0 + $0x8] sm:$0xff]
          %v605 = vld [vmem:[%s0 + $0x10] sm:$0xff]
          %v606 = vld [vmem:[%s0 + $0x18] sm:$0xff]
          %vm607 = vcmask 261120
          %608 = vst.msk [vmem:[#allocation2] sm:$0xff] %vm607, %v603
          %609 = vst.msk [vmem:[#allocation2 + $0x8] sm:$0xff] %vm607, %v604
          %610 = vst.msk [vmem:[#allocation2 + $0x10] sm:$0xff] %vm607, %v605
          %611 = vst.msk [vmem:[#allocation2 + $0x18] sm:$0xff] %vm607, %v606
        $region76: #{vit_encoder.1} parent=71 // pred_fallthru
          _
        %v612 = vld [vmem:[#allocation2] sm:$0xff]
        %v613 = vld [vmem:[#allocation2 + $0x8] sm:$0xff]
        %v614 = vld [vmem:[#allocation2 + $0x10] sm:$0xff]
        %v615 = vld [vmem:[#allocation2 + $0x18] sm:$0xff]
        %v616 = vld [vmem:[%s557] sm:$0x1]
        %v617 = vld [vmem:[%s560] sm:$0x1]
        %vm618 = vcmask 261120
        %v619 = vsel %vm618, %v612, 0.0
        %620 = vadd.xlane.f32.xlu0 %v619
        %v621 = vpop.xlane.xlu0 %620
        %v622 = vsel %vm618, %v613, 0.0
        %623 = vadd.xlane.f32.xlu0 %v622
        %v624 = vpop.xlane.xlu0 %623
        %v625 = vsel %vm618, %v614, 0.0
        %626 = vadd.xlane.f32.xlu0 %v625
        %v627 = vpop.xlane.xlu0 %626
        %v628 = vsel %vm618, %v615, 0.0
        %629 = vadd.xlane.f32.xlu0 %v628
        %v630 = vpop.xlane.xlu0 %629
        %v631 = vrcp.pop 32.0
        %v632 = vmul.f32 %v621, %v631
        %v633 = vmul.f32 %v624, %v631
        %v634 = vmul.f32 %v627, %v631
        %v635 = vmul.f32 %v630, %v631
        %v636 = vsub.f32 %v612, %v632
        %v637 = vsub.f32 %v613, %v633
        %v638 = vsub.f32 %v614, %v634
        %v639 = vsub.f32 %v615, %v635
        %v640 = vmul.f32 %v636, %v636
        %v641 = vmul.f32 %v637, %v637
        %v642 = vmul.f32 %v638, %v638
        %v643 = vmul.f32 %v639, %v639
        %v644 = vsel %vm618, %v640, 0.0
        %645 = vadd.xlane.f32.xlu0 %v644
        %v646 = vpop.xlane.xlu0 %645
        %v647 = vsel %vm618, %v641, 0.0
        %648 = vadd.xlane.f32.xlu0 %v647
        %v649 = vpop.xlane.xlu0 %648
        %v650 = vsel %vm618, %v642, 0.0
        %651 = vadd.xlane.f32.xlu0 %v650
        %v652 = vpop.xlane.xlu0 %651
        %v653 = vsel %vm618, %v643, 0.0
        %654 = vadd.xlane.f32.xlu0 %v653
        %v655 = vpop.xlane.xlu0 %654
        %v656 = vmul.f32 %v646, %v631
        %v657 = vmul.f32 %v649, %v631
        %v658 = vmul.f32 %v652, %v631
        %v659 = vmul.f32 %v655, %v631
        %v660 = vadd.f32 %v656, 1e-05
        %v661 = vadd.f32 %v657, 1e-05
        %v662 = vadd.f32 %v658, 1e-05
        %v663 = vadd.f32 %v659, 1e-05
        %v664 = vrsqrt.pop %v660
        %v665 = vrsqrt.pop %v661
        %v666 = vrsqrt.pop %v662
        %v667 = vrsqrt.pop %v663
        %v668 = vmul.f32 %v636, %v664
        %v669 = vmul.f32 %v637, %v665
        %v670 = vmul.f32 %v638, %v666
        %v671 = vmul.f32 %v639, %v667
        %v673 = vlaneseq
        %v674 = vshrl.u32 %v673, 7
        %v675 = vsub.s32 0, %v674
        %v676 = vrot.slane %v616, %v675
        %v678 = vmul.f32 %v668, %v676
        %v679 = vmul.f32 %v669, %v676
        %v680 = vmul.f32 %v670, %v676
        %v681 = vmul.f32 %v671, %v676
        %v683 = vlaneseq
        %v684 = vshrl.u32 %v683, 7
        %v685 = vsub.s32 0, %v684
        %v686 = vrot.slane %v617, %v685
        %v688 = vadd.f32 %v678, %v686
        %v689 = vadd.f32 %v679, %v686
        %v690 = vadd.f32 %v680, %v686
        %v691 = vadd.f32 %v681, %v686
        %v692 = vld [vmem:[%s565] sm:$0xff]
        %v693 = vld [vmem:[%s565 + $0x8] sm:$0xff]
        %v694 = vld [vmem:[%s565 + $0x10] sm:$0xff]
        %v695 = vld [vmem:[%s565 + $0x18] sm:$0xff]
        %v696 = vld [vmem:[%s568] sm:$0x1]
        %v698 = vlaneseq
        %v699 = vshrl.u32 %v698, 7
        %v700 = vsub.s32 0, %v699
        %v701 = vrot.slane %v696, %v700
        %v704 = vsel %vm618, %v688, 0
        %v707 = vsel %vm618, %v689, 0
        %v710 = vsel %vm618, %v690, 0
        %v713 = vsel %vm618, %v691, 0
        %715 = vmatprep.subr.mxu0 0.0
        %716 = vmatpush1.msra.mxu0 %v692
        %717 = vmatprep.subr.mxu0 0.0
        %718 = vmatpush1.msra.mxu0 %v693
        %719 = vmatprep.subr.mxu0 0.0
        %720 = vmatpush1.msra.mxu0 %v694
        %721 = vmatprep.subr.mxu0 0.0
        %722 = vmatpush1.msra.mxu0 %v695
        %723 = vmatprep.subr.mxu0 0.0
        %724 = vmatpush1.msra.mxu0 0.0
        %725 = vmatprep.subr.mxu0 0.0
        %726 = vmatpush1.msra.mxu0 0.0
        %727 = vmatprep.subr.mxu0 0.0
        %728 = vmatpush1.msra.mxu0 0.0
        %729 = vmatprep.subr.mxu0 0.0
        %730 = vmatpush1.msra.mxu0 0.0
        %731 = vmatprep.subr.mxu0 0.0
        %732 = vmatpush1.msra.mxu0 0.0
        %733 = vmatprep.subr.mxu0 0.0
        %734 = vmatpush1.msra.mxu0 0.0
        %735 = vmatprep.subr.mxu0 0.0
        %736 = vmatpush1.msra.mxu0 0.0
        %737 = vmatprep.subr.mxu0 0.0
        %738 = vmatpush1.msra.mxu0 0.0
        %739 = vmatprep.subr.mxu0 0.0
        %740 = vmatpush1.msra.mxu0 0.0
        %741 = vmatprep.subr.mxu0 0.0
        %742 = vmatpush1.msra.mxu0 0.0
        %743 = vmatprep.subr.mxu0 0.0
        %744 = vmatpush1.msra.mxu0 0.0
        %745 = vmatprep.subr.mxu0 0.0
        %746 = vmatpush1.msra.mxu0 0.0
        %747 = vmatprep.subr.mxu0 0.0
        %748 = vmatpush1.msra.mxu0 0.0
        %749 = vmatprep.subr.mxu0 0.0
        %750 = vmatpush1.msra.mxu0 0.0
        %751 = vmatprep.subr.mxu0 0.0
        %752 = vmatpush1.msra.mxu0 0.0
        %753 = vmatprep.subr.mxu0 0.0
        %754 = vmatpush1.msra.mxu0 0.0
        %755 = vmatprep.subr.mxu0 0.0
        %756 = vmatpush1.msra.mxu0 0.0
        %757 = vmatprep.subr.mxu0 0.0
        %758 = vmatpush1.msra.mxu0 0.0
        %759 = vmatprep.subr.mxu0 0.0
        %760 = vmatpush1.msra.mxu0 0.0
        %761 = vmatprep.subr.mxu0 0.0
        %762 = vmatpush1.msra.mxu0 0.0
        %763 = vmatprep.subr.mxu0 0.0
        %764 = vmatpush1.msra.mxu0 0.0
        %765 = vmatprep.subr.mxu0 0.0
        %766 = vmatpush1.msra.mxu0 0.0
        %767 = vmatprep.subr.mxu0 0.0
        %768 = vmatpush1.msra.mxu0 0.0
        %769 = vmatprep.subr.mxu0 0.0
        %770 = vmatpush1.msra.mxu0 0.0
        %771 = vmatprep.subr.mxu0 0.0
        %772 = vmatpush1.msra.mxu0 0.0
        %773 = vmatprep.subr.mxu0 0.0
        %774 = vmatpush1.msra.mxu0 0.0
        %775 = vmatprep.subr.mxu0 0.0
        %776 = vmatpush1.msra.mxu0 0.0
        %777 = vmatprep.subr.mxu0 0.0
        %778 = vmatpush1.msra.mxu0 0.0
        %779 = vmatprep.mubr.f32.mxu0 0.0
        %780 = vmatmul.mubr.f32.gmra.mrb[0].mxu0 %v704
        %v781 = vpop.f32.mrb[0].mxu0
        %v782 = vadd.f32 %v701, %v781
        %v783 = vpop.f32.mrb[0].mxu0
        %784 = vmatprep.mubr.f32.mxu0 0.0
        %785 = vmatmul.mubr.f32.gmra.mrb[0].mxu0 %v707
        %v786 = vpop.f32.mrb[0].mxu0
        %v787 = vadd.f32 %v701, %v786
        %v788 = vpop.f32.mrb[0].mxu0
        %789 = vmatprep.mubr.f32.mxu0 0.0
        %790 = vmatmul.mubr.f32.gmra.mrb[0].mxu0 %v710
        %v791 = vpop.f32.mrb[0].mxu0
        %v792 = vadd.f32 %v701, %v791
        %v793 = vpop.f32.mrb[0].mxu0
        %794 = vmatprep.mubr.f32.mxu0 0.0
        %795 = vmatmul.mubr.f32.gmra.mrb[0].mxu0 %v713
        %v796 = vpop.f32.mrb[0].mxu0
        %v797 = vadd.f32 %v701, %v796
        %v798 = vpop.f32.mrb[0].mxu0
        %799 = vdwg.mxu0
        %802 = vrot.lane.b32.xlu0 %v782, 96
        %v803 = vpop.permute.xlu0 %802
        %804 = vrot.lane.b32.xlu0 %v787, 96
        %v805 = vpop.permute.xlu0 %804
        %vm806 = vcmask 64512
        %v807 = vsel %vm806, %v782, 0
        %v809 = vsel %vm806, %v787, 0
        %v811 = vsel %vm806, %v803, 0
        %v813 = vsel %vm806, %v805, 0
        %815 = vmatprep.subr.mxu0 0.0
        %816 = vmatpush1.xpose.msra.mxu0 %v811
        %817 = vmatprep.subr.mxu0 0.0
        %818 = vmatpush1.xpose.msra.mxu0 %v813
        %819 = vmatprep.subr.mxu0 0.0
        %820 = vmatpush1.xpose.msra.mxu0 0.0
        %821 = vmatprep.subr.mxu0 0.0
        %822 = vmatpush1.xpose.msra.mxu0 0.0
        %823 = vmatprep.subr.mxu0 0.0
        %824 = vmatpush1.xpose.msra.mxu0 0.0
        %825 = vmatprep.subr.mxu0 0.0
        %826 = vmatpush1.xpose.msra.mxu0 0.0
        %827 = vmatprep.subr.mxu0 0.0
        %828 = vmatpush1.xpose.msra.mxu0 0.0
        %829 = vmatprep.subr.mxu0 0.0
        %830 = vmatpush1.xpose.msra.mxu0 0.0
        %831 = vmatprep.subr.mxu0 0.0
        %832 = vmatpush1.xpose.msra.mxu0 0.0
        %833 = vmatprep.subr.mxu0 0.0
        %834 = vmatpush1.xpose.msra.mxu0 0.0
        %835 = vmatprep.subr.mxu0 0.0
        %836 = vmatpush1.xpose.msra.mxu0 0.0
        %837 = vmatprep.subr.mxu0 0.0
        %838 = vmatpush1.xpose.msra.mxu0 0.0
        %839 = vmatprep.subr.mxu0 0.0
        %840 = vmatpush1.xpose.msra.mxu0 0.0
        %841 = vmatprep.subr.mxu0 0.0
        %842 = vmatpush1.xpose.msra.mxu0 0.0
        %843 = vmatprep.subr.mxu0 0.0
        %844 = vmatpush1.xpose.msra.mxu0 0.0
        %845 = vmatprep.subr.mxu0 0.0
        %846 = vmatpush1.xpose.msra.mxu0 0.0
        %847 = vmatprep.subr.mxu0 0.0
        %848 = vmatpush1.xpose.msra.mxu0 0.0
        %849 = vmatprep.subr.mxu0 0.0
        %850 = vmatpush1.xpose.msra.mxu0 0.0
        %851 = vmatprep.subr.mxu0 0.0
        %852 = vmatpush1.xpose.msra.mxu0 0.0
        %853 = vmatprep.subr.mxu0 0.0
        %854 = vmatpush1.xpose.msra.mxu0 0.0
        %855 = vmatprep.subr.mxu0 0.0
        %856 = vmatpush1.xpose.msra.mxu0 0.0
        %857 = vmatprep.subr.mxu0 0.0
        %858 = vmatpush1.xpose.msra.mxu0 0.0
        %859 = vmatprep.subr.mxu0 0.0
        %860 = vmatpush1.xpose.msra.mxu0 0.0
        %861 = vmatprep.subr.mxu0 0.0
        %862 = vmatpush1.xpose.msra.mxu0 0.0
        %863 = vmatprep.subr.mxu0 0.0
        %864 = vmatpush1.xpose.msra.mxu0 0.0
        %865 = vmatprep.subr.mxu0 0.0
        %866 = vmatpush1.xpose.msra.mxu0 0.0
        %867 = vmatprep.subr.mxu0 0.0
        %868 = vmatpush1.xpose.msra.mxu0 0.0
        %869 = vmatprep.subr.mxu0 0.0
        %870 = vmatpush1.xpose.msra.mxu0 0.0
        %871 = vmatprep.subr.mxu0 0.0
        %872 = vmatpush1.xpose.msra.mxu0 0.0
        %873 = vmatprep.subr.mxu0 0.0
        %874 = vmatpush1.xpose.msra.mxu0 0.0
        %875 = vmatprep.subr.mxu0 0.0
        %876 = vmatpush1.xpose.msra.mxu0 0.0
        %877 = vmatprep.subr.mxu0 0.0
        %878 = vmatpush1.xpose.msra.mxu0 0.0
        %879 = vmatprep.mubr.f32.mxu0 0.0
        %880 = vmatmul.mubr.f32.gmra.mrb[0].mxu0 %v807
        %v881 = vpop.f32.mrb[0].mxu0
        %v882 = vadd.f32 0.0, %v881
        %v883 = vpop.f32.mrb[0].mxu0
        %884 = vmatprep.mubr.f32.mxu0 0.0
        %885 = vmatmul.mubr.f32.gmra.mrb[0].mxu0 %v809
        %v886 = vpop.f32.mrb[0].mxu0
        %v887 = vadd.f32 0.0, %v886
        %v888 = vpop.f32.mrb[0].mxu0
        %889 = vdwg.mxu0
        %vm890 = vcmask 130048
        %v891 = vsel %vm890, %v882, -inf
        %892 = vmax.xlane.f32.xlu0 %v891
        %v893 = vpop.xlane.xlu0 %892
        %v894 = vsel %vm890, %v887, -inf
        %895 = vmax.xlane.f32.xlu0 %v894
        %v896 = vpop.xlane.xlu0 %895
        %v897 = vsub.f32 %v882, %v893
        %v898 = vsub.f32 %v887, %v896
        %v899 = vmul.f32 %v897, 1.442695
        %v900 = vpow.pop %v899
        %v901 = vmul.f32 %v898, 1.442695
        %v902 = vpow.pop %v901
        %v903 = vsel %vm890, %v900, 0.0
        %904 = vadd.xlane.f32.xlu0 %v903
        %v905 = vpop.xlane.xlu0 %904
        %v906 = vsel %vm890, %v902, 0.0
        %907 = vadd.xlane.f32.xlu0 %v906
        %v908 = vpop.xlane.xlu0 %907
        %v909 = vrcp.pop %v905
        %v910 = vrcp.pop %v908
        %v911 = vmul.f32 %v900, %v909
        %v912 = vmul.f32 %v902, %v910
        %913 = vrot.lane.b32.xlu0 %v782, 64
        %v914 = vpop.permute.xlu0 %913
        %915 = vrot.lane.b32.xlu0 %v787, 64
        %v916 = vpop.permute.xlu0 %915
        %v920 = vsel %vm890, %v911, 0
        %v923 = vsel %vm890, %v912, 0
        %925 = vmatprep.subr.mxu0 0.0
        %926 = vmatpush1.msra.mxu0 %v914
        %927 = vmatprep.subr.mxu0 0.0
        %928 = vmatpush1.msra.mxu0 %v916
        %929 = vmatprep.subr.mxu0 0.0
        %930 = vmatpush1.msra.mxu0 0.0
        %931 = vmatprep.subr.mxu0 0.0
        %932 = vmatpush1.msra.mxu0 0.0
        %933 = vmatprep.subr.mxu0 0.0
        %934 = vmatpush1.msra.mxu0 0.0
        %935 = vmatprep.subr.mxu0 0.0
        %936 = vmatpush1.msra.mxu0 0.0
        %937 = vmatprep.subr.mxu0 0.0
        %938 = vmatpush1.msra.mxu0 0.0
        %939 = vmatprep.subr.mxu0 0.0
        %940 = vmatpush1.msra.mxu0 0.0
        %941 = vmatprep.subr.mxu0 0.0
        %942 = vmatpush1.msra.mxu0 0.0
        %943 = vmatprep.subr.mxu0 0.0
        %944 = vmatpush1.msra.mxu0 0.0
        %945 = vmatprep.subr.mxu0 0.0
        %946 = vmatpush1.msra.mxu0 0.0
        %947 = vmatprep.subr.mxu0 0.0
        %948 = vmatpush1.msra.mxu0 0.0
        %949 = vmatprep.subr.mxu0 0.0
        %950 = vmatpush1.msra.mxu0 0.0
        %951 = vmatprep.subr.mxu0 0.0
        %952 = vmatpush1.msra.mxu0 0.0
        %953 = vmatprep.subr.mxu0 0.0
        %954 = vmatpush1.msra.mxu0 0.0
        %955 = vmatprep.subr.mxu0 0.0
        %956 = vmatpush1.msra.mxu0 0.0
        %957 = vmatprep.subr.mxu0 0.0
        %958 = vmatpush1.msra.mxu0 0.0
        %959 = vmatprep.subr.mxu0 0.0
        %960 = vmatpush1.msra.mxu0 0.0
        %961 = vmatprep.subr.mxu0 0.0
        %962 = vmatpush1.msra.mxu0 0.0
        %963 = vmatprep.subr.mxu0 0.0
        %964 = vmatpush1.msra.mxu0 0.0
        %965 = vmatprep.subr.mxu0 0.0
        %966 = vmatpush1.msra.mxu0 0.0
        %967 = vmatprep.subr.mxu0 0.0
        %968 = vmatpush1.msra.mxu0 0.0
        %969 = vmatprep.subr.mxu0 0.0
        %970 = vmatpush1.msra.mxu0 0.0
        %971 = vmatprep.subr.mxu0 0.0
        %972 = vmatpush1.msra.mxu0 0.0
        %973 = vmatprep.subr.mxu0 0.0
        %974 = vmatpush1.msra.mxu0 0.0
        %975 = vmatprep.subr.mxu0 0.0
        %976 = vmatpush1.msra.mxu0 0.0
        %977 = vmatprep.subr.mxu0 0.0
        %978 = vmatpush1.msra.mxu0 0.0
        %979 = vmatprep.subr.mxu0 0.0
        %980 = vmatpush1.msra.mxu0 0.0
        %981 = vmatprep.subr.mxu0 0.0
        %982 = vmatpush1.msra.mxu0 0.0
        %983 = vmatprep.subr.mxu0 0.0
        %984 = vmatpush1.msra.mxu0 0.0
        %985 = vmatprep.subr.mxu0 0.0
        %986 = vmatpush1.msra.mxu0 0.0
        %987 = vmatprep.subr.mxu0 0.0
        %988 = vmatpush1.msra.mxu0 0.0
        %989 = vmatprep.mubr.f32.mxu0 0.0
        %990 = vmatmul.mubr.f32.gmra.mrb[0].mxu0 %v920
        %v991 = vpop.f32.mrb[0].mxu0
        %v992 = vadd.f32 0.0, %v991
        %v993 = vpop.f32.mrb[0].mxu0
        %994 = vmatprep.mubr.f32.mxu0 0.0
        %995 = vmatmul.mubr.f32.gmra.mrb[0].mxu0 %v923
        %v996 = vpop.f32.mrb[0].mxu0
        %v997 = vadd.f32 0.0, %v996
        %v998 = vpop.f32.mrb[0].mxu0
        %999 = vdwg.mxu0
        %1000 = vrot.lane.b32.xlu0 %v782, 120
        %v1001 = vpop.permute.xlu0 %1000
        %1002 = vrot.lane.b32.xlu0 %v787, 120
        %v1003 = vpop.permute.xlu0 %1002
        %1004 = vrot.lane.b32.xlu0 %v782, 88
        %v1005 = vpop.permute.xlu0 %1004
        %1006 = vrot.lane.b32.xlu0 %v787, 88
        %v1007 = vpop.permute.xlu0 %1006
        %v1008 = vsel %vm806, %v1001, 0
        %v1010 = vsel %vm806, %v1003, 0
        %v1012 = vsel %vm806, %v1005, 0
        %v1014 = vsel %vm806, %v1007, 0
        %1016 = vmatprep.subr.mxu0 0.0
        %1017 = vmatpush1.xpose.msra.mxu0 %v1012
        %1018 = vmatprep.subr.mxu0 0.0
        %1019 = vmatpush1.xpose.msra.mxu0 %v1014
        %1020 = vmatprep.subr.mxu0 0.0
        %1021 = vmatpush1.xpose.msra.mxu0 0.0
        %1022 = vmatprep.subr.mxu0 0.0
        %1023 = vmatpush1.xpose.msra.mxu0 0.0
        %1024 = vmatprep.subr.mxu0 0.0
        %1025 = vmatpush1.xpose.msra.mxu0 0.0
        %1026 = vmatprep.subr.mxu0 0.0
        %1027 = vmatpush1.xpose.msra.mxu0 0.0
        %1028 = vmatprep.subr.mxu0 0.0
        %1029 = vmatpush1.xpose.msra.mxu0 0.0
        %1030 = vmatprep.subr.mxu0 0.0
        %1031 = vmatpush1.xpose.msra.mxu0 0.0
        %1032 = vmatprep.subr.mxu0 0.0
        %1033 = vmatpush1.xpose.msra.mxu0 0.0
        %1034 = vmatprep.subr.mxu0 0.0
        %1035 = vmatpush1.xpose.msra.mxu0 0.0
        %1036 = vmatprep.subr.mxu0 0.0
        %1037 = vmatpush1.xpose.msra.mxu0 0.0
        %1038 = vmatprep.subr.mxu0 0.0
        %1039 = vmatpush1.xpose.msra.mxu0 0.0
        %1040 = vmatprep.subr.mxu0 0.0
        %1041 = vmatpush1.xpose.msra.mxu0 0.0
        %1042 = vmatprep.subr.mxu0 0.0
        %1043 = vmatpush1.xpose.msra.mxu0 0.0
        %1044 = vmatprep.subr.mxu0 0.0
        %1045 = vmatpush1.xpose.msra.mxu0 0.0
        %1046 = vmatprep.subr.mxu0 0.0
        %1047 = vmatpush1.xpose.msra.mxu0 0.0
        %1048 = vmatprep.subr.mxu0 0.0
        %1049 = vmatpush1.xpose.msra.mxu0 0.0
        %1050 = vmatprep.subr.mxu0 0.0
        %1051 = vmatpush1.xpose.msra.mxu0 0.0
        %1052 = vmatprep.subr.mxu0 0.0
        %1053 = vmatpush1.xpose.msra.mxu0 0.0
        %1054 = vmatprep.subr.mxu0 0.0
        %1055 = vmatpush1.xpose.msra.mxu0 0.0
        %1056 = vmatprep.subr.mxu0 0.0
        %1057 = vmatpush1.xpose.msra.mxu0 0.0
        %1058 = vmatprep.subr.mxu0 0.0
        %1059 = vmatpush1.xpose.msra.mxu0 0.0
        %1060 = vmatprep.subr.mxu0 0.0
        %1061 = vmatpush1.xpose.msra.mxu0 0.0
        %1062 = vmatprep.subr.mxu0 0.0
        %1063 = vmatpush1.xpose.msra.mxu0 0.0
        %1064 = vmatprep.subr.mxu0 0.0
        %1065 = vmatpush1.xpose.msra.mxu0 0.0
        %1066 = vmatprep.subr.mxu0 0.0
        %1067 = vmatpush1.xpose.msra.mxu0 0.0
        %1068 = vmatprep.subr.mxu0 0.0
        %1069 = vmatpush1.xpose.msra.mxu0 0.0
        %1070 = vmatprep.subr.mxu0 0.0
        %1071 = vmatpush1.xpose.msra.mxu0 0.0
        %1072 = vmatprep.subr.mxu0 0.0
        %1073 = vmatpush1.xpose.msra.mxu0 0.0
        %1074 = vmatprep.subr.mxu0 0.0
        %1075 = vmatpush1.xpose.msra.mxu0 0.0
        %1076 = vmatprep.subr.mxu0 0.0
        %1077 = vmatpush1.xpose.msra.mxu0 0.0
        %1078 = vmatprep.subr.mxu0 0.0
        %1079 = vmatpush1.xpose.msra.mxu0 0.0
        %1080 = vmatprep.mubr.f32.mxu0 0.0
        %1081 = vmatmul.mubr.f32.gmra.mrb[0].mxu0 %v1008
        %v1082 = vpop.f32.mrb[0].mxu0
        %v1083 = vadd.f32 0.0, %v1082
        %v1084 = vpop.f32.mrb[0].mxu0
        %1085 = vmatprep.mubr.f32.mxu0 0.0
        %1086 = vmatmul.mubr.f32.gmra.mrb[0].mxu0 %v1010
        %v1087 = vpop.f32.mrb[0].mxu0
        %v1088 = vadd.f32 0.0, %v1087
        %v1089 = vpop.f32.mrb[0].mxu0
        %1090 = vdwg.mxu0
        %v1091 = vsel %vm890, %v1083, -inf
        %1092 = vmax.xlane.f32.xlu0 %v1091
        %v1093 = vpop.xlane.xlu0 %1092
        %v1094 = vsel %vm890, %v1088, -inf
        %1095 = vmax.xlane.f32.xlu0 %v1094
        %v1096 = vpop.xlane.xlu0 %1095
        %v1097 = vsub.f32 %v1083, %v1093
        %v1098 = vsub.f32 %v1088, %v1096
        %v1099 = vmul.f32 %v1097, 1.442695
        %v1100 = vpow.pop %v1099
        %v1101 = vmul.f32 %v1098, 1.442695
        %v1102 = vpow.pop %v1101
        %v1103 = vsel %vm890, %v1100, 0.0
        %1104 = vadd.xlane.f32.xlu0 %v1103
        %v1105 = vpop.xlane.xlu0 %1104
        %v1106 = vsel %vm890, %v1102, 0.0
        %1107 = vadd.xlane.f32.xlu0 %v1106
        %v1108 = vpop.xlane.xlu0 %1107
        %v1109 = vrcp.pop %v1105
        %v1110 = vrcp.pop %v1108
        %v1111 = vmul.f32 %v1100, %v1109
        %v1112 = vmul.f32 %v1102, %v1110
        %1113 = vrot.lane.b32.xlu0 %v782, 56
        %v1114 = vpop.permute.xlu0 %1113
        %1115 = vrot.lane.b32.xlu0 %v787, 56
        %v1116 = vpop.permute.xlu0 %1115
        %v1120 = vsel %vm890, %v1111, 0
        %v1123 = vsel %vm890, %v1112, 0
        %1125 = vmatprep.subr.mxu0 0.0
        %1126 = vmatpush1.msra.mxu0 %v1114
        %1127 = vmatprep.subr.mxu0 0.0
        %1128 = vmatpush1.msra.mxu0 %v1116
        %1129 = vmatprep.subr.mxu0 0.0
        %1130 = vmatpush1.msra.mxu0 0.0
        %1131 = vmatprep.subr.mxu0 0.0
        %1132 = vmatpush1.msra.mxu0 0.0
        %1133 = vmatprep.subr.mxu0 0.0
        %1134 = vmatpush1.msra.mxu0 0.0
        %1135 = vmatprep.subr.mxu0 0.0
        %1136 = vmatpush1.msra.mxu0 0.0
        %1137 = vmatprep.subr.mxu0 0.0
        %1138 = vmatpush1.msra.mxu0 0.0
        %1139 = vmatprep.subr.mxu0 0.0
        %1140 = vmatpush1.msra.mxu0 0.0
        %1141 = vmatprep.subr.mxu0 0.0
        %1142 = vmatpush1.msra.mxu0 0.0
        %1143 = vmatprep.subr.mxu0 0.0
        %1144 = vmatpush1.msra.mxu0 0.0
        %1145 = vmatprep.subr.mxu0 0.0
        %1146 = vmatpush1.msra.mxu0 0.0
        %1147 = vmatprep.subr.mxu0 0.0
        %1148 = vmatpush1.msra.mxu0 0.0
        %1149 = vmatprep.subr.mxu0 0.0
        %1150 = vmatpush1.msra.mxu0 0.0
        %1151 = vmatprep.subr.mxu0 0.0
        %1152 = vmatpush1.msra.mxu0 0.0
        %1153 = vmatprep.subr.mxu0 0.0
        %1154 = vmatpush1.msra.mxu0 0.0
        %1155 = vmatprep.subr.mxu0 0.0
        %1156 = vmatpush1.msra.mxu0 0.0
        %1157 = vmatprep.subr.mxu0 0.0
        %1158 = vmatpush1.msra.mxu0 0.0
        %1159 = vmatprep.subr.mxu0 0.0
        %1160 = vmatpush1.msra.mxu0 0.0
        %1161 = vmatprep.subr.mxu0 0.0
        %1162 = vmatpush1.msra.mxu0 0.0
        %1163 = vmatprep.subr.mxu0 0.0
        %1164 = vmatpush1.msra.mxu0 0.0
        %1165 = vmatprep.subr.mxu0 0.0
        %1166 = vmatpush1.msra.mxu0 0.0
        %1167 = vmatprep.subr.mxu0 0.0
        %1168 = vmatpush1.msra.mxu0 0.0
        %1169 = vmatprep.subr.mxu0 0.0
        %1170 = vmatpush1.msra.mxu0 0.0
        %1171 = vmatprep.subr.mxu0 0.0
        %1172 = vmatpush1.msra.mxu0 0.0
        %1173 = vmatprep.subr.mxu0 0.0
        %1174 = vmatpush1.msra.mxu0 0.0
        %1175 = vmatprep.subr.mxu0 0.0
        %1176 = vmatpush1.msra.mxu0 0.0
        %1177 = vmatprep.subr.mxu0 0.0
        %1178 = vmatpush1.msra.mxu0 0.0
        %1179 = vmatprep.subr.mxu0 0.0
        %1180 = vmatpush1.msra.mxu0 0.0
        %1181 = vmatprep.subr.mxu0 0.0
        %1182 = vmatpush1.msra.mxu0 0.0
        %1183 = vmatprep.subr.mxu0 0.0
        %1184 = vmatpush1.msra.mxu0 0.0
        %1185 = vmatprep.subr.mxu0 0.0
        %1186 = vmatpush1.msra.mxu0 0.0
        %1187 = vmatprep.subr.mxu0 0.0
        %1188 = vmatpush1.msra.mxu0 0.0
        %1189 = vmatprep.mubr.f32.mxu0 0.0
        %1190 = vmatmul.mubr.f32.gmra.mrb[0].mxu0 %v1120
        %v1191 = vpop.f32.mrb[0].mxu0
        %v1192 = vadd.f32 0.0, %v1191
        %v1193 = vpop.f32.mrb[0].mxu0
        %1194 = vmatprep.mubr.f32.mxu0 0.0
        %1195 = vmatmul.mubr.f32.gmra.mrb[0].mxu0 %v1123
        %v1196 = vpop.f32.mrb[0].mxu0
        %v1197 = vadd.f32 0.0, %v1196
        %v1198 = vpop.f32.mrb[0].mxu0
        %1199 = vdwg.mxu0
        %1200 = vrot.lane.b32.xlu0 %v782, 112
        %v1201 = vpop.permute.xlu0 %1200
        %1202 = vrot.lane.b32.xlu0 %v787, 112
        %v1203 = vpop.permute.xlu0 %1202
        %1204 = vrot.lane.b32.xlu0 %v782, 80
        %v1205 = vpop.permute.xlu0 %1204
        %1206 = vrot.lane.b32.xlu0 %v787, 80
        %v1207 = vpop.permute.xlu0 %1206
        %v1208 = vsel %vm806, %v1201, 0
        %v1210 = vsel %vm806, %v1203, 0
        %v1212 = vsel %vm806, %v1205, 0
        %v1214 = vsel %vm806, %v1207, 0
        %1216 = vmatprep.subr.mxu0 0.0
        %1217 = vmatpush1.xpose.msra.mxu0 %v1212
        %1218 = vmatprep.subr.mxu0 0.0
        %1219 = vmatpush1.xpose.msra.mxu0 %v1214
        %1220 = vmatprep.subr.mxu0 0.0
        %1221 = vmatpush1.xpose.msra.mxu0 0.0
        %1222 = vmatprep.subr.mxu0 0.0
        %1223 = vmatpush1.xpose.msra.mxu0 0.0
        %1224 = vmatprep.subr.mxu0 0.0
        %1225 = vmatpush1.xpose.msra.mxu0 0.0
        %1226 = vmatprep.subr.mxu0 0.0
        %1227 = vmatpush1.xpose.msra.mxu0 0.0
        %1228 = vmatprep.subr.mxu0 0.0
        %1229 = vmatpush1.xpose.msra.mxu0 0.0
        %1230 = vmatprep.subr.mxu0 0.0
        %1231 = vmatpush1.xpose.msra.mxu0 0.0
        %1232 = vmatprep.subr.mxu0 0.0
        %1233 = vmatpush1.xpose.msra.mxu0 0.0
        %1234 = vmatprep.subr.mxu0 0.0
        %1235 = vmatpush1.xpose.msra.mxu0 0.0
        %1236 = vmatprep.subr.mxu0 0.0
        %1237 = vmatpush1.xpose.msra.mxu0 0.0
        %1238 = vmatprep.subr.mxu0 0.0
        %1239 = vmatpush1.xpose.msra.mxu0 0.0
        %1240 = vmatprep.subr.mxu0 0.0
        %1241 = vmatpush1.xpose.msra.mxu0 0.0
        %1242 = vmatprep.subr.mxu0 0.0
        %1243 = vmatpush1.xpose.msra.mxu0 0.0
        %1244 = vmatprep.subr.mxu0 0.0
        %1245 = vmatpush1.xpose.msra.mxu0 0.0
        %1246 = vmatprep.subr.mxu0 0.0
        %1247 = vmatpush1.xpose.msra.mxu0 0.0
        %1248 = vmatprep.subr.mxu0 0.0
        %1249 = vmatpush1.xpose.msra.mxu0 0.0
        %1250 = vmatprep.subr.mxu0 0.0
        %1251 = vmatpush1.xpose.msra.mxu0 0.0
        %1252 = vmatprep.subr.mxu0 0.0
        %1253 = vmatpush1.xpose.msra.mxu0 0.0
        %1254 = vmatprep.subr.mxu0 0.0
        %1255 = vmatpush1.xpose.msra.mxu0 0.0
        %1256 = vmatprep.subr.mxu0 0.0
        %1257 = vmatpush1.xpose.msra.mxu0 0.0
        %1258 = vmatprep.subr.mxu0 0.0
        %1259 = vmatpush1.xpose.msra.mxu0 0.0
        %1260 = vmatprep.subr.mxu0 0.0
        %1261 = vmatpush1.xpose.msra.mxu0 0.0
        %1262 = vmatprep.subr.mxu0 0.0
        %1263 = vmatpush1.xpose.msra.mxu0 0.0
        %1264 = vmatprep.subr.mxu0 0.0
        %1265 = vmatpush1.xpose.msra.mxu0 0.0
        %1266 = vmatprep.subr.mxu0 0.0
        %1267 = vmatpush1.xpose.msra.mxu0 0.0
        %1268 = vmatprep.subr.mxu0 0.0
        %1269 = vmatpush1.xpose.msra.mxu0 0.0
        %1270 = vmatprep.subr.mxu0 0.0
        %1271 = vmatpush1.xpose.msra.mxu0 0.0
        %1272 = vmatprep.subr.mxu0 0.0
        %1273 = vmatpush1.xpose.msra.mxu0 0.0
        %1274 = vmatprep.subr.mxu0 0.0
        %1275 = vmatpush1.xpose.msra.mxu0 0.0
        %1276 = vmatprep.subr.mxu0 0.0
        %1277 = vmatpush1.xpose.msra.mxu0 0.0
        %1278 = vmatprep.subr.mxu0 0.0
        %1279 = vmatpush1.xpose.msra.mxu0 0.0
        %1280 = vmatprep.mubr.f32.mxu0 0.0
        %1281 = vmatmul.mubr.f32.gmra.mrb[0].mxu0 %v1208
        %v1282 = vpop.f32.mrb[0].mxu0
        %v1283 = vadd.f32 0.0, %v1282
        %v1284 = vpop.f32.mrb[0].mxu0
        %1285 = vmatprep.mubr.f32.mxu0 0.0
        %1286 = vmatmul.mubr.f32.gmra.mrb[0].mxu0 %v1210
        %v1287 = vpop.f32.mrb[0].mxu0
        %v1288 = vadd.f32 0.0, %v1287
        %v1289 = vpop.f32.mrb[0].mxu0
        %1290 = vdwg.mxu0
        %v1291 = vsel %vm890, %v1283, -inf
        %1292 = vmax.xlane.f32.xlu0 %v1291
        %v1293 = vpop.xlane.xlu0 %1292
        %v1294 = vsel %vm890, %v1288, -inf
        %1295 = vmax.xlane.f32.xlu0 %v1294
        %v1296 = vpop.xlane.xlu0 %1295
        %v1297 = vsub.f32 %v1283, %v1293
        %v1298 = vsub.f32 %v1288, %v1296
        %v1299 = vmul.f32 %v1297, 1.442695
        %v1300 = vpow.pop %v1299
        %v1301 = vmul.f32 %v1298, 1.442695
        %v1302 = vpow.pop %v1301
        %v1303 = vsel %vm890, %v1300, 0.0
        %1304 = vadd.xlane.f32.xlu0 %v1303
        %v1305 = vpop.xlane.xlu0 %1304
        %v1306 = vsel %vm890, %v1302, 0.0
        %1307 = vadd.xlane.f32.xlu0 %v1306
        %v1308 = vpop.xlane.xlu0 %1307
        %v1309 = vrcp.pop %v1305
        %v1310 = vrcp.pop %v1308
        %v1311 = vmul.f32 %v1300, %v1309
        %v1312 = vmul.f32 %v1302, %v1310
        %1313 = vrot.lane.b32.xlu0 %v782, 48
        %v1314 = vpop.permute.xlu0 %1313
        %1315 = vrot.lane.b32.xlu0 %v787, 48
        %v1316 = vpop.permute.xlu0 %1315
        %v1320 = vsel %vm890, %v1311, 0
        %v1323 = vsel %vm890, %v1312, 0
        %1325 = vmatprep.subr.mxu0 0.0
        %1326 = vmatpush1.msra.mxu0 %v1314
        %1327 = vmatprep.subr.mxu0 0.0
        %1328 = vmatpush1.msra.mxu0 %v1316
        %1329 = vmatprep.subr.mxu0 0.0
        %1330 = vmatpush1.msra.mxu0 0.0
        %1331 = vmatprep.subr.mxu0 0.0
        %1332 = vmatpush1.msra.mxu0 0.0
        %1333 = vmatprep.subr.mxu0 0.0
        %1334 = vmatpush1.msra.mxu0 0.0
        %1335 = vmatprep.subr.mxu0 0.0
        %1336 = vmatpush1.msra.mxu0 0.0
        %1337 = vmatprep.subr.mxu0 0.0
        %1338 = vmatpush1.msra.mxu0 0.0
        %1339 = vmatprep.subr.mxu0 0.0
        %1340 = vmatpush1.msra.mxu0 0.0
        %1341 = vmatprep.subr.mxu0 0.0
        %1342 = vmatpush1.msra.mxu0 0.0
        %1343 = vmatprep.subr.mxu0 0.0
        %1344 = vmatpush1.msra.mxu0 0.0
        %1345 = vmatprep.subr.mxu0 0.0
        %1346 = vmatpush1.msra.mxu0 0.0
        %1347 = vmatprep.subr.mxu0 0.0
        %1348 = vmatpush1.msra.mxu0 0.0
        %1349 = vmatprep.subr.mxu0 0.0
        %1350 = vmatpush1.msra.mxu0 0.0
        %1351 = vmatprep.subr.mxu0 0.0
        %1352 = vmatpush1.msra.mxu0 0.0
        %1353 = vmatprep.subr.mxu0 0.0
        %1354 = vmatpush1.msra.mxu0 0.0
        %1355 = vmatprep.subr.mxu0 0.0
        %1356 = vmatpush1.msra.mxu0 0.0
        %1357 = vmatprep.subr.mxu0 0.0
        %1358 = vmatpush1.msra.mxu0 0.0
        %1359 = vmatprep.subr.mxu0 0.0
        %1360 = vmatpush1.msra.mxu0 0.0
        %1361 = vmatprep.subr.mxu0 0.0
        %1362 = vmatpush1.msra.mxu0 0.0
        %1363 = vmatprep.subr.mxu0 0.0
        %1364 = vmatpush1.msra.mxu0 0.0
        %1365 = vmatprep.subr.mxu0 0.0
        %1366 = vmatpush1.msra.mxu0 0.0
        %1367 = vmatprep.subr.mxu0 0.0
        %1368 = vmatpush1.msra.mxu0 0.0
        %1369 = vmatprep.subr.mxu0 0.0
        %1370 = vmatpush1.msra.mxu0 0.0
        %1371 = vmatprep.subr.mxu0 0.0
        %1372 = vmatpush1.msra.mxu0 0.0
        %1373 = vmatprep.subr.mxu0 0.0
        %1374 = vmatpush1.msra.mxu0 0.0
        %1375 = vmatprep.subr.mxu0 0.0
        %1376 = vmatpush1.msra.mxu0 0.0
        %1377 = vmatprep.subr.mxu0 0.0
        %1378 = vmatpush1.msra.mxu0 0.0
        %1379 = vmatprep.subr.mxu0 0.0
        %1380 = vmatpush1.msra.mxu0 0.0
        %1381 = vmatprep.subr.mxu0 0.0
        %1382 = vmatpush1.msra.mxu0 0.0
        %1383 = vmatprep.subr.mxu0 0.0
        %1384 = vmatpush1.msra.mxu0 0.0
        %1385 = vmatprep.subr.mxu0 0.0
        %1386 = vmatpush1.msra.mxu0 0.0
        %1387 = vmatprep.subr.mxu0 0.0
        %1388 = vmatpush1.msra.mxu0 0.0
        %1389 = vmatprep.mubr.f32.mxu0 0.0
        %1390 = vmatmul.mubr.f32.gmra.mrb[0].mxu0 %v1320
        %v1391 = vpop.f32.mrb[0].mxu0
        %v1392 = vadd.f32 0.0, %v1391
        %v1393 = vpop.f32.mrb[0].mxu0
        %1394 = vmatprep.mubr.f32.mxu0 0.0
        %1395 = vmatmul.mubr.f32.gmra.mrb[0].mxu0 %v1323
        %v1396 = vpop.f32.mrb[0].mxu0
        %v1397 = vadd.f32 0.0, %v1396
        %v1398 = vpop.f32.mrb[0].mxu0
        %1399 = vdwg.mxu0
        %1400 = vrot.lane.b32.xlu0 %v782, 104
        %v1401 = vpop.permute.xlu0 %1400
        %1402 = vrot.lane.b32.xlu0 %v787, 104
        %v1403 = vpop.permute.xlu0 %1402
        %1404 = vrot.lane.b32.xlu0 %v782, 72
        %v1405 = vpop.permute.xlu0 %1404
        %1406 = vrot.lane.b32.xlu0 %v787, 72
        %v1407 = vpop.permute.xlu0 %1406
        %v1408 = vsel %vm806, %v1401, 0
        %v1410 = vsel %vm806, %v1403, 0
        %v1412 = vsel %vm806, %v1405, 0
        %v1414 = vsel %vm806, %v1407, 0
        %1416 = vmatprep.subr.mxu0 0.0
        %1417 = vmatpush1.xpose.msra.mxu0 %v1412
        %1418 = vmatprep.subr.mxu0 0.0
        %1419 = vmatpush1.xpose.msra.mxu0 %v1414
        %1420 = vmatprep.subr.mxu0 0.0
        %1421 = vmatpush1.xpose.msra.mxu0 0.0
        %1422 = vmatprep.subr.mxu0 0.0
        %1423 = vmatpush1.xpose.msra.mxu0 0.0
        %1424 = vmatprep.subr.mxu0 0.0
        %1425 = vmatpush1.xpose.msra.mxu0 0.0
        %1426 = vmatprep.subr.mxu0 0.0
        %1427 = vmatpush1.xpose.msra.mxu0 0.0
        %1428 = vmatprep.subr.mxu0 0.0
        %1429 = vmatpush1.xpose.msra.mxu0 0.0
        %1430 = vmatprep.subr.mxu0 0.0
        %1431 = vmatpush1.xpose.msra.mxu0 0.0
        %1432 = vmatprep.subr.mxu0 0.0
        %1433 = vmatpush1.xpose.msra.mxu0 0.0
        %1434 = vmatprep.subr.mxu0 0.0
        %1435 = vmatpush1.xpose.msra.mxu0 0.0
        %1436 = vmatprep.subr.mxu0 0.0
        %1437 = vmatpush1.xpose.msra.mxu0 0.0
        %1438 = vmatprep.subr.mxu0 0.0
        %1439 = vmatpush1.xpose.msra.mxu0 0.0
        %1440 = vmatprep.subr.mxu0 0.0
        %1441 = vmatpush1.xpose.msra.mxu0 0.0
        %1442 = vmatprep.subr.mxu0 0.0
        %1443 = vmatpush1.xpose.msra.mxu0 0.0
        %1444 = vmatprep.subr.mxu0 0.0
        %1445 = vmatpush1.xpose.msra.mxu0 0.0
        %1446 = vmatprep.subr.mxu0 0.0
        %1447 = vmatpush1.xpose.msra.mxu0 0.0
        %1448 = vmatprep.subr.mxu0 0.0
        %1449 = vmatpush1.xpose.msra.mxu0 0.0
        %1450 = vmatprep.subr.mxu0 0.0
        %1451 = vmatpush1.xpose.msra.mxu0 0.0
        %1452 = vmatprep.subr.mxu0 0.0
        %1453 = vmatpush1.xpose.msra.mxu0 0.0
        %1454 = vmatprep.subr.mxu0 0.0
        %1455 = vmatpush1.xpose.msra.mxu0 0.0
        %1456 = vmatprep.subr.mxu0 0.0
        %1457 = vmatpush1.xpose.msra.mxu0 0.0
        %1458 = vmatprep.subr.mxu0 0.0
        %1459 = vmatpush1.xpose.msra.mxu0 0.0
        %1460 = vmatprep.subr.mxu0 0.0
        %1461 = vmatpush1.xpose.msra.mxu0 0.0
        %1462 = vmatprep.subr.mxu0 0.0
        %1463 = vmatpush1.xpose.msra.mxu0 0.0
        %1464 = vmatprep.subr.mxu0 0.0
        %1465 = vmatpush1.xpose.msra.mxu0 0.0
        %1466 = vmatprep.subr.mxu0 0.0
        %1467 = vmatpush1.xpose.msra.mxu0 0.0
        %1468 = vmatprep.subr.mxu0 0.0
        %1469 = vmatpush1.xpose.msra.mxu0 0.0
        %1470 = vmatprep.subr.mxu0 0.0
        %1471 = vmatpush1.xpose.msra.mxu0 0.0
        %1472 = vmatprep.subr.mxu0 0.0
        %1473 = vmatpush1.xpose.msra.mxu0 0.0
        %1474 = vmatprep.subr.mxu0 0.0
        %1475 = vmatpush1.xpose.msra.mxu0 0.0
        %1476 = vmatprep.subr.mxu0 0.0
        %1477 = vmatpush1.xpose.msra.mxu0 0.0
        %1478 = vmatprep.subr.mxu0 0.0
        %1479 = vmatpush1.xpose.msra.mxu0 0.0
        %1480 = vmatprep.mubr.f32.mxu0 0.0
        %1481 = vmatmul.mubr.f32.gmra.mrb[0].mxu0 %v1408
        %v1482 = vpop.f32.mrb[0].mxu0
        %v1483 = vadd.f32 0.0, %v1482
        %v1484 = vpop.f32.mrb[0].mxu0
        %1485 = vmatprep.mubr.f32.mxu0 0.0
        %1486 = vmatmul.mubr.f32.gmra.mrb[0].mxu0 %v1410
        %v1487 = vpop.f32.mrb[0].mxu0
        %v1488 = vadd.f32 0.0, %v1487
        %v1489 = vpop.f32.mrb[0].mxu0
        %1490 = vdwg.mxu0
        %v1491 = vsel %vm890, %v1483, -inf
        %1492 = vmax.xlane.f32.xlu0 %v1491
        %v1493 = vpop.xlane.xlu0 %1492
        %v1494 = vsel %vm890, %v1488, -inf
        %1495 = vmax.xlane.f32.xlu0 %v1494
        %v1496 = vpop.xlane.xlu0 %1495
        %v1497 = vsub.f32 %v1483, %v1493
        %v1498 = vsub.f32 %v1488, %v1496
        %v1499 = vmul.f32 %v1497, 1.442695
        %v1500 = vpow.pop %v1499
        %v1501 = vmul.f32 %v1498, 1.442695
        %v1502 = vpow.pop %v1501
        %v1503 = vsel %vm890, %v1500, 0.0
        %1504 = vadd.xlane.f32.xlu0 %v1503
        %v1505 = vpop.xlane.xlu0 %1504
        %v1506 = vsel %vm890, %v1502, 0.0
        %1507 = vadd.xlane.f32.xlu0 %v1506
        %v1508 = vpop.xlane.xlu0 %1507
        %v1509 = vrcp.pop %v1505
        %v1510 = vrcp.pop %v1508
        %v1511 = vmul.f32 %v1500, %v1509
        %v1512 = vmul.f32 %v1502, %v1510
        %1513 = vrot.lane.b32.xlu0 %v782, 40
        %v1514 = vpop.permute.xlu0 %1513
        %1515 = vrot.lane.b32.xlu0 %v787, 40
        %v1516 = vpop.permute.xlu0 %1515
        %v1520 = vsel %vm890, %v1511, 0
        %v1523 = vsel %vm890, %v1512, 0
        %1525 = vmatprep.subr.mxu0 0.0
        %1526 = vmatpush1.msra.mxu0 %v1514
        %1527 = vmatprep.subr.mxu0 0.0
        %1528 = vmatpush1.msra.mxu0 %v1516
        %1529 = vmatprep.subr.mxu0 0.0
        %1530 = vmatpush1.msra.mxu0 0.0
        %1531 = vmatprep.subr.mxu0 0.0
        %1532 = vmatpush1.msra.mxu0 0.0
        %1533 = vmatprep.subr.mxu0 0.0
        %1534 = vmatpush1.msra.mxu0 0.0
        %1535 = vmatprep.subr.mxu0 0.0
        %1536 = vmatpush1.msra.mxu0 0.0
        %1537 = vmatprep.subr.mxu0 0.0
        %1538 = vmatpush1.msra.mxu0 0.0
        %1539 = vmatprep.subr.mxu0 0.0
        %1540 = vmatpush1.msra.mxu0 0.0
        %1541 = vmatprep.subr.mxu0 0.0
        %1542 = vmatpush1.msra.mxu0 0.0
        %1543 = vmatprep.subr.mxu0 0.0
        %1544 = vmatpush1.msra.mxu0 0.0
        %1545 = vmatprep.subr.mxu0 0.0
        %1546 = vmatpush1.msra.mxu0 0.0
        %1547 = vmatprep.subr.mxu0 0.0
        %1548 = vmatpush1.msra.mxu0 0.0
        %1549 = vmatprep.subr.mxu0 0.0
        %1550 = vmatpush1.msra.mxu0 0.0
        %1551 = vmatprep.subr.mxu0 0.0
        %1552 = vmatpush1.msra.mxu0 0.0
        %1553 = vmatprep.subr.mxu0 0.0
        %1554 = vmatpush1.msra.mxu0 0.0
        %1555 = vmatprep.subr.mxu0 0.0
        %1556 = vmatpush1.msra.mxu0 0.0
        %1557 = vmatprep.subr.mxu0 0.0
        %1558 = vmatpush1.msra.mxu0 0.0
        %1559 = vmatprep.subr.mxu0 0.0
        %1560 = vmatpush1.msra.mxu0 0.0
        %1561 = vmatprep.subr.mxu0 0.0
        %1562 = vmatpush1.msra.mxu0 0.0
        %1563 = vmatprep.subr.mxu0 0.0
        %1564 = vmatpush1.msra.mxu0 0.0
        %1565 = vmatprep.subr.mxu0 0.0
        %1566 = vmatpush1.msra.mxu0 0.0
        %1567 = vmatprep.subr.mxu0 0.0
        %1568 = vmatpush1.msra.mxu0 0.0
        %1569 = vmatprep.subr.mxu0 0.0
        %1570 = vmatpush1.msra.mxu0 0.0
        %1571 = vmatprep.subr.mxu0 0.0
        %1572 = vmatpush1.msra.mxu0 0.0
        %1573 = vmatprep.subr.mxu0 0.0
        %1574 = vmatpush1.msra.mxu0 0.0
        %1575 = vmatprep.subr.mxu0 0.0
        %1576 = vmatpush1.msra.mxu0 0.0
        %1577 = vmatprep.subr.mxu0 0.0
        %1578 = vmatpush1.msra.mxu0 0.0
        %1579 = vmatprep.subr.mxu0 0.0
        %1580 = vmatpush1.msra.mxu0 0.0
        %1581 = vmatprep.subr.mxu0 0.0
        %1582 = vmatpush1.msra.mxu0 0.0
        %1583 = vmatprep.subr.mxu0 0.0
        %1584 = vmatpush1.msra.mxu0 0.0
        %1585 = vmatprep.subr.mxu0 0.0
        %1586 = vmatpush1.msra.mxu0 0.0
        %1587 = vmatprep.subr.mxu0 0.0
        %1588 = vmatpush1.msra.mxu0 0.0
        %1589 = vmatprep.mubr.f32.mxu0 0.0
        %1590 = vmatmul.mubr.f32.gmra.mrb[0].mxu0 %v1520
        %v1591 = vpop.f32.mrb[0].mxu0
        %v1592 = vadd.f32 0.0, %v1591
        %v1593 = vpop.f32.mrb[0].mxu0
        %1594 = vmatprep.mubr.f32.mxu0 0.0
        %1595 = vmatmul.mubr.f32.gmra.mrb[0].mxu0 %v1523
        %v1596 = vpop.f32.mrb[0].mxu0
        %v1597 = vadd.f32 0.0, %v1596
        %v1598 = vpop.f32.mrb[0].mxu0
        %1599 = vdwg.mxu0
        %1602 = vrot.lane.b32.xlu0 %v1192, 8
        %v1603 = vpop.permute.xlu0 %1602
        %1604 = vrot.lane.b32.xlu0 %v1197, 8
        %v1605 = vpop.permute.xlu0 %1604
        %1610 = vrot.lane.b32.xlu0 %v1392, 16
        %v1611 = vpop.permute.xlu0 %1610
        %1612 = vrot.lane.b32.xlu0 %v1397, 16
        %v1613 = vpop.permute.xlu0 %1612
        %1618 = vrot.lane.b32.xlu0 %v1592, 24
        %v1619 = vpop.permute.xlu0 %1618
        %1620 = vrot.lane.b32.xlu0 %v1597, 24
        %v1621 = vpop.permute.xlu0 %1620
        %v1624 = vsel %vm806, %v992, %v1603
        %v1625 = vsel %vm806, %v997, %v1605
        %v1626 = vsel %vm890, %v1624, %v1611
        %v1627 = vsel %vm890, %v1625, %v1613
        %vm1628 = vcmask 195584
        %v1629 = vsel %vm1628, %v1626, %v1619
        %v1630 = vsel %vm1628, %v1627, %v1621
        %1633 = vrot.lane.b32.xlu0 %v792, 96
        %v1634 = vpop.permute.xlu0 %1633
        %1635 = vrot.lane.b32.xlu0 %v797, 96
        %v1636 = vpop.permute.xlu0 %1635
        %v1637 = vsel %vm806, %v792, 0
        %v1639 = vsel %vm806, %v797, 0
        %v1641 = vsel %vm806, %v1634, 0
        %v1643 = vsel %vm806, %v1636, 0
        %1645 = vmatprep.subr.mxu0 0.0
        %1646 = vmatpush1.xpose.msra.mxu0 %v1641
        %1647 = vmatprep.subr.mxu0 0.0
        %1648 = vmatpush1.xpose.msra.mxu0 %v1643
        %1649 = vmatprep.subr.mxu0 0.0
        %1650 = vmatpush1.xpose.msra.mxu0 0.0
        %1651 = vmatprep.subr.mxu0 0.0
        %1652 = vmatpush1.xpose.msra.mxu0 0.0
        %1653 = vmatprep.subr.mxu0 0.0
        %1654 = vmatpush1.xpose.msra.mxu0 0.0
        %1655 = vmatprep.subr.mxu0 0.0
        %1656 = vmatpush1.xpose.msra.mxu0 0.0
        %1657 = vmatprep.subr.mxu0 0.0
        %1658 = vmatpush1.xpose.msra.mxu0 0.0
        %1659 = vmatprep.subr.mxu0 0.0
        %1660 = vmatpush1.xpose.msra.mxu0 0.0
        %1661 = vmatprep.subr.mxu0 0.0
        %1662 = vmatpush1.xpose.msra.mxu0 0.0
        %1663 = vmatprep.subr.mxu0 0.0
        %1664 = vmatpush1.xpose.msra.mxu0 0.0
        %1665 = vmatprep.subr.mxu0 0.0
        %1666 = vmatpush1.xpose.msra.mxu0 0.0
        %1667 = vmatprep.subr.mxu0 0.0
        %1668 = vmatpush1.xpose.msra.mxu0 0.0
        %1669 = vmatprep.subr.mxu0 0.0
        %1670 = vmatpush1.xpose.msra.mxu0 0.0
        %1671 = vmatprep.subr.mxu0 0.0
        %1672 = vmatpush1.xpose.msra.mxu0 0.0
        %1673 = vmatprep.subr.mxu0 0.0
        %1674 = vmatpush1.xpose.msra.mxu0 0.0
        %1675 = vmatprep.subr.mxu0 0.0
        %1676 = vmatpush1.xpose.msra.mxu0 0.0
        %1677 = vmatprep.subr.mxu0 0.0
        %1678 = vmatpush1.xpose.msra.mxu0 0.0
        %1679 = vmatprep.subr.mxu0 0.0
        %1680 = vmatpush1.xpose.msra.mxu0 0.0
        %1681 = vmatprep.subr.mxu0 0.0
        %1682 = vmatpush1.xpose.msra.mxu0 0.0
        %1683 = vmatprep.subr.mxu0 0.0
        %1684 = vmatpush1.xpose.msra.mxu0 0.0
        %1685 = vmatprep.subr.mxu0 0.0
        %1686 = vmatpush1.xpose.msra.mxu0 0.0
        %1687 = vmatprep.subr.mxu0 0.0
        %1688 = vmatpush1.xpose.msra.mxu0 0.0
        %1689 = vmatprep.subr.mxu0 0.0
        %1690 = vmatpush1.xpose.msra.mxu0 0.0
        %1691 = vmatprep.subr.mxu0 0.0
        %1692 = vmatpush1.xpose.msra.mxu0 0.0
        %1693 = vmatprep.subr.mxu0 0.0
        %1694 = vmatpush1.xpose.msra.mxu0 0.0
        %1695 = vmatprep.subr.mxu0 0.0
        %1696 = vmatpush1.xpose.msra.mxu0 0.0
        %1697 = vmatprep.subr.mxu0 0.0
        %1698 = vmatpush1.xpose.msra.mxu0 0.0
        %1699 = vmatprep.subr.mxu0 0.0
        %1700 = vmatpush1.xpose.msra.mxu0 0.0
        %1701 = vmatprep.subr.mxu0 0.0
        %1702 = vmatpush1.xpose.msra.mxu0 0.0
        %1703 = vmatprep.subr.mxu0 0.0
        %1704 = vmatpush1.xpose.msra.mxu0 0.0
        %1705 = vmatprep.subr.mxu0 0.0
        %1706 = vmatpush1.xpose.msra.mxu0 0.0
        %1707 = vmatprep.subr.mxu0 0.0
        %1708 = vmatpush1.xpose.msra.mxu0 0.0
        %1709 = vmatprep.mubr.f32.mxu0 0.0
        %1710 = vmatmul.mubr.f32.gmra.mrb[0].mxu0 %v1637
        %v1711 = vpop.f32.mrb[0].mxu0
        %v1712 = vadd.f32 0.0, %v1711
        %v1713 = vpop.f32.mrb[0].mxu0
        %1714 = vmatprep.mubr.f32.mxu0 0.0
        %1715 = vmatmul.mubr.f32.gmra.mrb[0].mxu0 %v1639
        %v1716 = vpop.f32.mrb[0].mxu0
        %v1717 = vadd.f32 0.0, %v1716
        %v1718 = vpop.f32.mrb[0].mxu0
        %1719 = vdwg.mxu0
        %v1720 = vsel %vm890, %v1712, -inf
        %1721 = vmax.xlane.f32.xlu0 %v1720
        %v1722 = vpop.xlane.xlu0 %1721
        %v1723 = vsel %vm890, %v1717, -inf
        %1724 = vmax.xlane.f32.xlu0 %v1723
        %v1725 = vpop.xlane.xlu0 %1724
        %v1726 = vsub.f32 %v1712, %v1722
        %v1727 = vsub.f32 %v1717, %v1725
        %v1728 = vmul.f32 %v1726, 1.442695
        %v1729 = vpow.pop %v1728
        %v1730 = vmul.f32 %v1727, 1.442695
        %v1731 = vpow.pop %v1730
        %v1732 = vsel %vm890, %v1729, 0.0
        %1733 = vadd.xlane.f32.xlu0 %v1732
        %v1734 = vpop.xlane.xlu0 %1733
        %v1735 = vsel %vm890, %v1731, 0.0
        %1736 = vadd.xlane.f32.xlu0 %v1735
        %v1737 = vpop.xlane.xlu0 %1736
        %v1738 = vrcp.pop %v1734
        %v1739 = vrcp.pop %v1737
        %v1740 = vmul.f32 %v1729, %v1738
        %v1741 = vmul.f32 %v1731, %v1739
        %1742 = vrot.lane.b32.xlu0 %v792, 64
        %v1743 = vpop.permute.xlu0 %1742
        %1744 = vrot.lane.b32.xlu0 %v797, 64
        %v1745 = vpop.permute.xlu0 %1744
        %v1749 = vsel %vm890, %v1740, 0
        %v1752 = vsel %vm890, %v1741, 0
        %1754 = vmatprep.subr.mxu0 0.0
        %1755 = vmatpush1.msra.mxu0 %v1743
        %1756 = vmatprep.subr.mxu0 0.0
        %1757 = vmatpush1.msra.mxu0 %v1745
        %1758 = vmatprep.subr.mxu0 0.0
        %1759 = vmatpush1.msra.mxu0 0.0
        %1760 = vmatprep.subr.mxu0 0.0
        %1761 = vmatpush1.msra.mxu0 0.0
        %1762 = vmatprep.subr.mxu0 0.0
        %1763 = vmatpush1.msra.mxu0 0.0
        %1764 = vmatprep.subr.mxu0 0.0
        %1765 = vmatpush1.msra.mxu0 0.0
        %1766 = vmatprep.subr.mxu0 0.0
        %1767 = vmatpush1.msra.mxu0 0.0
        %1768 = vmatprep.subr.mxu0 0.0
        %1769 = vmatpush1.msra.mxu0 0.0
        %1770 = vmatprep.subr.mxu0 0.0
        %1771 = vmatpush1.msra.mxu0 0.0
        %1772 = vmatprep.subr.mxu0 0.0
        %1773 = vmatpush1.msra.mxu0 0.0
        %1774 = vmatprep.subr.mxu0 0.0
        %1775 = vmatpush1.msra.mxu0 0.0
        %1776 = vmatprep.subr.mxu0 0.0
        %1777 = vmatpush1.msra.mxu0 0.0
        %1778 = vmatprep.subr.mxu0 0.0
        %1779 = vmatpush1.msra.mxu0 0.0
        %1780 = vmatprep.subr.mxu0 0.0
        %1781 = vmatpush1.msra.mxu0 0.0
        %1782 = vmatprep.subr.mxu0 0.0
        %1783 = vmatpush1.msra.mxu0 0.0
        %1784 = vmatprep.subr.mxu0 0.0
        %1785 = vmatpush1.msra.mxu0 0.0
        %1786 = vmatprep.subr.mxu0 0.0
        %1787 = vmatpush1.msra.mxu0 0.0
        %1788 = vmatprep.subr.mxu0 0.0
        %1789 = vmatpush1.msra.mxu0 0.0
        %1790 = vmatprep.subr.mxu0 0.0
        %1791 = vmatpush1.msra.mxu0 0.0
        %1792 = vmatprep.subr.mxu0 0.0
        %1793 = vmatpush1.msra.mxu0 0.0
        %1794 = vmatprep.subr.mxu0 0.0
        %1795 = vmatpush1.msra.mxu0 0.0
        %1796 = vmatprep.subr.mxu0 0.0
        %1797 = vmatpush1.msra.mxu0 0.0
        %1798 = vmatprep.subr.mxu0 0.0
        %1799 = vmatpush1.msra.mxu0 0.0
        %1800 = vmatprep.subr.mxu0 0.0
        %1801 = vmatpush1.msra.mxu0 0.0
        %1802 = vmatprep.subr.mxu0 0.0
        %1803 = vmatpush1.msra.mxu0 0.0
        %1804 = vmatprep.subr.mxu0 0.0
        %1805 = vmatpush1.msra.mxu0 0.0
        %1806 = vmatprep.subr.mxu0 0.0
        %1807 = vmatpush1.msra.mxu0 0.0
        %1808 = vmatprep.subr.mxu0 0.0
        %1809 = vmatpush1.msra.mxu0 0.0
        %1810 = vmatprep.subr.mxu0 0.0
        %1811 = vmatpush1.msra.mxu0 0.0
        %1812 = vmatprep.subr.mxu0 0.0
        %1813 = vmatpush1.msra.mxu0 0.0
        %1814 = vmatprep.subr.mxu0 0.0
        %1815 = vmatpush1.msra.mxu0 0.0
        %1816 = vmatprep.subr.mxu0 0.0
        %1817 = vmatpush1.msra.mxu0 0.0
        %1818 = vmatprep.mubr.f32.mxu0 0.0
        %1819 = vmatmul.mubr.f32.gmra.mrb[0].mxu0 %v1749
        %v1820 = vpop.f32.mrb[0].mxu0
        %v1821 = vadd.f32 0.0, %v1820
        %v1822 = vpop.f32.mrb[0].mxu0
        %1823 = vmatprep.mubr.f32.mxu0 0.0
        %1824 = vmatmul.mubr.f32.gmra.mrb[0].mxu0 %v1752
        %v1825 = vpop.f32.mrb[0].mxu0
        %v1826 = vadd.f32 0.0, %v1825
        %v1827 = vpop.f32.mrb[0].mxu0
        %1828 = vdwg.mxu0
        %1829 = vrot.lane.b32.xlu0 %v792, 120
        %v1830 = vpop.permute.xlu0 %1829
        %1831 = vrot.lane.b32.xlu0 %v797, 120
        %v1832 = vpop.permute.xlu0 %1831
        %1833 = vrot.lane.b32.xlu0 %v792, 88
        %v1834 = vpop.permute.xlu0 %1833
        %1835 = vrot.lane.b32.xlu0 %v797, 88
        %v1836 = vpop.permute.xlu0 %1835
        %v1837 = vsel %vm806, %v1830, 0
        %v1839 = vsel %vm806, %v1832, 0
        %v1841 = vsel %vm806, %v1834, 0
        %v1843 = vsel %vm806, %v1836, 0
        %1845 = vmatprep.subr.mxu0 0.0
        %1846 = vmatpush1.xpose.msra.mxu0 %v1841
        %1847 = vmatprep.subr.mxu0 0.0
        %1848 = vmatpush1.xpose.msra.mxu0 %v1843
        %1849 = vmatprep.subr.mxu0 0.0
        %1850 = vmatpush1.xpose.msra.mxu0 0.0
        %1851 = vmatprep.subr.mxu0 0.0
        %1852 = vmatpush1.xpose.msra.mxu0 0.0
        %1853 = vmatprep.subr.mxu0 0.0
        %1854 = vmatpush1.xpose.msra.mxu0 0.0
        %1855 = vmatprep.subr.mxu0 0.0
        %1856 = vmatpush1.xpose.msra.mxu0 0.0
        %1857 = vmatprep.subr.mxu0 0.0
        %1858 = vmatpush1.xpose.msra.mxu0 0.0
        %1859 = vmatprep.subr.mxu0 0.0
        %1860 = vmatpush1.xpose.msra.mxu0 0.0
        %1861 = vmatprep.subr.mxu0 0.0
        %1862 = vmatpush1.xpose.msra.mxu0 0.0
        %1863 = vmatprep.subr.mxu0 0.0
        %1864 = vmatpush1.xpose.msra.mxu0 0.0
        %1865 = vmatprep.subr.mxu0 0.0
        %1866 = vmatpush1.xpose.msra.mxu0 0.0
        %1867 = vmatprep.subr.mxu0 0.0
        %1868 = vmatpush1.xpose.msra.mxu0 0.0
        %1869 = vmatprep.subr.mxu0 0.0
        %1870 = vmatpush1.xpose.msra.mxu0 0.0
        %1871 = vmatprep.subr.mxu0 0.0
        %1872 = vmatpush1.xpose.msra.mxu0 0.0
        %1873 = vmatprep.subr.mxu0 0.0
        %1874 = vmatpush1.xpose.msra.mxu0 0.0
        %1875 = vmatprep.subr.mxu0 0.0
        %1876 = vmatpush1.xpose.msra.mxu0 0.0
        %1877 = vmatprep.subr.mxu0 0.0
        %1878 = vmatpush1.xpose.msra.mxu0 0.0
        %1879 = vmatprep.subr.mxu0 0.0
        %1880 = vmatpush1.xpose.msra.mxu0 0.0
        %1881 = vmatprep.subr.mxu0 0.0
        %1882 = vmatpush1.xpose.msra.mxu0 0.0
        %1883 = vmatprep.subr.mxu0 0.0
        %1884 = vmatpush1.xpose.msra.mxu0 0.0
        %1885 = vmatprep.subr.mxu0 0.0
        %1886 = vmatpush1.xpose.msra.mxu0 0.0
        %1887 = vmatprep.subr.mxu0 0.0
        %1888 = vmatpush1.xpose.msra.mxu0 0.0
        %1889 = vmatprep.subr.mxu0 0.0
        %1890 = vmatpush1.xpose.msra.mxu0 0.0
        %1891 = vmatprep.subr.mxu0 0.0
        %1892 = vmatpush1.xpose.msra.mxu0 0.0
        %1893 = vmatprep.subr.mxu0 0.0
        %1894 = vmatpush1.xpose.msra.mxu0 0.0
        %1895 = vmatprep.subr.mxu0 0.0
        %1896 = vmatpush1.xpose.msra.mxu0 0.0
        %1897 = vmatprep.subr.mxu0 0.0
        %1898 = vmatpush1.xpose.msra.mxu0 0.0
        %1899 = vmatprep.subr.mxu0 0.0
        %1900 = vmatpush1.xpose.msra.mxu0 0.0
        %1901 = vmatprep.subr.mxu0 0.0
        %1902 = vmatpush1.xpose.msra.mxu0 0.0
        %1903 = vmatprep.subr.mxu0 0.0
        %1904 = vmatpush1.xpose.msra.mxu0 0.0
        %1905 = vmatprep.subr.mxu0 0.0
        %1906 = vmatpush1.xpose.msra.mxu0 0.0
        %1907 = vmatprep.subr.mxu0 0.0
        %1908 = vmatpush1.xpose.msra.mxu0 0.0
        %1909 = vmatprep.mubr.f32.mxu0 0.0
        %1910 = vmatmul.mubr.f32.gmra.mrb[0].mxu0 %v1837
        %v1911 = vpop.f32.mrb[0].mxu0
        %v1912 = vadd.f32 0.0, %v1911
        %v1913 = vpop.f32.mrb[0].mxu0
        %1914 = vmatprep.mubr.f32.mxu0 0.0
        %1915 = vmatmul.mubr.f32.gmra.mrb[0].mxu0 %v1839
        %v1916 = vpop.f32.mrb[0].mxu0
        %v1917 = vadd.f32 0.0, %v1916
        %v1918 = vpop.f32.mrb[0].mxu0
        %1919 = vdwg.mxu0
        %v1920 = vsel %vm890, %v1912, -inf
        %1921 = vmax.xlane.f32.xlu0 %v1920
        %v1922 = vpop.xlane.xlu0 %1921
        %v1923 = vsel %vm890, %v1917, -inf
        %1924 = vmax.xlane.f32.xlu0 %v1923
        %v1925 = vpop.xlane.xlu0 %1924
        %v1926 = vsub.f32 %v1912, %v1922
        %v1927 = vsub.f32 %v1917, %v1925
        %v1928 = vmul.f32 %v1926, 1.442695
        %v1929 = vpow.pop %v1928
        %v1930 = vmul.f32 %v1927, 1.442695
        %v1931 = vpow.pop %v1930
        %v1932 = vsel %vm890, %v1929, 0.0
        %1933 = vadd.xlane.f32.xlu0 %v1932
        %v1934 = vpop.xlane.xlu0 %1933
        %v1935 = vsel %vm890, %v1931, 0.0
        %1936 = vadd.xlane.f32.xlu0 %v1935
        %v1937 = vpop.xlane.xlu0 %1936
        %v1938 = vrcp.pop %v1934
        %v1939 = vrcp.pop %v1937
        %v1940 = vmul.f32 %v1929, %v1938
        %v1941 = vmul.f32 %v1931, %v1939
        %1942 = vrot.lane.b32.xlu0 %v792, 56
        %v1943 = vpop.permute.xlu0 %1942
        %1944 = vrot.lane.b32.xlu0 %v797, 56
        %v1945 = vpop.permute.xlu0 %1944
        %v1949 = vsel %vm890, %v1940, 0
        %v1952 = vsel %vm890, %v1941, 0
        %1954 = vmatprep.subr.mxu0 0.0
        %1955 = vmatpush1.msra.mxu0 %v1943
        %1956 = vmatprep.subr.mxu0 0.0
        %1957 = vmatpush1.msra.mxu0 %v1945
        %1958 = vmatprep.subr.mxu0 0.0
        %1959 = vmatpush1.msra.mxu0 0.0
        %1960 = vmatprep.subr.mxu0 0.0
        %1961 = vmatpush1.msra.mxu0 0.0
        %1962 = vmatprep.subr.mxu0 0.0
        %1963 = vmatpush1.msra.mxu0 0.0
        %1964 = vmatprep.subr.mxu0 0.0
        %1965 = vmatpush1.msra.mxu0 0.0
        %1966 = vmatprep.subr.mxu0 0.0
        %1967 = vmatpush1.msra.mxu0 0.0
        %1968 = vmatprep.subr.mxu0 0.0
        %1969 = vmatpush1.msra.mxu0 0.0
        %1970 = vmatprep.subr.mxu0 0.0
        %1971 = vmatpush1.msra.mxu0 0.0
        %1972 = vmatprep.subr.mxu0 0.0
        %1973 = vmatpush1.msra.mxu0 0.0
        %1974 = vmatprep.subr.mxu0 0.0
        %1975 = vmatpush1.msra.mxu0 0.0
        %1976 = vmatprep.subr.mxu0 0.0
        %1977 = vmatpush1.msra.mxu0 0.0
        %1978 = vmatprep.subr.mxu0 0.0
        %1979 = vmatpush1.msra.mxu0 0.0
        %1980 = vmatprep.subr.mxu0 0.0
        %1981 = vmatpush1.msra.mxu0 0.0
        %1982 = vmatprep.subr.mxu0 0.0
        %1983 = vmatpush1.msra.mxu0 0.0
        %1984 = vmatprep.subr.mxu0 0.0
        %1985 = vmatpush1.msra.mxu0 0.0
        %1986 = vmatprep.subr.mxu0 0.0
        %1987 = vmatpush1.msra.mxu0 0.0
        %1988 = vmatprep.subr.mxu0 0.0
        %1989 = vmatpush1.msra.mxu0 0.0
        %1990 = vmatprep.subr.mxu0 0.0
        %1991 = vmatpush1.msra.mxu0 0.0
        %1992 = vmatprep.subr.mxu0 0.0
        %1993 = vmatpush1.msra.mxu0 0.0
        %1994 = vmatprep.subr.mxu0 0.0
        %1995 = vmatpush1.msra.mxu0 0.0
        %1996 = vmatprep.subr.mxu0 0.0
        %1997 = vmatpush1.msra.mxu0 0.0
        %1998 = vmatprep.subr.mxu0 0.0
        %1999 = vmatpush1.msra.mxu0 0.0
        %2000 = vmatprep.subr.mxu0 0.0
        %2001 = vmatpush1.msra.mxu0 0.0
        %2002 = vmatprep.subr.mxu0 0.0
        %2003 = vmatpush1.msra.mxu0 0.0
        %2004 = vmatprep.subr.mxu0 0.0
        %2005 = vmatpush1.msra.mxu0 0.0
        %2006 = vmatprep.subr.mxu0 0.0
        %2007 = vmatpush1.msra.mxu0 0.0
        %2008 = vmatprep.subr.mxu0 0.0
        %2009 = vmatpush1.msra.mxu0 0.0
        %2010 = vmatprep.subr.mxu0 0.0
        %2011 = vmatpush1.msra.mxu0 0.0
        %2012 = vmatprep.subr.mxu0 0.0
        %2013 = vmatpush1.msra.mxu0 0.0
        %2014 = vmatprep.subr.mxu0 0.0
        %2015 = vmatpush1.msra.mxu0 0.0
        %2016 = vmatprep.subr.mxu0 0.0
        %2017 = vmatpush1.msra.mxu0 0.0
        %2018 = vmatprep.mubr.f32.mxu0 0.0
        %2019 = vmatmul.mubr.f32.gmra.mrb[0].mxu0 %v1949
        %v2020 = vpop.f32.mrb[0].mxu0
        %v2021 = vadd.f32 0.0, %v2020
        %v2022 = vpop.f32.mrb[0].mxu0
        %2023 = vmatprep.mubr.f32.mxu0 0.0
        %2024 = vmatmul.mubr.f32.gmra.mrb[0].mxu0 %v1952
        %v2025 = vpop.f32.mrb[0].mxu0
        %v2026 = vadd.f32 0.0, %v2025
        %v2027 = vpop.f32.mrb[0].mxu0
        %2028 = vdwg.mxu0
        %2029 = vrot.lane.b32.xlu0 %v792, 112
        %v2030 = vpop.permute.xlu0 %2029
        %2031 = vrot.lane.b32.xlu0 %v797, 112
        %v2032 = vpop.permute.xlu0 %2031
        %2033 = vrot.lane.b32.xlu0 %v792, 80
        %v2034 = vpop.permute.xlu0 %2033
        %2035 = vrot.lane.b32.xlu0 %v797, 80
        %v2036 = vpop.permute.xlu0 %2035
        %v2037 = vsel %vm806, %v2030, 0
        %v2039 = vsel %vm806, %v2032, 0
        %v2041 = vsel %vm806, %v2034, 0
        %v2043 = vsel %vm806, %v2036, 0
        %2045 = vmatprep.subr.mxu0 0.0
        %2046 = vmatpush1.xpose.msra.mxu0 %v2041
        %2047 = vmatprep.subr.mxu0 0.0
        %2048 = vmatpush1.xpose.msra.mxu0 %v2043
        %2049 = vmatprep.subr.mxu0 0.0
        %2050 = vmatpush1.xpose.msra.mxu0 0.0
        %2051 = vmatprep.subr.mxu0 0.0
        %2052 = vmatpush1.xpose.msra.mxu0 0.0
        %2053 = vmatprep.subr.mxu0 0.0
        %2054 = vmatpush1.xpose.msra.mxu0 0.0
        %2055 = vmatprep.subr.mxu0 0.0
        %2056 = vmatpush1.xpose.msra.mxu0 0.0
        %2057 = vmatprep.subr.mxu0 0.0
        %2058 = vmatpush1.xpose.msra.mxu0 0.0
        %2059 = vmatprep.subr.mxu0 0.0
        %2060 = vmatpush1.xpose.msra.mxu0 0.0
        %2061 = vmatprep.subr.mxu0 0.0
        %2062 = vmatpush1.xpose.msra.mxu0 0.0
        %2063 = vmatprep.subr.mxu0 0.0
        %2064 = vmatpush1.xpose.msra.mxu0 0.0
        %2065 = vmatprep.subr.mxu0 0.0
        %2066 = vmatpush1.xpose.msra.mxu0 0.0
        %2067 = vmatprep.subr.mxu0 0.0
        %2068 = vmatpush1.xpose.msra.mxu0 0.0
        %2069 = vmatprep.subr.mxu0 0.0
        %2070 = vmatpush1.xpose.msra.mxu0 0.0
        %2071 = vmatprep.subr.mxu0 0.0
        %2072 = vmatpush1.xpose.msra.mxu0 0.0
        %2073 = vmatprep.subr.mxu0 0.0
        %2074 = vmatpush1.xpose.msra.mxu0 0.0
        %2075 = vmatprep.subr.mxu0 0.0
        %2076 = vmatpush1.xpose.msra.mxu0 0.0
        %2077 = vmatprep.subr.mxu0 0.0
        %2078 = vmatpush1.xpose.msra.mxu0 0.0
        %2079 = vmatprep.subr.mxu0 0.0
        %2080 = vmatpush1.xpose.msra.mxu0 0.0
        %2081 = vmatprep.subr.mxu0 0.0
        %2082 = vmatpush1.xpose.msra.mxu0 0.0
        %2083 = vmatprep.subr.mxu0 0.0
        %2084 = vmatpush1.xpose.msra.mxu0 0.0
        %2085 = vmatprep.subr.mxu0 0.0
        %2086 = vmatpush1.xpose.msra.mxu0 0.0
        %2087 = vmatprep.subr.mxu0 0.0
        %2088 = vmatpush1.xpose.msra.mxu0 0.0
        %2089 = vmatprep.subr.mxu0 0.0
        %2090 = vmatpush1.xpose.msra.mxu0 0.0
        %2091 = vmatprep.subr.mxu0 0.0
        %2092 = vmatpush1.xpose.msra.mxu0 0.0
        %2093 = vmatprep.subr.mxu0 0.0
        %2094 = vmatpush1.xpose.msra.mxu0 0.0
        %2095 = vmatprep.subr.mxu0 0.0
        %2096 = vmatpush1.xpose.msra.mxu0 0.0
        %2097 = vmatprep.subr.mxu0 0.0
        %2098 = vmatpush1.xpose.msra.mxu0 0.0
        %2099 = vmatprep.subr.mxu0 0.0
        %2100 = vmatpush1.xpose.msra.mxu0 0.0
        %2101 = vmatprep.subr.mxu0 0.0
        %2102 = vmatpush1.xpose.msra.mxu0 0.0
        %2103 = vmatprep.subr.mxu0 0.0
        %2104 = vmatpush1.xpose.msra.mxu0 0.0
        %2105 = vmatprep.subr.mxu0 0.0
        %2106 = vmatpush1.xpose.msra.mxu0 0.0
        %2107 = vmatprep.subr.mxu0 0.0
        %2108 = vmatpush1.xpose.msra.mxu0 0.0
        %2109 = vmatprep.mubr.f32.mxu0 0.0
        %2110 = vmatmul.mubr.f32.gmra.mrb[0].mxu0 %v2037
        %v2111 = vpop.f32.mrb[0].mxu0
        %v2112 = vadd.f32 0.0, %v2111
        %v2113 = vpop.f32.mrb[0].mxu0
        %2114 = vmatprep.mubr.f32.mxu0 0.0
        %2115 = vmatmul.mubr.f32.gmra.mrb[0].mxu0 %v2039
        %v2116 = vpop.f32.mrb[0].mxu0
        %v2117 = vadd.f32 0.0, %v2116
        %v2118 = vpop.f32.mrb[0].mxu0
        %2119 = vdwg.mxu0
        %v2120 = vsel %vm890, %v2112, -inf
        %2121 = vmax.xlane.f32.xlu0 %v2120
        %v2122 = vpop.xlane.xlu0 %2121
        %v2123 = vsel %vm890, %v2117, -inf
        %2124 = vmax.xlane.f32.xlu0 %v2123
        %v2125 = vpop.xlane.xlu0 %2124
        %v2126 = vsub.f32 %v2112, %v2122
        %v2127 = vsub.f32 %v2117, %v2125
        %v2128 = vmul.f32 %v2126, 1.442695
        %v2129 = vpow.pop %v2128
        %v2130 = vmul.f32 %v2127, 1.442695
        %v2131 = vpow.pop %v2130
        %v2132 = vsel %vm890, %v2129, 0.0
        %2133 = vadd.xlane.f32.xlu0 %v2132
        %v2134 = vpop.xlane.xlu0 %2133
        %v2135 = vsel %vm890, %v2131, 0.0
        %2136 = vadd.xlane.f32.xlu0 %v2135
        %v2137 = vpop.xlane.xlu0 %2136
        %v2138 = vrcp.pop %v2134
        %v2139 = vrcp.pop %v2137
        %v2140 = vmul.f32 %v2129, %v2138
        %v2141 = vmul.f32 %v2131, %v2139
        %2142 = vrot.lane.b32.xlu0 %v792, 48
        %v2143 = vpop.permute.xlu0 %2142
        %2144 = vrot.lane.b32.xlu0 %v797, 48
        %v2145 = vpop.permute.xlu0 %2144
        %v2149 = vsel %vm890, %v2140, 0
        %v2152 = vsel %vm890, %v2141, 0
        %2154 = vmatprep.subr.mxu0 0.0
        %2155 = vmatpush1.msra.mxu0 %v2143
        %2156 = vmatprep.subr.mxu0 0.0
        %2157 = vmatpush1.msra.mxu0 %v2145
        %2158 = vmatprep.subr.mxu0 0.0
        %2159 = vmatpush1.msra.mxu0 0.0
        %2160 = vmatprep.subr.mxu0 0.0
        %2161 = vmatpush1.msra.mxu0 0.0
        %2162 = vmatprep.subr.mxu0 0.0
        %2163 = vmatpush1.msra.mxu0 0.0
        %2164 = vmatprep.subr.mxu0 0.0
        %2165 = vmatpush1.msra.mxu0 0.0
        %2166 = vmatprep.subr.mxu0 0.0
        %2167 = vmatpush1.msra.mxu0 0.0
        %2168 = vmatprep.subr.mxu0 0.0
        %2169 = vmatpush1.msra.mxu0 0.0
        %2170 = vmatprep.subr.mxu0 0.0
        %2171 = vmatpush1.msra.mxu0 0.0
        %2172 = vmatprep.subr.mxu0 0.0
        %2173 = vmatpush1.msra.mxu0 0.0
        %2174 = vmatprep.subr.mxu0 0.0
        %2175 = vmatpush1.msra.mxu0 0.0
        %2176 = vmatprep.subr.mxu0 0.0
        %2177 = vmatpush1.msra.mxu0 0.0
        %2178 = vmatprep.subr.mxu0 0.0
        %2179 = vmatpush1.msra.mxu0 0.0
        %2180 = vmatprep.subr.mxu0 0.0
        %2181 = vmatpush1.msra.mxu0 0.0
        %2182 = vmatprep.subr.mxu0 0.0
        %2183 = vmatpush1.msra.mxu0 0.0
        %2184 = vmatprep.subr.mxu0 0.0
        %2185 = vmatpush1.msra.mxu0 0.0
        %2186 = vmatprep.subr.mxu0 0.0
        %2187 = vmatpush1.msra.mxu0 0.0
        %2188 = vmatprep.subr.mxu0 0.0
        %2189 = vmatpush1.msra.mxu0 0.0
        %2190 = vmatprep.subr.mxu0 0.0
        %2191 = vmatpush1.msra.mxu0 0.0
        %2192 = vmatprep.subr.mxu0 0.0
        %2193 = vmatpush1.msra.mxu0 0.0
        %2194 = vmatprep.subr.mxu0 0.0
        %2195 = vmatpush1.msra.mxu0 0.0
        %2196 = vmatprep.subr.mxu0 0.0
        %2197 = vmatpush1.msra.mxu0 0.0
        %2198 = vmatprep.subr.mxu0 0.0
        %2199 = vmatpush1.msra.mxu0 0.0
        %2200 = vmatprep.subr.mxu0 0.0
        %2201 = vmatpush1.msra.mxu0 0.0
        %2202 = vmatprep.subr.mxu0 0.0
        %2203 = vmatpush1.msra.mxu0 0.0
        %2204 = vmatprep.subr.mxu0 0.0
        %2205 = vmatpush1.msra.mxu0 0.0
        %2206 = vmatprep.subr.mxu0 0.0
        %2207 = vmatpush1.msra.mxu0 0.0
        %2208 = vmatprep.subr.mxu0 0.0
        %2209 = vmatpush1.msra.mxu0 0.0
        %2210 = vmatprep.subr.mxu0 0.0
        %2211 = vmatpush1.msra.mxu0 0.0
        %2212 = vmatprep.subr.mxu0 0.0
        %2213 = vmatpush1.msra.mxu0 0.0
        %2214 = vmatprep.subr.mxu0 0.0
        %2215 = vmatpush1.msra.mxu0 0.0
        %2216 = vmatprep.subr.mxu0 0.0
        %2217 = vmatpush1.msra.mxu0 0.0
        %2218 = vmatprep.mubr.f32.mxu0 0.0
        %2219 = vmatmul.mubr.f32.gmra.mrb[0].mxu0 %v2149
        %v2220 = vpop.f32.mrb[0].mxu0
        %v2221 = vadd.f32 0.0, %v2220
        %v2222 = vpop.f32.mrb[0].mxu0
        %2223 = vmatprep.mubr.f32.mxu0 0.0
        %2224 = vmatmul.mubr.f32.gmra.mrb[0].mxu0 %v2152
        %v2225 = vpop.f32.mrb[0].mxu0
        %v2226 = vadd.f32 0.0, %v2225
        %v2227 = vpop.f32.mrb[0].mxu0
        %2228 = vdwg.mxu0
        %2229 = vrot.lane.b32.xlu0 %v792, 104
        %v2230 = vpop.permute.xlu0 %2229
        %2231 = vrot.lane.b32.xlu0 %v797, 104
        %v2232 = vpop.permute.xlu0 %2231
        %2233 = vrot.lane.b32.xlu0 %v792, 72
        %v2234 = vpop.permute.xlu0 %2233
        %2235 = vrot.lane.b32.xlu0 %v797, 72
        %v2236 = vpop.permute.xlu0 %2235
        %v2237 = vsel %vm806, %v2230, 0
        %v2239 = vsel %vm806, %v2232, 0
        %v2241 = vsel %vm806, %v2234, 0
        %v2243 = vsel %vm806, %v2236, 0
        %2245 = vmatprep.subr.mxu0 0.0
        %2246 = vmatpush1.xpose.msra.mxu0 %v2241
        %2247 = vmatprep.subr.mxu0 0.0
        %2248 = vmatpush1.xpose.msra.mxu0 %v2243
        %2249 = vmatprep.subr.mxu0 0.0
        %2250 = vmatpush1.xpose.msra.mxu0 0.0
        %2251 = vmatprep.subr.mxu0 0.0
        %2252 = vmatpush1.xpose.msra.mxu0 0.0
        %2253 = vmatprep.subr.mxu0 0.0
        %2254 = vmatpush1.xpose.msra.mxu0 0.0
        %2255 = vmatprep.subr.mxu0 0.0
        %2256 = vmatpush1.xpose.msra.mxu0 0.0
        %2257 = vmatprep.subr.mxu0 0.0
        %2258 = vmatpush1.xpose.msra.mxu0 0.0
        %2259 = vmatprep.subr.mxu0 0.0
        %2260 = vmatpush1.xpose.msra.mxu0 0.0
        %2261 = vmatprep.subr.mxu0 0.0
        %2262 = vmatpush1.xpose.msra.mxu0 0.0
        %2263 = vmatprep.subr.mxu0 0.0
        %2264 = vmatpush1.xpose.msra.mxu0 0.0
        %2265 = vmatprep.subr.mxu0 0.0
        %2266 = vmatpush1.xpose.msra.mxu0 0.0
        %2267 = vmatprep.subr.mxu0 0.0
        %2268 = vmatpush1.xpose.msra.mxu0 0.0
        %2269 = vmatprep.subr.mxu0 0.0
        %2270 = vmatpush1.xpose.msra.mxu0 0.0
        %2271 = vmatprep.subr.mxu0 0.0
        %2272 = vmatpush1.xpose.msra.mxu0 0.0
        %2273 = vmatprep.subr.mxu0 0.0
        %2274 = vmatpush1.xpose.msra.mxu0 0.0
        %2275 = vmatprep.subr.mxu0 0.0
        %2276 = vmatpush1.xpose.msra.mxu0 0.0
        %2277 = vmatprep.subr.mxu0 0.0
        %2278 = vmatpush1.xpose.msra.mxu0 0.0
        %2279 = vmatprep.subr.mxu0 0.0
        %2280 = vmatpush1.xpose.msra.mxu0 0.0
        %2281 = vmatprep.subr.mxu0 0.0
        %2282 = vmatpush1.xpose.msra.mxu0 0.0
        %2283 = vmatprep.subr.mxu0 0.0
        %2284 = vmatpush1.xpose.msra.mxu0 0.0
        %2285 = vmatprep.subr.mxu0 0.0
        %2286 = vmatpush1.xpose.msra.mxu0 0.0
        %2287 = vmatprep.subr.mxu0 0.0
        %2288 = vmatpush1.xpose.msra.mxu0 0.0
        %2289 = vmatprep.subr.mxu0 0.0
        %2290 = vmatpush1.xpose.msra.mxu0 0.0
        %2291 = vmatprep.subr.mxu0 0.0
        %2292 = vmatpush1.xpose.msra.mxu0 0.0
        %2293 = vmatprep.subr.mxu0 0.0
        %2294 = vmatpush1.xpose.msra.mxu0 0.0
        %2295 = vmatprep.subr.mxu0 0.0
        %2296 = vmatpush1.xpose.msra.mxu0 0.0
        %2297 = vmatprep.subr.mxu0 0.0
        %2298 = vmatpush1.xpose.msra.mxu0 0.0
        %2299 = vmatprep.subr.mxu0 0.0
        %2300 = vmatpush1.xpose.msra.mxu0 0.0
        %2301 = vmatprep.subr.mxu0 0.0
        %2302 = vmatpush1.xpose.msra.mxu0 0.0
        %2303 = vmatprep.subr.mxu0 0.0
        %2304 = vmatpush1.xpose.msra.mxu0 0.0
        %2305 = vmatprep.subr.mxu0 0.0
        %2306 = vmatpush1.xpose.msra.mxu0 0.0
        %2307 = vmatprep.subr.mxu0 0.0
        %2308 = vmatpush1.xpose.msra.mxu0 0.0
        %2309 = vmatprep.mubr.f32.mxu0 0.0
        %2310 = vmatmul.mubr.f32.gmra.mrb[0].mxu0 %v2237
        %v2311 = vpop.f32.mrb[0].mxu0
        %v2312 = vadd.f32 0.0, %v2311
        %v2313 = vpop.f32.mrb[0].mxu0
        %2314 = vmatprep.mubr.f32.mxu0 0.0
        %2315 = vmatmul.mubr.f32.gmra.mrb[0].mxu0 %v2239
        %v2316 = vpop.f32.mrb[0].mxu0
        %v2317 = vadd.f32 0.0, %v2316
        %v2318 = vpop.f32.mrb[0].mxu0
        %2319 = vdwg.mxu0
        %v2320 = vsel %vm890, %v2312, -inf
        %2321 = vmax.xlane.f32.xlu0 %v2320
        %v2322 = vpop.xlane.xlu0 %2321
        %v2323 = vsel %vm890, %v2317, -inf
        %2324 = vmax.xlane.f32.xlu0 %v2323
        %v2325 = vpop.xlane.xlu0 %2324
        %v2326 = vsub.f32 %v2312, %v2322
        %v2327 = vsub.f32 %v2317, %v2325
        %v2328 = vmul.f32 %v2326, 1.442695
        %v2329 = vpow.pop %v2328
        %v2330 = vmul.f32 %v2327, 1.442695
        %v2331 = vpow.pop %v2330
        %v2332 = vsel %vm890, %v2329, 0.0
        %2333 = vadd.xlane.f32.xlu0 %v2332
        %v2334 = vpop.xlane.xlu0 %2333
        %v2335 = vsel %vm890, %v2331, 0.0
        %2336 = vadd.xlane.f32.xlu0 %v2335
        %v2337 = vpop.xlane.xlu0 %2336
        %v2338 = vrcp.pop %v2334
        %v2339 = vrcp.pop %v2337
        %v2340 = vmul.f32 %v2329, %v2338
        %v2341 = vmul.f32 %v2331, %v2339
        %2342 = vrot.lane.b32.xlu0 %v792, 40
        %v2343 = vpop.permute.xlu0 %2342
        %2344 = vrot.lane.b32.xlu0 %v797, 40
        %v2345 = vpop.permute.xlu0 %2344
        %v2349 = vsel %vm890, %v2340, 0
        %v2352 = vsel %vm890, %v2341, 0
        %2354 = vmatprep.subr.mxu0 0.0
        %2355 = vmatpush1.msra.mxu0 %v2343
        %2356 = vmatprep.subr.mxu0 0.0
        %2357 = vmatpush1.msra.mxu0 %v2345
        %2358 = vmatprep.subr.mxu0 0.0
        %2359 = vmatpush1.msra.mxu0 0.0
        %2360 = vmatprep.subr.mxu0 0.0
        %2361 = vmatpush1.msra.mxu0 0.0
        %2362 = vmatprep.subr.mxu0 0.0
        %2363 = vmatpush1.msra.mxu0 0.0
        %2364 = vmatprep.subr.mxu0 0.0
        %2365 = vmatpush1.msra.mxu0 0.0
        %2366 = vmatprep.subr.mxu0 0.0
        %2367 = vmatpush1.msra.mxu0 0.0
        %2368 = vmatprep.subr.mxu0 0.0
        %2369 = vmatpush1.msra.mxu0 0.0
        %2370 = vmatprep.subr.mxu0 0.0
        %2371 = vmatpush1.msra.mxu0 0.0
        %2372 = vmatprep.subr.mxu0 0.0
        %2373 = vmatpush1.msra.mxu0 0.0
        %2374 = vmatprep.subr.mxu0 0.0
        %2375 = vmatpush1.msra.mxu0 0.0
        %2376 = vmatprep.subr.mxu0 0.0
        %2377 = vmatpush1.msra.mxu0 0.0
        %2378 = vmatprep.subr.mxu0 0.0
        %2379 = vmatpush1.msra.mxu0 0.0
        %2380 = vmatprep.subr.mxu0 0.0
        %2381 = vmatpush1.msra.mxu0 0.0
        %2382 = vmatprep.subr.mxu0 0.0
        %2383 = vmatpush1.msra.mxu0 0.0
        %2384 = vmatprep.subr.mxu0 0.0
        %2385 = vmatpush1.msra.mxu0 0.0
        %2386 = vmatprep.subr.mxu0 0.0
        %2387 = vmatpush1.msra.mxu0 0.0
        %2388 = vmatprep.subr.mxu0 0.0
        %2389 = vmatpush1.msra.mxu0 0.0
        %2390 = vmatprep.subr.mxu0 0.0
        %2391 = vmatpush1.msra.mxu0 0.0
        %2392 = vmatprep.subr.mxu0 0.0
        %2393 = vmatpush1.msra.mxu0 0.0
        %2394 = vmatprep.subr.mxu0 0.0
        %2395 = vmatpush1.msra.mxu0 0.0
        %2396 = vmatprep.subr.mxu0 0.0
        %2397 = vmatpush1.msra.mxu0 0.0
        %2398 = vmatprep.subr.mxu0 0.0
        %2399 = vmatpush1.msra.mxu0 0.0
        %2400 = vmatprep.subr.mxu0 0.0
        %2401 = vmatpush1.msra.mxu0 0.0
        %2402 = vmatprep.subr.mxu0 0.0
        %2403 = vmatpush1.msra.mxu0 0.0
        %2404 = vmatprep.subr.mxu0 0.0
        %2405 = vmatpush1.msra.mxu0 0.0
        %2406 = vmatprep.subr.mxu0 0.0
        %2407 = vmatpush1.msra.mxu0 0.0
        %2408 = vmatprep.subr.mxu0 0.0
        %2409 = vmatpush1.msra.mxu0 0.0
        %2410 = vmatprep.subr.mxu0 0.0
        %2411 = vmatpush1.msra.mxu0 0.0
        %2412 = vmatprep.subr.mxu0 0.0
        %2413 = vmatpush1.msra.mxu0 0.0
        %2414 = vmatprep.subr.mxu0 0.0
        %2415 = vmatpush1.msra.mxu0 0.0
        %2416 = vmatprep.subr.mxu0 0.0
        %2417 = vmatpush1.msra.mxu0 0.0
        %2418 = vmatprep.mubr.f32.mxu0 0.0
        %2419 = vmatmul.mubr.f32.gmra.mrb[0].mxu0 %v2349
        %v2420 = vpop.f32.mrb[0].mxu0
        %v2421 = vadd.f32 0.0, %v2420
        %v2422 = vpop.f32.mrb[0].mxu0
        %2423 = vmatprep.mubr.f32.mxu0 0.0
        %2424 = vmatmul.mubr.f32.gmra.mrb[0].mxu0 %v2352
        %v2425 = vpop.f32.mrb[0].mxu0
        %v2426 = vadd.f32 0.0, %v2425
        %v2427 = vpop.f32.mrb[0].mxu0
        %2428 = vdwg.mxu0
        %2431 = vrot.lane.b32.xlu0 %v2021, 8
        %v2432 = vpop.permute.xlu0 %2431
        %2433 = vrot.lane.b32.xlu0 %v2026, 8
        %v2434 = vpop.permute.xlu0 %2433
        %2439 = vrot.lane.b32.xlu0 %v2221, 16
        %v2440 = vpop.permute.xlu0 %2439
        %2441 = vrot.lane.b32.xlu0 %v2226, 16
        %v2442 = vpop.permute.xlu0 %2441
        %2447 = vrot.lane.b32.xlu0 %v2421, 24
        %v2448 = vpop.permute.xlu0 %2447
        %2449 = vrot.lane.b32.xlu0 %v2426, 24
        %v2450 = vpop.permute.xlu0 %2449
        %v2453 = vsel %vm806, %v1821, %v2432
        %v2454 = vsel %vm806, %v1826, %v2434
        %v2455 = vsel %vm890, %v2453, %v2440
        %v2456 = vsel %vm890, %v2454, %v2442
        %v2457 = vsel %vm1628, %v2455, %v2448
        %v2458 = vsel %vm1628, %v2456, %v2450
        %v2459 = vld [vmem:[%s573] sm:$0xff]
        %v2460 = vld [vmem:[%s573 + $0x8] sm:$0xff]
        %v2461 = vld [vmem:[%s573 + $0x10] sm:$0xff]
        %v2462 = vld [vmem:[%s573 + $0x18] sm:$0xff]
        %v2463 = vld [vmem:[%s576] sm:$0x1]
        %v2465 = vlaneseq
        %v2466 = vshrl.u32 %v2465, 7
        %v2467 = vsub.s32 0, %v2466
        %v2468 = vrot.slane %v2463, %v2467
        %v2471 = vsel %vm618, %v1629, 0
        %v2474 = vsel %vm618, %v1630, 0
        %v2477 = vsel %vm618, %v2457, 0
        %v2480 = vsel %vm618, %v2458, 0
        %2482 = vmatprep.subr.mxu0 0.0
        %2483 = vmatpush1.msra.mxu0 %v2459
        %2484 = vmatprep.subr.mxu0 0.0
        %2485 = vmatpush1.msra.mxu0 %v2460
        %2486 = vmatprep.subr.mxu0 0.0
        %2487 = vmatpush1.msra.mxu0 %v2461
        %2488 = vmatprep.subr.mxu0 0.0
        %2489 = vmatpush1.msra.mxu0 %v2462
        %2490 = vmatprep.subr.mxu0 0.0
        %2491 = vmatpush1.msra.mxu0 0.0
        %2492 = vmatprep.subr.mxu0 0.0
        %2493 = vmatpush1.msra.mxu0 0.0
        %2494 = vmatprep.subr.mxu0 0.0
        %2495 = vmatpush1.msra.mxu0 0.0
        %2496 = vmatprep.subr.mxu0 0.0
        %2497 = vmatpush1.msra.mxu0 0.0
        %2498 = vmatprep.subr.mxu0 0.0
        %2499 = vmatpush1.msra.mxu0 0.0
        %2500 = vmatprep.subr.mxu0 0.0
        %2501 = vmatpush1.msra.mxu0 0.0
        %2502 = vmatprep.subr.mxu0 0.0
        %2503 = vmatpush1.msra.mxu0 0.0
        %2504 = vmatprep.subr.mxu0 0.0
        %2505 = vmatpush1.msra.mxu0 0.0
        %2506 = vmatprep.subr.mxu0 0.0
        %2507 = vmatpush1.msra.mxu0 0.0
        %2508 = vmatprep.subr.mxu0 0.0
        %2509 = vmatpush1.msra.mxu0 0.0
        %2510 = vmatprep.subr.mxu0 0.0
        %2511 = vmatpush1.msra.mxu0 0.0
        %2512 = vmatprep.subr.mxu0 0.0
        %2513 = vmatpush1.msra.mxu0 0.0
        %2514 = vmatprep.subr.mxu0 0.0
        %2515 = vmatpush1.msra.mxu0 0.0
        %2516 = vmatprep.subr.mxu0 0.0
        %2517 = vmatpush1.msra.mxu0 0.0
        %2518 = vmatprep.subr.mxu0 0.0
        %2519 = vmatpush1.msra.mxu0 0.0
        %2520 = vmatprep.subr.mxu0 0.0
        %2521 = vmatpush1.msra.mxu0 0.0
        %2522 = vmatprep.subr.mxu0 0.0
        %2523 = vmatpush1.msra.mxu0 0.0
        %2524 = vmatprep.subr.mxu0 0.0
        %2525 = vmatpush1.msra.mxu0 0.0
        %2526 = vmatprep.subr.mxu0 0.0
        %2527 = vmatpush1.msra.mxu0 0.0
        %2528 = vmatprep.subr.mxu0 0.0
        %2529 = vmatpush1.msra.mxu0 0.0
        %2530 = vmatprep.subr.mxu0 0.0
        %2531 = vmatpush1.msra.mxu0 0.0
        %2532 = vmatprep.subr.mxu0 0.0
        %2533 = vmatpush1.msra.mxu0 0.0
        %2534 = vmatprep.subr.mxu0 0.0
        %2535 = vmatpush1.msra.mxu0 0.0
        %2536 = vmatprep.subr.mxu0 0.0
        %2537 = vmatpush1.msra.mxu0 0.0
        %2538 = vmatprep.subr.mxu0 0.0
        %2539 = vmatpush1.msra.mxu0 0.0
        %2540 = vmatprep.subr.mxu0 0.0
        %2541 = vmatpush1.msra.mxu0 0.0
        %2542 = vmatprep.subr.mxu0 0.0
        %2543 = vmatpush1.msra.mxu0 0.0
        %2544 = vmatprep.subr.mxu0 0.0
        %2545 = vmatpush1.msra.mxu0 0.0
        %2546 = vmatprep.mubr.f32.mxu0 0.0
        %2547 = vmatmul.mubr.f32.gmra.mrb[0].mxu0 %v2471
        %v2548 = vpop.f32.mrb[0].mxu0
        %v2549 = vadd.f32 %v2468, %v2548
        %v2550 = vpop.f32.mrb[0].mxu0
        %2551 = vmatprep.mubr.f32.mxu0 0.0
        %2552 = vmatmul.mubr.f32.gmra.mrb[0].mxu0 %v2474
        %v2553 = vpop.f32.mrb[0].mxu0
        %v2554 = vadd.f32 %v2468, %v2553
        %v2555 = vpop.f32.mrb[0].mxu0
        %2556 = vmatprep.mubr.f32.mxu0 0.0
        %2557 = vmatmul.mubr.f32.gmra.mrb[0].mxu0 %v2477
        %v2558 = vpop.f32.mrb[0].mxu0
        %v2559 = vadd.f32 %v2468, %v2558
        %v2560 = vpop.f32.mrb[0].mxu0
        %2561 = vmatprep.mubr.f32.mxu0 0.0
        %2562 = vmatmul.mubr.f32.gmra.mrb[0].mxu0 %v2480
        %v2563 = vpop.f32.mrb[0].mxu0
        %v2564 = vadd.f32 %v2468, %v2563
        %v2565 = vpop.f32.mrb[0].mxu0
        %2566 = vdwg.mxu0
        %v2567 = vadd.f32 %v612, %v2549
        %v2568 = vadd.f32 %v613, %v2554
        %v2569 = vadd.f32 %v614, %v2559
        %v2570 = vadd.f32 %v615, %v2564
        %v2571 = vld [vmem:[%s579] sm:$0x1]
        %v2572 = vld [vmem:[%s582] sm:$0x1]
        %v2573 = vsel %vm618, %v2567, 0.0
        %2574 = vadd.xlane.f32.xlu0 %v2573
        %v2575 = vpop.xlane.xlu0 %2574
        %v2576 = vsel %vm618, %v2568, 0.0
        %2577 = vadd.xlane.f32.xlu0 %v2576
        %v2578 = vpop.xlane.xlu0 %2577
        %v2579 = vsel %vm618, %v2569, 0.0
        %2580 = vadd.xlane.f32.xlu0 %v2579
        %v2581 = vpop.xlane.xlu0 %2580
        %v2582 = vsel %vm618, %v2570, 0.0
        %2583 = vadd.xlane.f32.xlu0 %v2582
        %v2584 = vpop.xlane.xlu0 %2583
        %v2585 = vmul.f32 %v2575, %v631
        %v2586 = vmul.f32 %v2578, %v631
        %v2587 = vmul.f32 %v2581, %v631
        %v2588 = vmul.f32 %v2584, %v631
        %v2589 = vsub.f32 %v2567, %v2585
        %v2590 = vsub.f32 %v2568, %v2586
        %v2591 = vsub.f32 %v2569, %v2587
        %v2592 = vsub.f32 %v2570, %v2588
        %v2593 = vmul.f32 %v2589, %v2589
        %v2594 = vmul.f32 %v2590, %v2590
        %v2595 = vmul.f32 %v2591, %v2591
        %v2596 = vmul.f32 %v2592, %v2592
        %v2597 = vsel %vm618, %v2593, 0.0
        %2598 = vadd.xlane.f32.xlu0 %v2597
        %v2599 = vpop.xlane.xlu0 %2598
        %v2600 = vsel %vm618, %v2594, 0.0
        %2601 = vadd.xlane.f32.xlu0 %v2600
        %v2602 = vpop.xlane.xlu0 %2601
        %v2603 = vsel %vm618, %v2595, 0.0
        %2604 = vadd.xlane.f32.xlu0 %v2603
        %v2605 = vpop.xlane.xlu0 %2604
        %v2606 = vsel %vm618, %v2596, 0.0
        %2607 = vadd.xlane.f32.xlu0 %v2606
        %v2608 = vpop.xlane.xlu0 %2607
        %v2609 = vmul.f32 %v2599, %v631
        %v2610 = vmul.f32 %v2602, %v631
        %v2611 = vmul.f32 %v2605, %v631
        %v2612 = vmul.f32 %v2608, %v631
        %v2613 = vadd.f32 %v2609, 1e-05
        %v2614 = vadd.f32 %v2610, 1e-05
        %v2615 = vadd.f32 %v2611, 1e-05
        %v2616 = vadd.f32 %v2612, 1e-05
        %v2617 = vrsqrt.pop %v2613
        %v2618 = vrsqrt.pop %v2614
        %v2619 = vrsqrt.pop %v2615
        %v2620 = vrsqrt.pop %v2616
        %v2621 = vmul.f32 %v2589, %v2617
        %v2622 = vmul.f32 %v2590, %v2618
        %v2623 = vmul.f32 %v2591, %v2619
        %v2624 = vmul.f32 %v2592, %v2620
        %v2626 = vlaneseq
        %v2627 = vshrl.u32 %v2626, 7
        %v2628 = vsub.s32 0, %v2627
        %v2629 = vrot.slane %v2571, %v2628
        %v2631 = vmul.f32 %v2621, %v2629
        %v2632 = vmul.f32 %v2622, %v2629
        %v2633 = vmul.f32 %v2623, %v2629
        %v2634 = vmul.f32 %v2624, %v2629
        %v2636 = vlaneseq
        %v2637 = vshrl.u32 %v2636, 7
        %v2638 = vsub.s32 0, %v2637
        %v2639 = vrot.slane %v2572, %v2638
        %v2641 = vadd.f32 %v2631, %v2639
        %v2642 = vadd.f32 %v2632, %v2639
        %v2643 = vadd.f32 %v2633, %v2639
        %v2644 = vadd.f32 %v2634, %v2639
        %v2645 = vld [vmem:[%s587] sm:$0xff]
        %v2646 = vld [vmem:[%s587 + $0x8] sm:$0xff]
        %v2647 = vld [vmem:[%s587 + $0x10] sm:$0xff]
        %v2648 = vld [vmem:[%s587 + $0x18] sm:$0xff]
        %v2649 = vld [vmem:[%s590] sm:$0x1]
        %v2651 = vlaneseq
        %v2652 = vshrl.u32 %v2651, 7
        %v2653 = vsub.s32 0, %v2652
        %v2654 = vrot.slane %v2649, %v2653
        %v2657 = vsel %vm618, %v2641, 0
        %v2660 = vsel %vm618, %v2642, 0
        %v2663 = vsel %vm618, %v2643, 0
        %v2666 = vsel %vm618, %v2644, 0
        %2668 = vmatprep.subr.mxu0 0.0
        %2669 = vmatpush1.msra.mxu0 %v2645
        %2670 = vmatprep.subr.mxu0 0.0
        %2671 = vmatpush1.msra.mxu0 %v2646
        %2672 = vmatprep.subr.mxu0 0.0
        %2673 = vmatpush1.msra.mxu0 %v2647
        %2674 = vmatprep.subr.mxu0 0.0
        %2675 = vmatpush1.msra.mxu0 %v2648
        %2676 = vmatprep.subr.mxu0 0.0
        %2677 = vmatpush1.msra.mxu0 0.0
        %2678 = vmatprep.subr.mxu0 0.0
        %2679 = vmatpush1.msra.mxu0 0.0
        %2680 = vmatprep.subr.mxu0 0.0
        %2681 = vmatpush1.msra.mxu0 0.0
        %2682 = vmatprep.subr.mxu0 0.0
        %2683 = vmatpush1.msra.mxu0 0.0
        %2684 = vmatprep.subr.mxu0 0.0
        %2685 = vmatpush1.msra.mxu0 0.0
        %2686 = vmatprep.subr.mxu0 0.0
        %2687 = vmatpush1.msra.mxu0 0.0
        %2688 = vmatprep.subr.mxu0 0.0
        %2689 = vmatpush1.msra.mxu0 0.0
        %2690 = vmatprep.subr.mxu0 0.0
        %2691 = vmatpush1.msra.mxu0 0.0
        %2692 = vmatprep.subr.mxu0 0.0
        %2693 = vmatpush1.msra.mxu0 0.0
        %2694 = vmatprep.subr.mxu0 0.0
        %2695 = vmatpush1.msra.mxu0 0.0
        %2696 = vmatprep.subr.mxu0 0.0
        %2697 = vmatpush1.msra.mxu0 0.0
        %2698 = vmatprep.subr.mxu0 0.0
        %2699 = vmatpush1.msra.mxu0 0.0
        %2700 = vmatprep.subr.mxu0 0.0
        %2701 = vmatpush1.msra.mxu0 0.0
        %2702 = vmatprep.subr.mxu0 0.0
        %2703 = vmatpush1.msra.mxu0 0.0
        %2704 = vmatprep.subr.mxu0 0.0
        %2705 = vmatpush1.msra.mxu0 0.0
        %2706 = vmatprep.subr.mxu0 0.0
        %2707 = vmatpush1.msra.mxu0 0.0
        %2708 = vmatprep.subr.mxu0 0.0
        %2709 = vmatpush1.msra.mxu0 0.0
        %2710 = vmatprep.subr.mxu0 0.0
        %2711 = vmatpush1.msra.mxu0 0.0
        %2712 = vmatprep.subr.mxu0 0.0
        %2713 = vmatpush1.msra.mxu0 0.0
        %2714 = vmatprep.subr.mxu0 0.0
        %2715 = vmatpush1.msra.mxu0 0.0
        %2716 = vmatprep.subr.mxu0 0.0
        %2717 = vmatpush1.msra.mxu0 0.0
        %2718 = vmatprep.subr.mxu0 0.0
        %2719 = vmatpush1.msra.mxu0 0.0
        %2720 = vmatprep.subr.mxu0 0.0
        %2721 = vmatpush1.msra.mxu0 0.0
        %2722 = vmatprep.subr.mxu0 0.0
        %2723 = vmatpush1.msra.mxu0 0.0
        %2724 = vmatprep.subr.mxu0 0.0
        %2725 = vmatpush1.msra.mxu0 0.0
        %2726 = vmatprep.subr.mxu0 0.0
        %2727 = vmatpush1.msra.mxu0 0.0
        %2728 = vmatprep.subr.mxu0 0.0
        %2729 = vmatpush1.msra.mxu0 0.0
        %2730 = vmatprep.subr.mxu0 0.0
        %2731 = vmatpush1.msra.mxu0 0.0
        %2732 = vmatprep.mubr.f32.mxu0 0.0
        %2733 = vmatmul.mubr.f32.gmra.mrb[0].mxu0 %v2657
        %v2734 = vpop.f32.mrb[0].mxu0
        %v2735 = vadd.f32 %v2654, %v2734
        %v2736 = vpop.f32.mrb[0].mxu0
        %2737 = vmatprep.mubr.f32.mxu0 0.0
        %2738 = vmatmul.mubr.f32.gmra.mrb[0].mxu0 %v2660
        %v2739 = vpop.f32.mrb[0].mxu0
        %v2740 = vadd.f32 %v2654, %v2739
        %v2741 = vpop.f32.mrb[0].mxu0
        %2742 = vmatprep.mubr.f32.mxu0 0.0
        %2743 = vmatmul.mubr.f32.gmra.mrb[0].mxu0 %v2663
        %v2744 = vpop.f32.mrb[0].mxu0
        %v2745 = vadd.f32 %v2654, %v2744
        %v2746 = vpop.f32.mrb[0].mxu0
        %2747 = vmatprep.mubr.f32.mxu0 0.0
        %2748 = vmatmul.mubr.f32.gmra.mrb[0].mxu0 %v2666
        %v2749 = vpop.f32.mrb[0].mxu0
        %v2750 = vadd.f32 %v2654, %v2749
        %v2751 = vpop.f32.mrb[0].mxu0
        %2752 = vdwg.mxu0
        %v2753 = vmul.f32 %v2735, 0.5
        %v2754 = vmul.f32 %v2740, 0.5
        %v2755 = vmul.f32 %v2745, 0.5
        %v2756 = vmul.f32 %v2750, 0.5
        %v2757 = vmul.f32 %v2735, 0.70710677
        %v2758 = vmul.f32 %v2740, 0.70710677
        %v2759 = vmul.f32 %v2745, 0.70710677
        %v2760 = vmul.f32 %v2750, 0.70710677
        %v2761 = verf.f32.pop %v2757
        %v2762 = verf.f32.pop %v2758
        %v2763 = verf.f32.pop %v2759
        %v2764 = verf.f32.pop %v2760
        %v2765 = vadd.f32 %v2761, 1.0
        %v2766 = vadd.f32 %v2762, 1.0
        %v2767 = vadd.f32 %v2763, 1.0
        %v2768 = vadd.f32 %v2764, 1.0
        %v2769 = vmul.f32 %v2753, %v2765
        %v2770 = vmul.f32 %v2754, %v2766
        %v2771 = vmul.f32 %v2755, %v2767
        %v2772 = vmul.f32 %v2756, %v2768
        %v2773 = vld [vmem:[%s595] sm:$0xff]
        %v2774 = vld [vmem:[%s595 + $0x8] sm:$0xff]
        %v2775 = vld [vmem:[%s595 + $0x10] sm:$0xff]
        %v2776 = vld [vmem:[%s595 + $0x18] sm:$0xff]
        %v2777 = vld [vmem:[%s595 + $0x20] sm:$0xff]
        %v2778 = vld [vmem:[%s595 + $0x28] sm:$0xff]
        %v2779 = vld [vmem:[%s595 + $0x30] sm:$0xff]
        %v2780 = vld [vmem:[%s595 + $0x38] sm:$0xff]
        %v2781 = vld [vmem:[%s595 + $0x40] sm:$0xff]
        %v2782 = vld [vmem:[%s595 + $0x48] sm:$0xff]
        %v2783 = vld [vmem:[%s595 + $0x50] sm:$0xff]
        %v2784 = vld [vmem:[%s595 + $0x58] sm:$0xff]
        %v2785 = vld [vmem:[%s595 + $0x60] sm:$0xff]
        %v2786 = vld [vmem:[%s595 + $0x68] sm:$0xff]
        %v2787 = vld [vmem:[%s595 + $0x70] sm:$0xff]
        %v2788 = vld [vmem:[%s595 + $0x78] sm:$0xff]
        %v2789 = vld [vmem:[%s598] sm:$0x1]
        %v2791 = vlaneseq
        %v2792 = vshrl.u32 %v2791, 7
        %v2793 = vsub.s32 0, %v2792
        %v2794 = vrot.slane %v2789, %v2793
        %2796 = vmatprep.subr.mxu0 0.0
        %2797 = vmatpush1.msra.mxu0 %v2773
        %2798 = vmatprep.subr.mxu0 0.0
        %2799 = vmatpush1.msra.mxu0 %v2774
        %2800 = vmatprep.subr.mxu0 0.0
        %2801 = vmatpush1.msra.mxu0 %v2775
        %2802 = vmatprep.subr.mxu0 0.0
        %2803 = vmatpush1.msra.mxu0 %v2776
        %2804 = vmatprep.subr.mxu0 0.0
        %2805 = vmatpush1.msra.mxu0 %v2777
        %2806 = vmatprep.subr.mxu0 0.0
        %2807 = vmatpush1.msra.mxu0 %v2778
        %2808 = vmatprep.subr.mxu0 0.0
        %2809 = vmatpush1.msra.mxu0 %v2779
        %2810 = vmatprep.subr.mxu0 0.0
        %2811 = vmatpush1.msra.mxu0 %v2780
        %2812 = vmatprep.subr.mxu0 0.0
        %2813 = vmatpush1.msra.mxu0 %v2781
        %2814 = vmatprep.subr.mxu0 0.0
        %2815 = vmatpush1.msra.mxu0 %v2782
        %2816 = vmatprep.subr.mxu0 0.0
        %2817 = vmatpush1.msra.mxu0 %v2783
        %2818 = vmatprep.subr.mxu0 0.0
        %2819 = vmatpush1.msra.mxu0 %v2784
        %2820 = vmatprep.subr.mxu0 0.0
        %2821 = vmatpush1.msra.mxu0 %v2785
        %2822 = vmatprep.subr.mxu0 0.0
        %2823 = vmatpush1.msra.mxu0 %v2786
        %2824 = vmatprep.subr.mxu0 0.0
        %2825 = vmatpush1.msra.mxu0 %v2787
        %2826 = vmatprep.subr.mxu0 0.0
        %2827 = vmatpush1.msra.mxu0 %v2788
        %2828 = vmatprep.subr.mxu0 0.0
        %2829 = vmatpush1.msra.mxu0 0.0
        %2830 = vmatprep.subr.mxu0 0.0
        %2831 = vmatpush1.msra.mxu0 0.0
        %2832 = vmatprep.subr.mxu0 0.0
        %2833 = vmatpush1.msra.mxu0 0.0
        %2834 = vmatprep.subr.mxu0 0.0
        %2835 = vmatpush1.msra.mxu0 0.0
        %2836 = vmatprep.subr.mxu0 0.0
        %2837 = vmatpush1.msra.mxu0 0.0
        %2838 = vmatprep.subr.mxu0 0.0
        %2839 = vmatpush1.msra.mxu0 0.0
        %2840 = vmatprep.subr.mxu0 0.0
        %2841 = vmatpush1.msra.mxu0 0.0
        %2842 = vmatprep.subr.mxu0 0.0
        %2843 = vmatpush1.msra.mxu0 0.0
        %2844 = vmatprep.subr.mxu0 0.0
        %2845 = vmatpush1.msra.mxu0 0.0
        %2846 = vmatprep.subr.mxu0 0.0
        %2847 = vmatpush1.msra.mxu0 0.0
        %2848 = vmatprep.subr.mxu0 0.0
        %2849 = vmatpush1.msra.mxu0 0.0
        %2850 = vmatprep.subr.mxu0 0.0
        %2851 = vmatpush1.msra.mxu0 0.0
        %2852 = vmatprep.subr.mxu0 0.0
        %2853 = vmatpush1.msra.mxu0 0.0
        %2854 = vmatprep.subr.mxu0 0.0
        %2855 = vmatpush1.msra.mxu0 0.0
        %2856 = vmatprep.subr.mxu0 0.0
        %2857 = vmatpush1.msra.mxu0 0.0
        %2858 = vmatprep.subr.mxu0 0.0
        %2859 = vmatpush1.msra.mxu0 0.0
        %2860 = vmatprep.mubr.f32.mxu0 0.0
        %2861 = vmatmul.mubr.f32.gmra.mrb[0].mxu0 %v2769
        %v2862 = vpop.f32.mrb[0].mxu0
        %v2863 = vadd.f32 %v2794, %v2862
        %v2864 = vpop.f32.mrb[0].mxu0
        %2865 = vmatprep.mubr.f32.mxu0 0.0
        %2866 = vmatmul.mubr.f32.gmra.mrb[0].mxu0 %v2770
        %v2867 = vpop.f32.mrb[0].mxu0
        %v2868 = vadd.f32 %v2794, %v2867
        %v2869 = vpop.f32.mrb[0].mxu0
        %2870 = vmatprep.mubr.f32.mxu0 0.0
        %2871 = vmatmul.mubr.f32.gmra.mrb[0].mxu0 %v2771
        %v2872 = vpop.f32.mrb[0].mxu0
        %v2873 = vadd.f32 %v2794, %v2872
        %v2874 = vpop.f32.mrb[0].mxu0
        %2875 = vmatprep.mubr.f32.mxu0 0.0
        %2876 = vmatmul.mubr.f32.gmra.mrb[0].mxu0 %v2772
        %v2877 = vpop.f32.mrb[0].mxu0
        %v2878 = vadd.f32 %v2794, %v2877
        %v2879 = vpop.f32.mrb[0].mxu0
        %2880 = vdwg.mxu0
        %v2881 = vadd.f32 %v2567, %v2863
        %v2882 = vadd.f32 %v2568, %v2868
        %v2883 = vadd.f32 %v2569, %v2873
        %v2884 = vadd.f32 %v2570, %v2878
        %2885 = vst.msk [vmem:[#allocation2] sm:$0xff] %vm618, %v2881
        %2886 = vst.msk [vmem:[#allocation2 + $0x8] sm:$0xff] %vm618, %v2882
        %2887 = vst.msk [vmem:[#allocation2 + $0x10] sm:$0xff] %vm618, %v2883
        %2888 = vst.msk [vmem:[#allocation2 + $0x18] sm:$0xff] %vm618, %v2884
        // Predicated region
        $region77: #{vit_encoder.1} parent=71 // pred_check
          %p2889 = pneg %p371
        $region78: #{vit_encoder.1} parent=71 // pred_check_branch
          %2891 = sbr.rel (%p2889) target = $region80
        $region79: #{vit_encoder.1} parent=71 // pred_region
          %s2893 = ssub.s32 512, 512
          %2894 = vsyncadd [#allocation3], %s2893
          %s2895 = sshll.u32 [#allocation2], 4
          %s2896 = int_to_ptr.vmem [resolvable:$true] %s2895
          %2901 = dma.vmem_to_hbm [thread:$0]  %s2896, 512, %s13, [#allocation3], 128, 128, 8
        $region80: #{vit_encoder.1} parent=71 // pred_fallthru
          _
        // Predicated region
        $region81: #{vit_encoder.1} parent=71 // pred_check
          %p2902 = pneg %p371
        $region82: #{vit_encoder.1} parent=71 // pred_check_branch
          %2904 = sbr.rel (%p2902) target = $region84
        $region83: #{vit_encoder.1} parent=71 // pred_region
          %2905 = dma.done [#allocation3], 512
        $region84: #{vit_encoder.1} parent=71 // pred_fallthru
          _
      $region72: #{vit_encoder.1} parent=5 // pred_fallthru
        _
      %p2906 = scmp.le.s32.totalorder 2, %s20
      // Predicated region
      $region85: #{vit_encoder.1} parent=5 // pred_check
        %p2907 = pneg %p2906
      $region86: #{vit_encoder.1} parent=5 // pred_check_branch
        %2909 = sbr.rel (%p2907) target = $region88
      $region87: #{vit_encoder.1} parent=5 // pred_region
        %s2910 = ssub.s32 %s20, 2
      $region88: #{vit_encoder.1} parent=5 // pred_fallthru
        _
    $region6: #{vit_encoder.1} parent=1 // loop_footer
      %s24 = sadd.s32 1, %s20
    $region7: #{vit_encoder.1} parent=1 // loop_footer_branch
      %19 = sbr.rel target = $region3
    $region8: #{vit_encoder.1} parent=1 // loop_exit
      _
    %2911 = vsyncpa [#allocation3], 1
    %s2912 = scalar_lea.sflag [#allocation3], 1
    %2913 = vsyncpa %s2912, 1

</llo_original>
